<compile_context>
chip_gen: v5e
topology: v5e:2x2
jax: 0.10.0
libtpu: 0.0.40
codegen_flags: <defaults>
</compile_context>

<pallas_src>
import jax
import jax.numpy as jnp
from jax.experimental import pallas as pl
from jax.experimental.pallas import tpu as pltpu

# ----------------------------- model configuration --------------------------------
N_MEL = 8
N_FLOWS = 4
N_GROUP = 8
N_EARLY_EVERY = 2
N_EARLY_SIZE = 2
WIN_LENGTH = 16
HOP_LENGTH = 4
WN_N_LAYERS = 2
WN_N_CHANNELS = 8        # must be even
WN_KERNEL_SIZE = 3       # must be odd
COND_HIDDEN = 256        # hard-coded in WN.__init__
SPEAKER_EMBED_DIM = 0    # single-speaker path
REZERO = False

assert WIN_LENGTH % HOP_LENGTH == 0 and N_GROUP % HOP_LENGTH == 0
assert N_GROUP <= 8 and WN_N_CHANNELS == 8

# polyphase / folding constants (ConvTranspose1d upsample + unfold folded into the cond matmul)
UP_TAPS = WIN_LENGTH // HOP_LENGTH            # 4 polyphase taps per phase
GROUP_FRAMES = N_GROUP // HOP_LENGTH          # 2 hops per audio group
X5_FRAMES = UP_TAPS + GROUP_FRAMES - 1        # 5 mel frames feed one audio group
X5_CH = X5_FRAMES * N_MEL                     # 40
D_MIN = -(UP_TAPS - 1)                        # leftmost frame offset (-3)

# per-flow receptive-field halo of the stacked dilated convs: sum_i 2^i * (K-1)/2 = 3
HALO = (2 ** WN_N_LAYERS - 1) * (WN_KERNEL_SIZE - 1) // 2
TOTAL_HALO = N_FLOWS * HALO                   # 12 lanes needed by the fused 4-flow kernel
PAD = 128                                     # lane-aligned halo per side (>= TOTAL_HALO)
assert PAD >= TOTAL_HALO

MAX_TILE_T = 4096                             # fused kernel: 4 flows of live temps per tile
X5_STORE_DTYPE = jnp.bfloat16                 # HBM storage for the dominant (40 x T) stream
SLAB_COLS = max(X5_CH, WN_KERNEL_SIZE * WN_N_CHANNELS)   # 40 (widest packed matrix)
_H_ROW = 8                                    # row where the folded start-conv block begins


# --------------------------------- fused all-flows kernel --------------------------
def _make_fused_kernel(*, T_g, TILE_T, flows_meta, out_dtype):
    Wn = TILE_T + 2 * PAD
    nc = WN_N_CHANNELS
    n_early = sum(1 for k in range(N_FLOWS) if k % N_EARLY_EVERY == 0 and k > 0)

    def kernel(au_ref, x5_ref, w_ref, *out_refs):
        early_refs = out_refs[:n_early]
        au_out_ref = out_refs[n_early]
        logs_refs = out_refs[n_early + 1:]

        def ld(ent):                           # static carve-out of the packed weight slab
            o, r, c = ent
            return w_ref[o:o + r, :c]

        # validity mask = the PyTorch 'same' conv zero padding at true sequence boundaries
        t0 = pl.program_id(1) * TILE_T - PAD
        pos = t0 + jax.lax.broadcasted_iota(jnp.int32, (1, Wn), 1)
        maskb = (pos >= 0) & (pos < T_g)

        au = au_ref[0, 0].astype(jnp.float32)  # (n_group, Wn)  window incl. halo
        x5 = x5_ref[0, 0]                      # (X5_CH, Wn)    bf16, MXU-native

        e_idx = 0
        for k, fm in enumerate(flows_meta):
            n_rem, n_half = fm["n_rem"], fm["n_half"]
            if k % N_EARLY_EVERY == 0 and k > 0:
                early_refs[e_idx][0] = au[:N_EARLY_SIZE, PAD:PAD + TILE_T].astype(out_dtype)
                e_idx += 1
                au = au[N_EARLY_SIZE:]

            # ---- invertible 1x1 conv fused with the WN start conv (single stacked matmul) ----
            z = jnp.dot(ld(fm["wstack"]), au, preferred_element_type=jnp.float32)
            a0 = z[:n_half]                    # audio_0
            a1 = z[n_half:n_rem]               # audio_1
            h = z[_H_ROW:] + ld(fm["bs"])      # WN hidden state (nc, Wn)

            # ---- folded upsample + unfold + cond chain + in-layer biases: one matmul ----
            cond = jnp.dot(ld(fm["wc"]).astype(x5.dtype), x5,
                           preferred_element_type=jnp.float32) + ld(fm["bc"])

            end = None                         # skip + end conv folded into per-layer matrices
            for i in range(WN_N_LAYERS):
                d = 2 ** i
                hm = jnp.where(maskb, h, 0.0)                  # zero outside the real sequence
                hl = pltpu.roll(hm, d, axis=1)                 # h[t - d] (wrap stays in halo)
                hr = pltpu.roll(hm, Wn - d, axis=1)            # h[t + d]
                wi = ld(fm["win"][i])                          # (2nc, 3nc): taps [t-d | t | t+d]
                zin = (jnp.dot(wi[:, :nc], hl, preferred_element_type=jnp.float32)
                       + jnp.dot(wi[:, nc:2 * nc], hm, preferred_element_type=jnp.float32)
                       + jnp.dot(wi[:, 2 * nc:], hr, preferred_element_type=jnp.float32)
                       + cond[2 * nc * i:2 * nc * (i + 1)])
                acts = jnp.tanh(zin[:nc]) * jax.nn.sigmoid(zin[nc:])
                se = jnp.dot(ld(fm["wse"][i]), acts, preferred_element_type=jnp.float32)
                end = se if end is None else end + se
                if i < WN_N_LAYERS - 1:
                    h = (h + jnp.dot(ld(fm["wrs"][i]), acts,
                                     preferred_element_type=jnp.float32) + ld(fm["brs"][i]))
            end = end + ld(fm["bend"])

            # ---- affine coupling ----
            b_coup = end[:n_half]
            log_s = end[n_half:]
            logs_refs[k][0] = log_s[:, PAD:PAD + TILE_T].astype(out_dtype)
            a1n = jnp.exp(log_s) * a1 + b_coup

            if k == N_FLOWS - 1:
                au_out_ref[0, :n_half, :] = a0[:, PAD:PAD + TILE_T].astype(out_dtype)
                au_out_ref[0, n_half:, :] = a1n[:, PAD:PAD + TILE_T].astype(out_dtype)
            else:
                # re-zero invalid columns so halo garbage (incl. any inf/nan) never propagates
                au = jnp.where(maskb, jnp.concatenate([a0, a1n], axis=0), 0.0)

    return kernel


# --------------------------------- wrapper helpers ---------------------------------
def _choose_time_tiling(T_g, batch):
    r128 = lambda v: -(-v // 128) * 128
    tile = r128(min(T_g, MAX_TILE_T))
    if batch < 2 and T_g > 128:          # keep >=2 parallel grid steps for v7x's 2 TensorCores
        tile = min(tile, r128(-(-T_g // 2)))
    nt = -(-T_g // tile)
    return tile, nt


def _make_halo_windows(x, *, TILE_T, NT, T):
    """x: (B, C, T) -> overlapped windows (B, NT, C, TILE_T + 2*PAD), zero outside [0, T)."""
    T_pad = NT * TILE_T
    xp = jnp.pad(x, ((0, 0), (0, 0), (PAD, T_pad - T + PAD)))
    wins = [jax.lax.slice_in_dim(xp, t * TILE_T, t * TILE_T + TILE_T + 2 * PAD, axis=2)
            for t in range(NT)]
    return jnp.stack(wins, axis=1)


def _prepare_kernel_params(params):
    """Fold upsample/unfold/cond chain, start conv, res-skip and end convs, and pack every
    per-flow weight/bias into ONE flat f32 slab (static row offsets returned per matrix)."""
    rows, cursor = [], [0]

    def put(mat):
        mat = jnp.asarray(mat, jnp.float32)
        if mat.ndim == 1:
            mat = mat[:, None]                 # biases stored as column vectors
        r, c = mat.shape
        rows.append(jnp.pad(mat, ((0, 0), (0, SLAB_COLS - c))))
        o = cursor[0]
        cursor[0] = o + r
        return (o, r, c)

    # A maps the 5-frame polyphase stack X5 to the unfolded upsampled spect with channel
    # ordering c' = g*n_mel + co :  sp'[:, tg] = A @ X5[:, tg] + b64   (exact, no zero-insertion)
    up_w, up_b = params["up_w"], params["up_b"]          # torch: (Cin, Cout, K), (Cout,)
    A = jnp.zeros((N_GROUP * N_MEL, X5_CH), jnp.float32)
    for g in range(N_GROUP):
        s, r = divmod(g, HOP_LENGTH)
        for j in range(UP_TAPS):
            d = s - j
            col = (d - D_MIN) * N_MEL
            A = A.at[g * N_MEL:(g + 1) * N_MEL, col:col + N_MEL].set(
                up_w[:, :, HOP_LENGTH * j + r].T)
    b64 = jnp.tile(up_b, N_GROUP)

    nc = WN_N_CHANNELS
    flows_meta, logabsdets = [], []
    for f in params["flows"]:
        wn = f["wn"]
        winv = f["inv_W"]
        n_rem = winv.shape[0]
        n_half = n_rem // 2
        logabsdets.append(f["inv_logabsdet"])

        # fold start conv into the 1x1 conv: z = [winv ; ws @ winv[:n_half]] @ au
        ws = wn["start_w"][:, :, 0]
        wstack = jnp.zeros((_H_ROW + nc, n_rem), jnp.float32)
        wstack = wstack.at[:n_rem].set(winv)
        wstack = wstack.at[_H_ROW:].set(ws @ winv[:n_half])

        # cond chain is purely linear -> exact fold; in-layer biases folded into the cond bias
        W1, W2, W3 = (w[:, :, 0] for w in wn["cond_w"])
        b1, b2, b3 = wn["cond_b"]
        Wc = W3 @ (W2 @ W1)
        bc = W3 @ (W2 @ b1 + b2) + b3
        # permute cond columns from c = mel*n_group + g to c' = g*n_mel + mel (matches A rows)
        Wc = Wc.reshape(-1, N_MEL, N_GROUP).transpose(0, 2, 1).reshape(-1, N_MEL * N_GROUP)
        bc_total = Wc @ b64 + bc + jnp.concatenate(wn["in_b"], axis=0)
        wc_folded = Wc @ A                                  # (2*nc*L, X5_CH)

        # fold res/skip 1x1 convs + end conv:  end = sum_i (wend@wrs_skip_i)@acts_i + bend_total
        wend = wn["end_w"][:, :, 0]
        bend_total = wn["end_b"]
        win_list, wrs_list, brs_list, wse_list = [], [], [], []
        for i in range(WN_N_LAYERS):
            win_list.append(jnp.concatenate([wn["in_w"][i][:, :, t]
                                             for t in range(WN_KERNEL_SIZE)], axis=1))
            wrs = wn["rs_w"][i][:, :, 0]
            brs = wn["rs_b"][i]
            if i < WN_N_LAYERS - 1:
                wrs_list.append(wrs[:nc])
                brs_list.append(brs[:nc])
                wse_list.append(wend @ wrs[nc:])
                bend_total = bend_total + wend @ brs[nc:]
            else:
                wse_list.append(wend @ wrs)
                bend_total = bend_total + wend @ brs

        flows_meta.append({
            "n_rem": n_rem, "n_half": n_half,
            "wstack": put(wstack), "bs": put(wn["start_b"]),
            "wc": put(wc_folded), "bc": put(bc_total),
            "win": [put(w) for w in win_list],
            "wrs": [put(w) for w in wrs_list],
            "brs": [put(b) for b in brs_list],
            "wse": [put(w) for w in wse_list],
            "bend": put(bend_total),
        })

    slab = jnp.concatenate(rows, axis=0)
    pad_r = (-slab.shape[0]) % 8
    if pad_r:
        slab = jnp.pad(slab, ((0, pad_r), (0, 0)))
    return slab, flows_meta, logabsdets


# -------------------------------- WaveGlow forward ---------------------------------
@jax.jit
def waveglow_forward(spect, audio, params):
    """spect: (B, n_mel, frames), audio: (B, time) -- PyTorch NCW / NW interface.
    Returns (audio_out (B, n_group, T_g), log_s_list, log_det_W_list)."""
    B, _, frames = spect.shape
    audio_len = audio.shape[1]
    assert (frames - 1) * HOP_LENGTH + WIN_LENGTH >= audio_len
    T_g = audio_len // N_GROUP

    slab, flows_meta, logabsdets = _prepare_kernel_params(params)

    # polyphase 5-frame stack feeding each audio group (replaces zero-insertion
    # ConvTranspose1d + unfold; the conv itself is folded into the cond matmul).
    pad_r = max(0, GROUP_FRAMES * T_g - frames)
    sp_p = jnp.pad(spect, ((0, 0), (0, 0), (-D_MIN, pad_r)))
    slabs = [sp_p[:, :, (d - D_MIN):(d - D_MIN) + GROUP_FRAMES * T_g:GROUP_FRAMES]
             for d in range(D_MIN, D_MIN + X5_FRAMES)]
    x5 = jnp.concatenate(slabs, axis=1).astype(X5_STORE_DTYPE)   # (B, X5_CH, T_g), bf16 in HBM

    # audio groups, NCW: (B, n_group, T_g)  (== torch unfold + permute)
    au = jnp.transpose(audio[:, :T_g * N_GROUP].reshape(B, T_g, N_GROUP), (0, 2, 1))

    TILE_T, NT = _choose_time_tiling(T_g, B)
    T_pad = NT * TILE_T
    Wn = TILE_T + 2 * PAD
    au_halo = _make_halo_windows(au, TILE_T=TILE_T, NT=NT, T=T_g)   # built ONCE, read ONCE
    x5_halo = _make_halo_windows(x5, TILE_T=TILE_T, NT=NT, T=T_g)

    out_dtype = audio.dtype
    early_ks = [k for k in range(N_FLOWS) if k % N_EARLY_EVERY == 0 and k > 0]
    n_final = N_GROUP - len(early_ks) * N_EARLY_SIZE
    halves = [fm["n_half"] for fm in flows_meta]

    out_shapes = tuple(
        [jax.ShapeDtypeStruct((B, N_EARLY_SIZE, T_pad), out_dtype) for _ in early_ks]
        + [jax.ShapeDtypeStruct((B, n_final, T_pad), out_dtype)]
        + [jax.ShapeDtypeStruct((B, nh, T_pad), out_dtype) for nh in halves])
    out_specs = tuple(
        [pl.BlockSpec((1, N_EARLY_SIZE, TILE_T), lambda b, t: (b, 0, t)) for _ in early_ks]
        + [pl.BlockSpec((1, n_final, TILE_T), lambda b, t: (b, 0, t))]
        + [pl.BlockSpec((1, nh, TILE_T), lambda b, t: (b, 0, t)) for nh in halves])

    in_specs = [
        pl.BlockSpec((1, 1, N_GROUP, Wn), lambda b, t: (b, t, 0, 0)),
        pl.BlockSpec((1, 1, X5_CH, Wn), lambda b, t: (b, t, 0, 0)),
        pl.BlockSpec(slab.shape, lambda b, t: (0, 0)),
    ]

    kernel = _make_fused_kernel(T_g=T_g, TILE_T=TILE_T, flows_meta=flows_meta,
                                out_dtype=out_dtype)

    outs = pl.pallas_call(
        kernel,
        out_shape=out_shapes,
        grid=(B, NT),
        in_specs=in_specs,
        out_specs=out_specs,
        compiler_params=pltpu.CompilerParams(
            dimension_semantics=("parallel", "parallel"),
            vmem_limit_bytes=48 * 1024 * 1024),   # explicit budget (v7x: 64 MiB physical)
    )(au_halo, x5_halo, slab)

    ne = len(early_ks)
    early_outs = [o[:, :, :T_g] for o in outs[:ne]]
    au_final = outs[ne][:, :, :T_g]
    log_s_list = [o[:, :, :T_g] for o in outs[ne + 1:]]
    audio_out = jnp.concatenate(early_outs + [au_final], axis=1)
    log_det_list = [B * T_g * lad for lad in logabsdets]
    return audio_out, log_s_list, log_det_list


# ------------------------------- parameter creation --------------------------------
def init_params(key):
    """Effective (post weight-norm) weights in the PyTorch layouts."""
    def nxt():
        nonlocal key
        key, sub = jax.random.split(key)
        return sub

    def w_(shape, scale=0.1):
        return scale * jax.random.normal(nxt(), shape, jnp.float32)

    params = {"up_w": w_((N_MEL, N_MEL, WIN_LENGTH)),     # ConvTranspose1d (Cin,Cout,K)
              "up_b": w_((N_MEL,))}

    n_half = N_GROUP // 2
    n_rem = N_GROUP
    nc = WN_N_CHANNELS
    cond_in = N_MEL * N_GROUP + SPEAKER_EMBED_DIM
    flows = []
    for k in range(N_FLOWS):
        if k % N_EARLY_EVERY == 0 and k > 0:
            n_half -= N_EARLY_SIZE // 2
            n_rem -= N_EARLY_SIZE

        # Invertible1x1Conv init: orthogonal W via QR, flip first column if det < 0.
        Wm = jax.random.normal(nxt(), (n_rem, n_rem), jnp.float32)
        Q, _ = jnp.linalg.qr(Wm)
        Q = Q.at[:, 0].multiply(jnp.sign(jnp.linalg.det(Q)))
        _, logabsdet = jnp.linalg.slogdet(Q)

        wn = {
            "start_w": w_((nc, n_half, 1)), "start_b": w_((nc,)),
            "cond_w": [w_((COND_HIDDEN, cond_in, 1)),
                       w_((COND_HIDDEN, COND_HIDDEN, 1)),
                       w_((2 * nc * WN_N_LAYERS, COND_HIDDEN, 1))],
            "cond_b": [w_((COND_HIDDEN,)), w_((COND_HIDDEN,)),
                       w_((2 * nc * WN_N_LAYERS,))],
            "in_w": [w_((2 * nc, nc, WN_KERNEL_SIZE)) for _ in range(WN_N_LAYERS)],
            "in_b": [w_((2 * nc,)) for _ in range(WN_N_LAYERS)],
            "rs_w": [w_((2 * nc if i < WN_N_LAYERS - 1 else nc, nc, 1))
                     for i in range(WN_N_LAYERS)],
            "rs_b": [w_((2 * nc if i < WN_N_LAYERS - 1 else nc,))
                     for i in range(WN_N_LAYERS)],
            # NOTE: PyTorch zero-inits `end`; use small random values so the affine
            # coupling / exp path is actually exercised (forward semantics identical).
            "end_w": w_((2 * n_half, nc, 1), 0.02), "end_b": w_((2 * n_half,), 0.02),
        }
        flows.append({"inv_W": Q, "inv_logabsdet": logabsdet, "wn": wn})
    params["flows"] = flows
    return params


# TODO(synk): infer() (reverse flow / W^-1 path), the speaker-embedding and
#             spect_scaling branches are not exercised in this forward-only kernel.

if __name__ == "__main__":
    key = jax.random.PRNGKey(0)
    pkey, skey, akey = jax.random.split(key, 3)

    params = init_params(pkey)

    B, frames = 2, 9
    audio_len = (frames - 1) * HOP_LENGTH + WIN_LENGTH        # 48, multiple of N_GROUP
    spect = jax.random.normal(skey, (B, N_MEL, frames), jnp.float32)
    audio = jax.random.normal(akey, (B, audio_len), jnp.float32)

    out, log_s_list, log_det_list = waveglow_forward(spect, audio, params)
    jax.block_until_ready((out, log_s_list, log_det_list))

    assert out.shape == (B, N_GROUP, audio_len // N_GROUP)
    assert len(log_s_list) == N_FLOWS and len(log_det_list) == N_FLOWS
    assert all(bool(jnp.all(jnp.isfinite(x))) for x in [out] + log_s_list)
    print("KERNEL_OK")
</pallas_src>

<mosaic_0001>
module attributes {stable_mosaic.version = 11 : i64} {
  func.func @kernel(%arg0: i32, %arg1: i32, %arg2: memref<1x1x8x384xf32, #tpu.memory_space<vmem>>, %arg3: memref<1x1x40x384xbf16, #tpu.memory_space<vmem>>, %arg4: memref<632x40xf32, #tpu.memory_space<vmem>>, %arg5: memref<1x2x128xf32, #tpu.memory_space<vmem>>, %arg6: memref<1x6x128xf32, #tpu.memory_space<vmem>>, %arg7: memref<1x4x128xf32, #tpu.memory_space<vmem>>, %arg8: memref<1x4x128xf32, #tpu.memory_space<vmem>>, %arg9: memref<1x3x128xf32, #tpu.memory_space<vmem>>, %arg10: memref<1x3x128xf32, #tpu.memory_space<vmem>>) attributes {dimension_semantics = [#tpu.dimension_semantics<parallel>, #tpu.dimension_semantics<parallel>], iteration_bounds = array<i64: 2, 1>, scalar_prefetch = 0 : i64, scratch_operands = 0 : i64, tpu.core_type = #tpu.core_type<tc>, window_params = [{transform_indices = @transform_0, window_bounds = array<i64: 1, 1, 8, 384>}, {transform_indices = @transform_1, window_bounds = array<i64: 1, 1, 40, 384>}, {pipeline_mode = #tpu.pipeline_mode<synchronous>, transform_indices = @transform_2, window_bounds = array<i64: 632, 40>}, {transform_indices = @transform_3, window_bounds = array<i64: 1, 2, 128>}, {transform_indices = @transform_4, window_bounds = array<i64: 1, 6, 128>}, {transform_indices = @transform_5, window_bounds = array<i64: 1, 4, 128>}, {transform_indices = @transform_6, window_bounds = array<i64: 1, 4, 128>}, {transform_indices = @transform_7, window_bounds = array<i64: 1, 3, 128>}, {transform_indices = @transform_8, window_bounds = array<i64: 1, 3, 128>}]} {
    %c128_i32 = arith.constant 128 : i32
    %0 = arith.muli %arg1, %c128_i32 : i32
    %c128_i32_0 = arith.constant 128 : i32
    %1 = arith.subi %0, %c128_i32_0 : i32
    %2 = tpu.iota {dimensions = array<i32: 1>} : vector<1x384xi32>
    %3 = vector.broadcast %1 : i32 to vector<1x384xi32>
    %4 = arith.addi %3, %2 : vector<1x384xi32>
    %c0_i32 = arith.constant 0 : i32
    %5 = vector.broadcast %c0_i32 : i32 to vector<1x384xi32>
    %6 = arith.cmpi sge, %4, %5 : vector<1x384xi32>
    %c6_i32 = arith.constant 6 : i32
    %7 = vector.broadcast %c6_i32 : i32 to vector<1x384xi32>
    %8 = arith.cmpi slt, %4, %7 : vector<1x384xi32>
    %9 = arith.andi %6, %8 : vector<1x384xi1>
    %c0 = arith.constant 0 : index
    %c0_1 = arith.constant 0 : index
    %c0_2 = arith.constant 0 : index
    %c0_3 = arith.constant 0 : index
    %10 = vector.load %arg2[%c0, %c0_1, %c0_2, %c0_3] : memref<1x1x8x384xf32, #tpu.memory_space<vmem>>, vector<1x1x8x384xf32>
    %11 = vector.shape_cast %10 : vector<1x1x8x384xf32> to vector<8x384xf32>
    %c0_4 = arith.constant 0 : index
    %c0_5 = arith.constant 0 : index
    %c0_6 = arith.constant 0 : index
    %c0_7 = arith.constant 0 : index
    %12 = vector.load %arg3[%c0_4, %c0_5, %c0_6, %c0_7] : memref<1x1x40x384xbf16, #tpu.memory_space<vmem>>, vector<1x1x40x384xbf16>
    %13 = vector.shape_cast %12 : vector<1x1x40x384xbf16> to vector<40x384xbf16>
    %c0_8 = arith.constant 0 : index
    %c0_9 = arith.constant 0 : index
    %14 = vector.load %arg4[%c0_8, %c0_9] : memref<632x40xf32, #tpu.memory_space<vmem>>, vector<16x8xf32>
    %cst = arith.constant dense<0.000000e+00> : vector<16x384xf32>
    %15 = tpu.matmul %14, %11, %cst {dimension_numbers = #tpu.dot_dimension_numbers<[1], [0], [0], [1], [0, 0, 1, 1], [], []>} : vector<16x8xf32>, vector<8x384xf32>, vector<16x384xf32> -> vector<16x384xf32>
    %16 = vector.extract_strided_slice %15 {offsets = [0, 0], sizes = [4, 384], strides = [1, 1]} : vector<16x384xf32> to vector<4x384xf32>
    %17 = vector.extract_strided_slice %15 {offsets = [4, 0], sizes = [4, 384], strides = [1, 1]} : vector<16x384xf32> to vector<4x384xf32>
    %18 = vector.extract_strided_slice %15 {offsets = [8, 0], sizes = [8, 384], strides = [1, 1]} : vector<16x384xf32> to vector<8x384xf32>
    %c16 = arith.constant 16 : index
    %c0_10 = arith.constant 0 : index
    %19 = vector.load %arg4[%c16, %c0_10] : memref<632x40xf32, #tpu.memory_space<vmem>>, vector<8x1xf32>
    %20 = vector.broadcast %19 : vector<8x1xf32> to vector<8x384xf32>
    %21 = arith.addf %18, %20 : vector<8x384xf32>
    %c24 = arith.constant 24 : index
    %c0_11 = arith.constant 0 : index
    %22 = vector.load %arg4[%c24, %c0_11] : memref<632x40xf32, #tpu.memory_space<vmem>>, vector<32x40xf32>
    %23 = arith.truncf %22 : vector<32x40xf32> to vector<32x40xbf16>
    %cst_12 = arith.constant dense<0.000000e+00> : vector<32x384xf32>
    %24 = tpu.matmul %23, %13, %cst_12 {dimension_numbers = #tpu.dot_dimension_numbers<[1], [0], [0], [1], [0, 0, 1, 1], [], []>} : vector<32x40xbf16>, vector<40x384xbf16>, vector<32x384xf32> -> vector<32x384xf32>
    %c56 = arith.constant 56 : index
    %c0_13 = arith.constant 0 : index
    %25 = vector.load %arg4[%c56, %c0_13] : memref<632x40xf32, #tpu.memory_space<vmem>>, vector<32x1xf32>
    %26 = vector.broadcast %25 : vector<32x1xf32> to vector<32x384xf32>
    %27 = arith.addf %24, %26 : vector<32x384xf32>
    %cst_14 = arith.constant 0.000000e+00 : f32
    %28 = vector.shape_cast %9 : vector<1x384xi1> to vector<1x384xi1>
    %29 = vector.broadcast %28 : vector<1x384xi1> to vector<8x384xi1>
    %30 = vector.broadcast %cst_14 : f32 to vector<8x384xf32>
    %31 = arith.select %29, %21, %30 : vector<8x384xi1>, vector<8x384xf32>
    %c1_i32 = arith.constant 1 : i32
    %32 = tpu.dynamic_rotate %31 by %c1_i32 dim 1 : vector<8x384xf32>, i32 -> vector<8x384xf32>
    %c383_i32 = arith.constant 383 : i32
    %33 = tpu.dynamic_rotate %31 by %c383_i32 dim 1 : vector<8x384xf32>, i32 -> vector<8x384xf32>
    %c88 = arith.constant 88 : index
    %c0_15 = arith.constant 0 : index
    %34 = vector.load %arg4[%c88, %c0_15] : memref<632x40xf32, #tpu.memory_space<vmem>>, vector<16x24xf32>
    %35 = vector.extract_strided_slice %34 {offsets = [0, 0], sizes = [16, 8], strides = [1, 1]} : vector<16x24xf32> to vector<16x8xf32>
    %cst_16 = arith.constant dense<0.000000e+00> : vector<16x384xf32>
    %36 = tpu.matmul %35, %32, %cst_16 {dimension_numbers = #tpu.dot_dimension_numbers<[1], [0], [0], [1], [0, 0, 1, 1], [], []>} : vector<16x8xf32>, vector<8x384xf32>, vector<16x384xf32> -> vector<16x384xf32>
    %37 = vector.extract_strided_slice %34 {offsets = [0, 8], sizes = [16, 8], strides = [1, 1]} : vector<16x24xf32> to vector<16x8xf32>
    %cst_17 = arith.constant dense<0.000000e+00> : vector<16x384xf32>
    %38 = tpu.matmul %37, %31, %cst_17 {dimension_numbers = #tpu.dot_dimension_numbers<[1], [0], [0], [1], [0, 0, 1, 1], [], []>} : vector<16x8xf32>, vector<8x384xf32>, vector<16x384xf32> -> vector<16x384xf32>
    %39 = arith.addf %36, %38 : vector<16x384xf32>
    %40 = vector.extract_strided_slice %34 {offsets = [0, 16], sizes = [16, 8], strides = [1, 1]} : vector<16x24xf32> to vector<16x8xf32>
    %cst_18 = arith.constant dense<0.000000e+00> : vector<16x384xf32>
    %41 = tpu.matmul %40, %33, %cst_18 {dimension_numbers = #tpu.dot_dimension_numbers<[1], [0], [0], [1], [0, 0, 1, 1], [], []>} : vector<16x8xf32>, vector<8x384xf32>, vector<16x384xf32> -> vector<16x384xf32>
    %42 = arith.addf %39, %41 : vector<16x384xf32>
    %43 = vector.extract_strided_slice %27 {offsets = [0, 0], sizes = [16, 384], strides = [1, 1]} : vector<32x384xf32> to vector<16x384xf32>
    %44 = arith.addf %42, %43 : vector<16x384xf32>
    %45 = vector.extract_strided_slice %44 {offsets = [0, 0], sizes = [8, 384], strides = [1, 1]} : vector<16x384xf32> to vector<8x384xf32>
    %46 = math.tanh %45 : vector<8x384xf32>
    %47 = vector.extract_strided_slice %44 {offsets = [8, 0], sizes = [8, 384], strides = [1, 1]} : vector<16x384xf32> to vector<8x384xf32>
    %48 = arith.negf %47 : vector<8x384xf32>
    %49 = math.exp %48 : vector<8x384xf32>
    %cst_19 = arith.constant 1.000000e+00 : f32
    %50 = vector.broadcast %cst_19 : f32 to vector<8x384xf32>
    %51 = arith.addf %50, %49 : vector<8x384xf32>
    %52 = arith.divf %50, %51 : vector<8x384xf32>
    %53 = arith.mulf %46, %52 : vector<8x384xf32>
    %c136 = arith.constant 136 : index
    %c0_20 = arith.constant 0 : index
    %54 = vector.load %arg4[%c136, %c0_20] : memref<632x40xf32, #tpu.memory_space<vmem>>, vector<8x8xf32>
    %cst_21 = arith.constant dense<0.000000e+00> : vector<8x384xf32>
    %55 = tpu.matmul %54, %53, %cst_21 {dimension_numbers = #tpu.dot_dimension_numbers<[1], [0], [0], [1], [0, 0, 1, 1], [], []>} : vector<8x8xf32>, vector<8x384xf32>, vector<8x384xf32> -> vector<8x384xf32>
    %c120 = arith.constant 120 : index
    %c0_22 = arith.constant 0 : index
    %56 = vector.load %arg4[%c120, %c0_22] : memref<632x40xf32, #tpu.memory_space<vmem>>, vector<8x8xf32>
    %cst_23 = arith.constant dense<0.000000e+00> : vector<8x384xf32>
    %57 = tpu.matmul %56, %53, %cst_23 {dimension_numbers = #tpu.dot_dimension_numbers<[1], [0], [0], [1], [0, 0, 1, 1], [], []>} : vector<8x8xf32>, vector<8x384xf32>, vector<8x384xf32> -> vector<8x384xf32>
    %58 = arith.addf %21, %57 : vector<8x384xf32>
    %c128 = arith.constant 128 : index
    %c0_24 = arith.constant 0 : index
    %59 = vector.load %arg4[%c128, %c0_24] : memref<632x40xf32, #tpu.memory_space<vmem>>, vector<8x1xf32>
    %60 = vector.broadcast %59 : vector<8x1xf32> to vector<8x384xf32>
    %61 = arith.addf %58, %60 : vector<8x384xf32>
    %cst_25 = arith.constant 0.000000e+00 : f32
    %62 = vector.shape_cast %9 : vector<1x384xi1> to vector<1x384xi1>
    %63 = vector.broadcast %62 : vector<1x384xi1> to vector<8x384xi1>
    %64 = vector.broadcast %cst_25 : f32 to vector<8x384xf32>
    %65 = arith.select %63, %61, %64 : vector<8x384xi1>, vector<8x384xf32>
    %c2_i32 = arith.constant 2 : i32
    %66 = tpu.dynamic_rotate %65 by %c2_i32 dim 1 : vector<8x384xf32>, i32 -> vector<8x384xf32>
    %c382_i32 = arith.constant 382 : i32
    %67 = tpu.dynamic_rotate %65 by %c382_i32 dim 1 : vector<8x384xf32>, i32 -> vector<8x384xf32>
    %c104 = arith.constant 104 : index
    %c0_26 = arith.constant 0 : index
    %68 = vector.load %arg4[%c104, %c0_26] : memref<632x40xf32, #tpu.memory_space<vmem>>, vector<16x24xf32>
    %69 = vector.extract_strided_slice %68 {offsets = [0, 0], sizes = [16, 8], strides = [1, 1]} : vector<16x24xf32> to vector<16x8xf32>
    %cst_27 = arith.constant dense<0.000000e+00> : vector<16x384xf32>
    %70 = tpu.matmul %69, %66, %cst_27 {dimension_numbers = #tpu.dot_dimension_numbers<[1], [0], [0], [1], [0, 0, 1, 1], [], []>} : vector<16x8xf32>, vector<8x384xf32>, vector<16x384xf32> -> vector<16x384xf32>
    %71 = vector.extract_strided_slice %68 {offsets = [0, 8], sizes = [16, 8], strides = [1, 1]} : vector<16x24xf32> to vector<16x8xf32>
    %cst_28 = arith.constant dense<0.000000e+00> : vector<16x384xf32>
    %72 = tpu.matmul %71, %65, %cst_28 {dimension_numbers = #tpu.dot_dimension_numbers<[1], [0], [0], [1], [0, 0, 1, 1], [], []>} : vector<16x8xf32>, vector<8x384xf32>, vector<16x384xf32> -> vector<16x384xf32>
    %73 = arith.addf %70, %72 : vector<16x384xf32>
    %74 = vector.extract_strided_slice %68 {offsets = [0, 16], sizes = [16, 8], strides = [1, 1]} : vector<16x24xf32> to vector<16x8xf32>
    %cst_29 = arith.constant dense<0.000000e+00> : vector<16x384xf32>
    %75 = tpu.matmul %74, %67, %cst_29 {dimension_numbers = #tpu.dot_dimension_numbers<[1], [0], [0], [1], [0, 0, 1, 1], [], []>} : vector<16x8xf32>, vector<8x384xf32>, vector<16x384xf32> -> vector<16x384xf32>
    %76 = arith.addf %73, %75 : vector<16x384xf32>
    %77 = vector.extract_strided_slice %27 {offsets = [16, 0], sizes = [16, 384], strides = [1, 1]} : vector<32x384xf32> to vector<16x384xf32>
    %78 = arith.addf %76, %77 : vector<16x384xf32>
    %79 = vector.extract_strided_slice %78 {offsets = [0, 0], sizes = [8, 384], strides = [1, 1]} : vector<16x384xf32> to vector<8x384xf32>
    %80 = math.tanh %79 : vector<8x384xf32>
    %81 = vector.extract_strided_slice %78 {offsets = [8, 0], sizes = [8, 384], strides = [1, 1]} : vector<16x384xf32> to vector<8x384xf32>
    %82 = arith.negf %81 : vector<8x384xf32>
    %83 = math.exp %82 : vector<8x384xf32>
    %cst_30 = arith.constant 1.000000e+00 : f32
    %84 = vector.broadcast %cst_30 : f32 to vector<8x384xf32>
    %85 = arith.addf %84, %83 : vector<8x384xf32>
    %86 = arith.divf %84, %85 : vector<8x384xf32>
    %87 = arith.mulf %80, %86 : vector<8x384xf32>
    %c144 = arith.constant 144 : index
    %c0_31 = arith.constant 0 : index
    %88 = vector.load %arg4[%c144, %c0_31] : memref<632x40xf32, #tpu.memory_space<vmem>>, vector<8x8xf32>
    %cst_32 = arith.constant dense<0.000000e+00> : vector<8x384xf32>
    %89 = tpu.matmul %88, %87, %cst_32 {dimension_numbers = #tpu.dot_dimension_numbers<[1], [0], [0], [1], [0, 0, 1, 1], [], []>} : vector<8x8xf32>, vector<8x384xf32>, vector<8x384xf32> -> vector<8x384xf32>
    %90 = arith.addf %55, %89 : vector<8x384xf32>
    %c152 = arith.constant 152 : index
    %c0_33 = arith.constant 0 : index
    %91 = vector.load %arg4[%c152, %c0_33] : memref<632x40xf32, #tpu.memory_space<vmem>>, vector<8x1xf32>
    %92 = vector.broadcast %91 : vector<8x1xf32> to vector<8x384xf32>
    %93 = arith.addf %90, %92 : vector<8x384xf32>
    %94 = vector.extract_strided_slice %93 {offsets = [0, 0], sizes = [4, 384], strides = [1, 1]} : vector<8x384xf32> to vector<4x384xf32>
    %95 = vector.extract_strided_slice %93 {offsets = [4, 0], sizes = [4, 384], strides = [1, 1]} : vector<8x384xf32> to vector<4x384xf32>
    %96 = vector.extract_strided_slice %95 {offsets = [0, 128], sizes = [4, 128], strides = [1, 1]} : vector<4x384xf32> to vector<4x128xf32>
    %c0_34 = arith.constant 0 : index
    %c0_35 = arith.constant 0 : index
    %c0_36 = arith.constant 0 : index
    %97 = vector.load %arg7[%c0_34, %c0_35, %c0_36] : memref<1x4x128xf32, #tpu.memory_space<vmem>>, vector<1x4x128xf32>
    %98 = vector.shape_cast %97 : vector<1x4x128xf32> to vector<4x128xf32>
    %99 = vector.shape_cast %96 : vector<4x128xf32> to vector<1x4x128xf32>
    tpu.vector_store %arg7[%c0_34, %c0_35, %c0_36], %99 {strides = array<i32>} : memref<1x4x128xf32, #tpu.memory_space<vmem>>, vector<1x4x128xf32>,
    %100 = math.exp %95 : vector<4x384xf32>
    %101 = arith.mulf %100, %17 : vector<4x384xf32>
    %102 = arith.addf %101, %94 : vector<4x384xf32>
    %103 = tpu.concatenate %16, %102 in 0 : vector<4x384xf32>, vector<4x384xf32> -> vector<8x384xf32>
    %cst_37 = arith.constant 0.000000e+00 : f32
    %104 = vector.shape_cast %9 : vector<1x384xi1> to vector<1x384xi1>
    %105 = vector.broadcast %104 : vector<1x384xi1> to vector<8x384xi1>
    %106 = vector.broadcast %cst_37 : f32 to vector<8x384xf32>
    %107 = arith.select %105, %103, %106 : vector<8x384xi1>, vector<8x384xf32>
    %c160 = arith.constant 160 : index
    %c0_38 = arith.constant 0 : index
    %108 = vector.load %arg4[%c160, %c0_38] : memref<632x40xf32, #tpu.memory_space<vmem>>, vector<16x8xf32>
    %cst_39 = arith.constant dense<0.000000e+00> : vector<16x384xf32>
    %109 = tpu.matmul %108, %107, %cst_39 {dimension_numbers = #tpu.dot_dimension_numbers<[1], [0], [0], [1], [0, 0, 1, 1], [], []>} : vector<16x8xf32>, vector<8x384xf32>, vector<16x384xf32> -> vector<16x384xf32>
    %110 = vector.extract_strided_slice %109 {offsets = [0, 0], sizes = [4, 384], strides = [1, 1]} : vector<16x384xf32> to vector<4x384xf32>
    %111 = vector.extract_strided_slice %109 {offsets = [4, 0], sizes = [4, 384], strides = [1, 1]} : vector<16x384xf32> to vector<4x384xf32>
    %112 = vector.extract_strided_slice %109 {offsets = [8, 0], sizes = [8, 384], strides = [1, 1]} : vector<16x384xf32> to vector<8x384xf32>
    %c176 = arith.constant 176 : index
    %c0_40 = arith.constant 0 : index
    %113 = vector.load %arg4[%c176, %c0_40] : memref<632x40xf32, #tpu.memory_space<vmem>>, vector<8x1xf32>
    %114 = vector.broadcast %113 : vector<8x1xf32> to vector<8x384xf32>
    %115 = arith.addf %112, %114 : vector<8x384xf32>
    %c184 = arith.constant 184 : index
    %c0_41 = arith.constant 0 : index
    %116 = vector.load %arg4[%c184, %c0_41] : memref<632x40xf32, #tpu.memory_space<vmem>>, vector<32x40xf32>
    %117 = arith.truncf %116 : vector<32x40xf32> to vector<32x40xbf16>
    %cst_42 = arith.constant dense<0.000000e+00> : vector<32x384xf32>
    %118 = tpu.matmul %117, %13, %cst_42 {dimension_numbers = #tpu.dot_dimension_numbers<[1], [0], [0], [1], [0, 0, 1, 1], [], []>} : vector<32x40xbf16>, vector<40x384xbf16>, vector<32x384xf32> -> vector<32x384xf32>
    %c216 = arith.constant 216 : index
    %c0_43 = arith.constant 0 : index
    %119 = vector.load %arg4[%c216, %c0_43] : memref<632x40xf32, #tpu.memory_space<vmem>>, vector<32x1xf32>
    %120 = vector.broadcast %119 : vector<32x1xf32> to vector<32x384xf32>
    %121 = arith.addf %118, %120 : vector<32x384xf32>
    %cst_44 = arith.constant 0.000000e+00 : f32
    %122 = vector.shape_cast %9 : vector<1x384xi1> to vector<1x384xi1>
    %123 = vector.broadcast %122 : vector<1x384xi1> to vector<8x384xi1>
    %124 = vector.broadcast %cst_44 : f32 to vector<8x384xf32>
    %125 = arith.select %123, %115, %124 : vector<8x384xi1>, vector<8x384xf32>
    %c1_i32_45 = arith.constant 1 : i32
    %126 = tpu.dynamic_rotate %125 by %c1_i32_45 dim 1 : vector<8x384xf32>, i32 -> vector<8x384xf32>
    %c383_i32_46 = arith.constant 383 : i32
    %127 = tpu.dynamic_rotate %125 by %c383_i32_46 dim 1 : vector<8x384xf32>, i32 -> vector<8x384xf32>
    %c248 = arith.constant 248 : index
    %c0_47 = arith.constant 0 : index
    %128 = vector.load %arg4[%c248, %c0_47] : memref<632x40xf32, #tpu.memory_space<vmem>>, vector<16x24xf32>
    %129 = vector.extract_strided_slice %128 {offsets = [0, 0], sizes = [16, 8], strides = [1, 1]} : vector<16x24xf32> to vector<16x8xf32>
    %cst_48 = arith.constant dense<0.000000e+00> : vector<16x384xf32>
    %130 = tpu.matmul %129, %126, %cst_48 {dimension_numbers = #tpu.dot_dimension_numbers<[1], [0], [0], [1], [0, 0, 1, 1], [], []>} : vector<16x8xf32>, vector<8x384xf32>, vector<16x384xf32> -> vector<16x384xf32>
    %131 = vector.extract_strided_slice %128 {offsets = [0, 8], sizes = [16, 8], strides = [1, 1]} : vector<16x24xf32> to vector<16x8xf32>
    %cst_49 = arith.constant dense<0.000000e+00> : vector<16x384xf32>
    %132 = tpu.matmul %131, %125, %cst_49 {dimension_numbers = #tpu.dot_dimension_numbers<[1], [0], [0], [1], [0, 0, 1, 1], [], []>} : vector<16x8xf32>, vector<8x384xf32>, vector<16x384xf32> -> vector<16x384xf32>
    %133 = arith.addf %130, %132 : vector<16x384xf32>
    %134 = vector.extract_strided_slice %128 {offsets = [0, 16], sizes = [16, 8], strides = [1, 1]} : vector<16x24xf32> to vector<16x8xf32>
    %cst_50 = arith.constant dense<0.000000e+00> : vector<16x384xf32>
    %135 = tpu.matmul %134, %127, %cst_50 {dimension_numbers = #tpu.dot_dimension_numbers<[1], [0], [0], [1], [0, 0, 1, 1], [], []>} : vector<16x8xf32>, vector<8x384xf32>, vector<16x384xf32> -> vector<16x384xf32>
    %136 = arith.addf %133, %135 : vector<16x384xf32>
    %137 = vector.extract_strided_slice %121 {offsets = [0, 0], sizes = [16, 384], strides = [1, 1]} : vector<32x384xf32> to vector<16x384xf32>
    %138 = arith.addf %136, %137 : vector<16x384xf32>
    %139 = vector.extract_strided_slice %138 {offsets = [0, 0], sizes = [8, 384], strides = [1, 1]} : vector<16x384xf32> to vector<8x384xf32>
    %140 = math.tanh %139 : vector<8x384xf32>
    %141 = vector.extract_strided_slice %138 {offsets = [8, 0], sizes = [8, 384], strides = [1, 1]} : vector<16x384xf32> to vector<8x384xf32>
    %142 = arith.negf %141 : vector<8x384xf32>
    %143 = math.exp %142 : vector<8x384xf32>
    %cst_51 = arith.constant 1.000000e+00 : f32
    %144 = vector.broadcast %cst_51 : f32 to vector<8x384xf32>
    %145 = arith.addf %144, %143 : vector<8x384xf32>
    %146 = arith.divf %144, %145 : vector<8x384xf32>
    %147 = arith.mulf %140, %146 : vector<8x384xf32>
    %c296 = arith.constant 296 : index
    %c0_52 = arith.constant 0 : index
    %148 = vector.load %arg4[%c296, %c0_52] : memref<632x40xf32, #tpu.memory_space<vmem>>, vector<8x8xf32>
    %cst_53 = arith.constant dense<0.000000e+00> : vector<8x384xf32>
    %149 = tpu.matmul %148, %147, %cst_53 {dimension_numbers = #tpu.dot_dimension_numbers<[1], [0], [0], [1], [0, 0, 1, 1], [], []>} : vector<8x8xf32>, vector<8x384xf32>, vector<8x384xf32> -> vector<8x384xf32>
    %c280 = arith.constant 280 : index
    %c0_54 = arith.constant 0 : index
    %150 = vector.load %arg4[%c280, %c0_54] : memref<632x40xf32, #tpu.memory_space<vmem>>, vector<8x8xf32>
    %cst_55 = arith.constant dense<0.000000e+00> : vector<8x384xf32>
    %151 = tpu.matmul %150, %147, %cst_55 {dimension_numbers = #tpu.dot_dimension_numbers<[1], [0], [0], [1], [0, 0, 1, 1], [], []>} : vector<8x8xf32>, vector<8x384xf32>, vector<8x384xf32> -> vector<8x384xf32>
    %152 = arith.addf %115, %151 : vector<8x384xf32>
    %c288 = arith.constant 288 : index
    %c0_56 = arith.constant 0 : index
    %153 = vector.load %arg4[%c288, %c0_56] : memref<632x40xf32, #tpu.memory_space<vmem>>, vector<8x1xf32>
    %154 = vector.broadcast %153 : vector<8x1xf32> to vector<8x384xf32>
    %155 = arith.addf %152, %154 : vector<8x384xf32>
    %cst_57 = arith.constant 0.000000e+00 : f32
    %156 = vector.shape_cast %9 : vector<1x384xi1> to vector<1x384xi1>
    %157 = vector.broadcast %156 : vector<1x384xi1> to vector<8x384xi1>
    %158 = vector.broadcast %cst_57 : f32 to vector<8x384xf32>
    %159 = arith.select %157, %155, %158 : vector<8x384xi1>, vector<8x384xf32>
    %c2_i32_58 = arith.constant 2 : i32
    %160 = tpu.dynamic_rotate %159 by %c2_i32_58 dim 1 : vector<8x384xf32>, i32 -> vector<8x384xf32>
    %c382_i32_59 = arith.constant 382 : i32
    %161 = tpu.dynamic_rotate %159 by %c382_i32_59 dim 1 : vector<8x384xf32>, i32 -> vector<8x384xf32>
    %c264 = arith.constant 264 : index
    %c0_60 = arith.constant 0 : index
    %162 = vector.load %arg4[%c264, %c0_60] : memref<632x40xf32, #tpu.memory_space<vmem>>, vector<16x24xf32>
    %163 = vector.extract_strided_slice %162 {offsets = [0, 0], sizes = [16, 8], strides = [1, 1]} : vector<16x24xf32> to vector<16x8xf32>
    %cst_61 = arith.constant dense<0.000000e+00> : vector<16x384xf32>
    %164 = tpu.matmul %163, %160, %cst_61 {dimension_numbers = #tpu.dot_dimension_numbers<[1], [0], [0], [1], [0, 0, 1, 1], [], []>} : vector<16x8xf32>, vector<8x384xf32>, vector<16x384xf32> -> vector<16x384xf32>
    %165 = vector.extract_strided_slice %162 {offsets = [0, 8], sizes = [16, 8], strides = [1, 1]} : vector<16x24xf32> to vector<16x8xf32>
    %cst_62 = arith.constant dense<0.000000e+00> : vector<16x384xf32>
    %166 = tpu.matmul %165, %159, %cst_62 {dimension_numbers = #tpu.dot_dimension_numbers<[1], [0], [0], [1], [0, 0, 1, 1], [], []>} : vector<16x8xf32>, vector<8x384xf32>, vector<16x384xf32> -> vector<16x384xf32>
    %167 = arith.addf %164, %166 : vector<16x384xf32>
    %168 = vector.extract_strided_slice %162 {offsets = [0, 16], sizes = [16, 8], strides = [1, 1]} : vector<16x24xf32> to vector<16x8xf32>
    %cst_63 = arith.constant dense<0.000000e+00> : vector<16x384xf32>
    %169 = tpu.matmul %168, %161, %cst_63 {dimension_numbers = #tpu.dot_dimension_numbers<[1], [0], [0], [1], [0, 0, 1, 1], [], []>} : vector<16x8xf32>, vector<8x384xf32>, vector<16x384xf32> -> vector<16x384xf32>
    %170 = arith.addf %167, %169 : vector<16x384xf32>
    %171 = vector.extract_strided_slice %121 {offsets = [16, 0], sizes = [16, 384], strides = [1, 1]} : vector<32x384xf32> to vector<16x384xf32>
    %172 = arith.addf %170, %171 : vector<16x384xf32>
    %173 = vector.extract_strided_slice %172 {offsets = [0, 0], sizes = [8, 384], strides = [1, 1]} : vector<16x384xf32> to vector<8x384xf32>
    %174 = math.tanh %173 : vector<8x384xf32>
    %175 = vector.extract_strided_slice %172 {offsets = [8, 0], sizes = [8, 384], strides = [1, 1]} : vector<16x384xf32> to vector<8x384xf32>
    %176 = arith.negf %175 : vector<8x384xf32>
    %177 = math.exp %176 : vector<8x384xf32>
    %cst_64 = arith.constant 1.000000e+00 : f32
    %178 = vector.broadcast %cst_64 : f32 to vector<8x384xf32>
    %179 = arith.addf %178, %177 : vector<8x384xf32>
    %180 = arith.divf %178, %179 : vector<8x384xf32>
    %181 = arith.mulf %174, %180 : vector<8x384xf32>
    %c304 = arith.constant 304 : index
    %c0_65 = arith.constant 0 : index
    %182 = vector.load %arg4[%c304, %c0_65] : memref<632x40xf32, #tpu.memory_space<vmem>>, vector<8x8xf32>
    %cst_66 = arith.constant dense<0.000000e+00> : vector<8x384xf32>
    %183 = tpu.matmul %182, %181, %cst_66 {dimension_numbers = #tpu.dot_dimension_numbers<[1], [0], [0], [1], [0, 0, 1, 1], [], []>} : vector<8x8xf32>, vector<8x384xf32>, vector<8x384xf32> -> vector<8x384xf32>
    %184 = arith.addf %149, %183 : vector<8x384xf32>
    %c312 = arith.constant 312 : index
    %c0_67 = arith.constant 0 : index
    %185 = vector.load %arg4[%c312, %c0_67] : memref<632x40xf32, #tpu.memory_space<vmem>>, vector<8x1xf32>
    %186 = vector.broadcast %185 : vector<8x1xf32> to vector<8x384xf32>
    %187 = arith.addf %184, %186 : vector<8x384xf32>
    %188 = vector.extract_strided_slice %187 {offsets = [0, 0], sizes = [4, 384], strides = [1, 1]} : vector<8x384xf32> to vector<4x384xf32>
    %189 = vector.extract_strided_slice %187 {offsets = [4, 0], sizes = [4, 384], strides = [1, 1]} : vector<8x384xf32> to vector<4x384xf32>
    %190 = vector.extract_strided_slice %189 {offsets = [0, 128], sizes = [4, 128], strides = [1, 1]} : vector<4x384xf32> to vector<4x128xf32>
    %c0_68 = arith.constant 0 : index
    %c0_69 = arith.constant 0 : index
    %c0_70 = arith.constant 0 : index
    %191 = vector.load %arg8[%c0_68, %c0_69, %c0_70] : memref<1x4x128xf32, #tpu.memory_space<vmem>>, vector<1x4x128xf32>
    %192 = vector.shape_cast %191 : vector<1x4x128xf32> to vector<4x128xf32>
    %193 = vector.shape_cast %190 : vector<4x128xf32> to vector<1x4x128xf32>
    tpu.vector_store %arg8[%c0_68, %c0_69, %c0_70], %193 {strides = array<i32>} : memref<1x4x128xf32, #tpu.memory_space<vmem>>, vector<1x4x128xf32>,
    %194 = math.exp %189 : vector<4x384xf32>
    %195 = arith.mulf %194, %111 : vector<4x384xf32>
    %196 = arith.addf %195, %188 : vector<4x384xf32>
    %197 = tpu.concatenate %110, %196 in 0 : vector<4x384xf32>, vector<4x384xf32> -> vector<8x384xf32>
    %cst_71 = arith.constant 0.000000e+00 : f32
    %198 = vector.shape_cast %9 : vector<1x384xi1> to vector<1x384xi1>
    %199 = vector.broadcast %198 : vector<1x384xi1> to vector<8x384xi1>
    %200 = vector.broadcast %cst_71 : f32 to vector<8x384xf32>
    %201 = arith.select %199, %197, %200 : vector<8x384xi1>, vector<8x384xf32>
    %202 = vector.extract_strided_slice %201 {offsets = [0, 128], sizes = [2, 128], strides = [1, 1]} : vector<8x384xf32> to vector<2x128xf32>
    %c0_72 = arith.constant 0 : index
    %c0_73 = arith.constant 0 : index
    %c0_74 = arith.constant 0 : index
    %203 = vector.load %arg5[%c0_72, %c0_73, %c0_74] : memref<1x2x128xf32, #tpu.memory_space<vmem>>, vector<1x2x128xf32>
    %204 = vector.shape_cast %203 : vector<1x2x128xf32> to vector<2x128xf32>
    %205 = vector.shape_cast %202 : vector<2x128xf32> to vector<1x2x128xf32>
    tpu.vector_store %arg5[%c0_72, %c0_73, %c0_74], %205 {strides = array<i32>} : memref<1x2x128xf32, #tpu.memory_space<vmem>>, vector<1x2x128xf32>,
    %206 = vector.extract_strided_slice %201 {offsets = [2, 0], sizes = [6, 384], strides = [1, 1]} : vector<8x384xf32> to vector<6x384xf32>
    %c320 = arith.constant 320 : index
    %c0_75 = arith.constant 0 : index
    %207 = vector.load %arg4[%c320, %c0_75] : memref<632x40xf32, #tpu.memory_space<vmem>>, vector<16x6xf32>
    %cst_76 = arith.constant dense<0.000000e+00> : vector<16x384xf32>
    %208 = tpu.matmul %207, %206, %cst_76 {dimension_numbers = #tpu.dot_dimension_numbers<[1], [0], [0], [1], [0, 0, 1, 1], [], []>} : vector<16x6xf32>, vector<6x384xf32>, vector<16x384xf32> -> vector<16x384xf32>
    %209 = vector.extract_strided_slice %208 {offsets = [0, 0], sizes = [3, 384], strides = [1, 1]} : vector<16x384xf32> to vector<3x384xf32>
    %210 = vector.extract_strided_slice %208 {offsets = [3, 0], sizes = [3, 384], strides = [1, 1]} : vector<16x384xf32> to vector<3x384xf32>
    %211 = vector.extract_strided_slice %208 {offsets = [8, 0], sizes = [8, 384], strides = [1, 1]} : vector<16x384xf32> to vector<8x384xf32>
    %c336 = arith.constant 336 : index
    %c0_77 = arith.constant 0 : index
    %212 = vector.load %arg4[%c336, %c0_77] : memref<632x40xf32, #tpu.memory_space<vmem>>, vector<8x1xf32>
    %213 = vector.broadcast %212 : vector<8x1xf32> to vector<8x384xf32>
    %214 = arith.addf %211, %213 : vector<8x384xf32>
    %c344 = arith.constant 344 : index
    %c0_78 = arith.constant 0 : index
    %215 = vector.load %arg4[%c344, %c0_78] : memref<632x40xf32, #tpu.memory_space<vmem>>, vector<32x40xf32>
    %216 = arith.truncf %215 : vector<32x40xf32> to vector<32x40xbf16>
    %cst_79 = arith.constant dense<0.000000e+00> : vector<32x384xf32>
    %217 = tpu.matmul %216, %13, %cst_79 {dimension_numbers = #tpu.dot_dimension_numbers<[1], [0], [0], [1], [0, 0, 1, 1], [], []>} : vector<32x40xbf16>, vector<40x384xbf16>, vector<32x384xf32> -> vector<32x384xf32>
    %c376 = arith.constant 376 : index
    %c0_80 = arith.constant 0 : index
    %218 = vector.load %arg4[%c376, %c0_80] : memref<632x40xf32, #tpu.memory_space<vmem>>, vector<32x1xf32>
    %219 = vector.broadcast %218 : vector<32x1xf32> to vector<32x384xf32>
    %220 = arith.addf %217, %219 : vector<32x384xf32>
    %cst_81 = arith.constant 0.000000e+00 : f32
    %221 = vector.shape_cast %9 : vector<1x384xi1> to vector<1x384xi1>
    %222 = vector.broadcast %221 : vector<1x384xi1> to vector<8x384xi1>
    %223 = vector.broadcast %cst_81 : f32 to vector<8x384xf32>
    %224 = arith.select %222, %214, %223 : vector<8x384xi1>, vector<8x384xf32>
    %c1_i32_82 = arith.constant 1 : i32
    %225 = tpu.dynamic_rotate %224 by %c1_i32_82 dim 1 : vector<8x384xf32>, i32 -> vector<8x384xf32>
    %c383_i32_83 = arith.constant 383 : i32
    %226 = tpu.dynamic_rotate %224 by %c383_i32_83 dim 1 : vector<8x384xf32>, i32 -> vector<8x384xf32>
    %c408 = arith.constant 408 : index
    %c0_84 = arith.constant 0 : index
    %227 = vector.load %arg4[%c408, %c0_84] : memref<632x40xf32, #tpu.memory_space<vmem>>, vector<16x24xf32>
    %228 = vector.extract_strided_slice %227 {offsets = [0, 0], sizes = [16, 8], strides = [1, 1]} : vector<16x24xf32> to vector<16x8xf32>
    %cst_85 = arith.constant dense<0.000000e+00> : vector<16x384xf32>
    %229 = tpu.matmul %228, %225, %cst_85 {dimension_numbers = #tpu.dot_dimension_numbers<[1], [0], [0], [1], [0, 0, 1, 1], [], []>} : vector<16x8xf32>, vector<8x384xf32>, vector<16x384xf32> -> vector<16x384xf32>
    %230 = vector.extract_strided_slice %227 {offsets = [0, 8], sizes = [16, 8], strides = [1, 1]} : vector<16x24xf32> to vector<16x8xf32>
    %cst_86 = arith.constant dense<0.000000e+00> : vector<16x384xf32>
    %231 = tpu.matmul %230, %224, %cst_86 {dimension_numbers = #tpu.dot_dimension_numbers<[1], [0], [0], [1], [0, 0, 1, 1], [], []>} : vector<16x8xf32>, vector<8x384xf32>, vector<16x384xf32> -> vector<16x384xf32>
    %232 = arith.addf %229, %231 : vector<16x384xf32>
    %233 = vector.extract_strided_slice %227 {offsets = [0, 16], sizes = [16, 8], strides = [1, 1]} : vector<16x24xf32> to vector<16x8xf32>
    %cst_87 = arith.constant dense<0.000000e+00> : vector<16x384xf32>
    %234 = tpu.matmul %233, %226, %cst_87 {dimension_numbers = #tpu.dot_dimension_numbers<[1], [0], [0], [1], [0, 0, 1, 1], [], []>} : vector<16x8xf32>, vector<8x384xf32>, vector<16x384xf32> -> vector<16x384xf32>
    %235 = arith.addf %232, %234 : vector<16x384xf32>
    %236 = vector.extract_strided_slice %220 {offsets = [0, 0], sizes = [16, 384], strides = [1, 1]} : vector<32x384xf32> to vector<16x384xf32>
    %237 = arith.addf %235, %236 : vector<16x384xf32>
    %238 = vector.extract_strided_slice %237 {offsets = [0, 0], sizes = [8, 384], strides = [1, 1]} : vector<16x384xf32> to vector<8x384xf32>
    %239 = math.tanh %238 : vector<8x384xf32>
    %240 = vector.extract_strided_slice %237 {offsets = [8, 0], sizes = [8, 384], strides = [1, 1]} : vector<16x384xf32> to vector<8x384xf32>
    %241 = arith.negf %240 : vector<8x384xf32>
    %242 = math.exp %241 : vector<8x384xf32>
    %cst_88 = arith.constant 1.000000e+00 : f32
    %243 = vector.broadcast %cst_88 : f32 to vector<8x384xf32>
    %244 = arith.addf %243, %242 : vector<8x384xf32>
    %245 = arith.divf %243, %244 : vector<8x384xf32>
    %246 = arith.mulf %239, %245 : vector<8x384xf32>
    %c456 = arith.constant 456 : index
    %c0_89 = arith.constant 0 : index
    %247 = vector.load %arg4[%c456, %c0_89] : memref<632x40xf32, #tpu.memory_space<vmem>>, vector<6x8xf32>
    %cst_90 = arith.constant dense<0.000000e+00> : vector<6x384xf32>
    %248 = tpu.matmul %247, %246, %cst_90 {dimension_numbers = #tpu.dot_dimension_numbers<[1], [0], [0], [1], [0, 0, 1, 1], [], []>} : vector<6x8xf32>, vector<8x384xf32>, vector<6x384xf32> -> vector<6x384xf32>
    %c440 = arith.constant 440 : index
    %c0_91 = arith.constant 0 : index
    %249 = vector.load %arg4[%c440, %c0_91] : memref<632x40xf32, #tpu.memory_space<vmem>>, vector<8x8xf32>
    %cst_92 = arith.constant dense<0.000000e+00> : vector<8x384xf32>
    %250 = tpu.matmul %249, %246, %cst_92 {dimension_numbers = #tpu.dot_dimension_numbers<[1], [0], [0], [1], [0, 0, 1, 1], [], []>} : vector<8x8xf32>, vector<8x384xf32>, vector<8x384xf32> -> vector<8x384xf32>
    %251 = arith.addf %214, %250 : vector<8x384xf32>
    %c448 = arith.constant 448 : index
    %c0_93 = arith.constant 0 : index
    %252 = vector.load %arg4[%c448, %c0_93] : memref<632x40xf32, #tpu.memory_space<vmem>>, vector<8x1xf32>
    %253 = vector.broadcast %252 : vector<8x1xf32> to vector<8x384xf32>
    %254 = arith.addf %251, %253 : vector<8x384xf32>
    %cst_94 = arith.constant 0.000000e+00 : f32
    %255 = vector.shape_cast %9 : vector<1x384xi1> to vector<1x384xi1>
    %256 = vector.broadcast %255 : vector<1x384xi1> to vector<8x384xi1>
    %257 = vector.broadcast %cst_94 : f32 to vector<8x384xf32>
    %258 = arith.select %256, %254, %257 : vector<8x384xi1>, vector<8x384xf32>
    %c2_i32_95 = arith.constant 2 : i32
    %259 = tpu.dynamic_rotate %258 by %c2_i32_95 dim 1 : vector<8x384xf32>, i32 -> vector<8x384xf32>
    %c382_i32_96 = arith.constant 382 : i32
    %260 = tpu.dynamic_rotate %258 by %c382_i32_96 dim 1 : vector<8x384xf32>, i32 -> vector<8x384xf32>
    %c424 = arith.constant 424 : index
    %c0_97 = arith.constant 0 : index
    %261 = vector.load %arg4[%c424, %c0_97] : memref<632x40xf32, #tpu.memory_space<vmem>>, vector<16x24xf32>
    %262 = vector.extract_strided_slice %261 {offsets = [0, 0], sizes = [16, 8], strides = [1, 1]} : vector<16x24xf32> to vector<16x8xf32>
    %cst_98 = arith.constant dense<0.000000e+00> : vector<16x384xf32>
    %263 = tpu.matmul %262, %259, %cst_98 {dimension_numbers = #tpu.dot_dimension_numbers<[1], [0], [0], [1], [0, 0, 1, 1], [], []>} : vector<16x8xf32>, vector<8x384xf32>, vector<16x384xf32> -> vector<16x384xf32>
    %264 = vector.extract_strided_slice %261 {offsets = [0, 8], sizes = [16, 8], strides = [1, 1]} : vector<16x24xf32> to vector<16x8xf32>
    %cst_99 = arith.constant dense<0.000000e+00> : vector<16x384xf32>
    %265 = tpu.matmul %264, %258, %cst_99 {dimension_numbers = #tpu.dot_dimension_numbers<[1], [0], [0], [1], [0, 0, 1, 1], [], []>} : vector<16x8xf32>, vector<8x384xf32>, vector<16x384xf32> -> vector<16x384xf32>
    %266 = arith.addf %263, %265 : vector<16x384xf32>
    %267 = vector.extract_strided_slice %261 {offsets = [0, 16], sizes = [16, 8], strides = [1, 1]} : vector<16x24xf32> to vector<16x8xf32>
    %cst_100 = arith.constant dense<0.000000e+00> : vector<16x384xf32>
    %268 = tpu.matmul %267, %260, %cst_100 {dimension_numbers = #tpu.dot_dimension_numbers<[1], [0], [0], [1], [0, 0, 1, 1], [], []>} : vector<16x8xf32>, vector<8x384xf32>, vector<16x384xf32> -> vector<16x384xf32>
    %269 = arith.addf %266, %268 : vector<16x384xf32>
    %270 = vector.extract_strided_slice %220 {offsets = [16, 0], sizes = [16, 384], strides = [1, 1]} : vector<32x384xf32> to vector<16x384xf32>
    %271 = arith.addf %269, %270 : vector<16x384xf32>
    %272 = vector.extract_strided_slice %271 {offsets = [0, 0], sizes = [8, 384], strides = [1, 1]} : vector<16x384xf32> to vector<8x384xf32>
    %273 = math.tanh %272 : vector<8x384xf32>
    %274 = vector.extract_strided_slice %271 {offsets = [8, 0], sizes = [8, 384], strides = [1, 1]} : vector<16x384xf32> to vector<8x384xf32>
    %275 = arith.negf %274 : vector<8x384xf32>
    %276 = math.exp %275 : vector<8x384xf32>
    %cst_101 = arith.constant 1.000000e+00 : f32
    %277 = vector.broadcast %cst_101 : f32 to vector<8x384xf32>
    %278 = arith.addf %277, %276 : vector<8x384xf32>
    %279 = arith.divf %277, %278 : vector<8x384xf32>
    %280 = arith.mulf %273, %279 : vector<8x384xf32>
    %c462 = arith.constant 462 : index
    %c0_102 = arith.constant 0 : index
    %281 = vector.load %arg4[%c462, %c0_102] : memref<632x40xf32, #tpu.memory_space<vmem>>, vector<6x8xf32>
    %cst_103 = arith.constant dense<0.000000e+00> : vector<6x384xf32>
    %282 = tpu.matmul %281, %280, %cst_103 {dimension_numbers = #tpu.dot_dimension_numbers<[1], [0], [0], [1], [0, 0, 1, 1], [], []>} : vector<6x8xf32>, vector<8x384xf32>, vector<6x384xf32> -> vector<6x384xf32>
    %283 = arith.addf %248, %282 : vector<6x384xf32>
    %c468 = arith.constant 468 : index
    %c0_104 = arith.constant 0 : index
    %284 = vector.load %arg4[%c468, %c0_104] : memref<632x40xf32, #tpu.memory_space<vmem>>, vector<6x1xf32>
    %285 = vector.broadcast %284 : vector<6x1xf32> to vector<6x384xf32>
    %286 = arith.addf %283, %285 : vector<6x384xf32>
    %287 = vector.extract_strided_slice %286 {offsets = [0, 0], sizes = [3, 384], strides = [1, 1]} : vector<6x384xf32> to vector<3x384xf32>
    %288 = vector.extract_strided_slice %286 {offsets = [3, 0], sizes = [3, 384], strides = [1, 1]} : vector<6x384xf32> to vector<3x384xf32>
    %289 = vector.extract_strided_slice %288 {offsets = [0, 128], sizes = [3, 128], strides = [1, 1]} : vector<3x384xf32> to vector<3x128xf32>
    %c0_105 = arith.constant 0 : index
    %c0_106 = arith.constant 0 : index
    %c0_107 = arith.constant 0 : index
    %290 = vector.load %arg9[%c0_105, %c0_106, %c0_107] : memref<1x3x128xf32, #tpu.memory_space<vmem>>, vector<1x3x128xf32>
    %291 = vector.shape_cast %290 : vector<1x3x128xf32> to vector<3x128xf32>
    %292 = vector.shape_cast %289 : vector<3x128xf32> to vector<1x3x128xf32>
    tpu.vector_store %arg9[%c0_105, %c0_106, %c0_107], %292 {strides = array<i32>} : memref<1x3x128xf32, #tpu.memory_space<vmem>>, vector<1x3x128xf32>,
    %293 = math.exp %288 : vector<3x384xf32>
    %294 = arith.mulf %293, %210 : vector<3x384xf32>
    %295 = arith.addf %294, %287 : vector<3x384xf32>
    %296 = tpu.concatenate %209, %295 in 0 : vector<3x384xf32>, vector<3x384xf32> -> vector<6x384xf32>
    %cst_108 = arith.constant 0.000000e+00 : f32
    %297 = vector.shape_cast %9 : vector<1x384xi1> to vector<1x384xi1>
    %298 = vector.broadcast %297 : vector<1x384xi1> to vector<6x384xi1>
    %299 = vector.broadcast %cst_108 : f32 to vector<6x384xf32>
    %300 = arith.select %298, %296, %299 : vector<6x384xi1>, vector<6x384xf32>
    %c474 = arith.constant 474 : index
    %c0_109 = arith.constant 0 : index
    %301 = vector.load %arg4[%c474, %c0_109] : memref<632x40xf32, #tpu.memory_space<vmem>>, vector<16x6xf32>
    %cst_110 = arith.constant dense<0.000000e+00> : vector<16x384xf32>
    %302 = tpu.matmul %301, %300, %cst_110 {dimension_numbers = #tpu.dot_dimension_numbers<[1], [0], [0], [1], [0, 0, 1, 1], [], []>} : vector<16x6xf32>, vector<6x384xf32>, vector<16x384xf32> -> vector<16x384xf32>
    %303 = vector.extract_strided_slice %302 {offsets = [0, 0], sizes = [3, 384], strides = [1, 1]} : vector<16x384xf32> to vector<3x384xf32>
    %304 = vector.extract_strided_slice %302 {offsets = [3, 0], sizes = [3, 384], strides = [1, 1]} : vector<16x384xf32> to vector<3x384xf32>
    %305 = vector.extract_strided_slice %302 {offsets = [8, 0], sizes = [8, 384], strides = [1, 1]} : vector<16x384xf32> to vector<8x384xf32>
    %c490 = arith.constant 490 : index
    %c0_111 = arith.constant 0 : index
    %306 = vector.load %arg4[%c490, %c0_111] : memref<632x40xf32, #tpu.memory_space<vmem>>, vector<8x1xf32>
    %307 = vector.broadcast %306 : vector<8x1xf32> to vector<8x384xf32>
    %308 = arith.addf %305, %307 : vector<8x384xf32>
    %c498 = arith.constant 498 : index
    %c0_112 = arith.constant 0 : index
    %309 = vector.load %arg4[%c498, %c0_112] : memref<632x40xf32, #tpu.memory_space<vmem>>, vector<32x40xf32>
    %310 = arith.truncf %309 : vector<32x40xf32> to vector<32x40xbf16>
    %cst_113 = arith.constant dense<0.000000e+00> : vector<32x384xf32>
    %311 = tpu.matmul %310, %13, %cst_113 {dimension_numbers = #tpu.dot_dimension_numbers<[1], [0], [0], [1], [0, 0, 1, 1], [], []>} : vector<32x40xbf16>, vector<40x384xbf16>, vector<32x384xf32> -> vector<32x384xf32>
    %c530 = arith.constant 530 : index
    %c0_114 = arith.constant 0 : index
    %312 = vector.load %arg4[%c530, %c0_114] : memref<632x40xf32, #tpu.memory_space<vmem>>, vector<32x1xf32>
    %313 = vector.broadcast %312 : vector<32x1xf32> to vector<32x384xf32>
    %314 = arith.addf %311, %313 : vector<32x384xf32>
    %cst_115 = arith.constant 0.000000e+00 : f32
    %315 = vector.shape_cast %9 : vector<1x384xi1> to vector<1x384xi1>
    %316 = vector.broadcast %315 : vector<1x384xi1> to vector<8x384xi1>
    %317 = vector.broadcast %cst_115 : f32 to vector<8x384xf32>
    %318 = arith.select %316, %308, %317 : vector<8x384xi1>, vector<8x384xf32>
    %c1_i32_116 = arith.constant 1 : i32
    %319 = tpu.dynamic_rotate %318 by %c1_i32_116 dim 1 : vector<8x384xf32>, i32 -> vector<8x384xf32>
    %c383_i32_117 = arith.constant 383 : i32
    %320 = tpu.dynamic_rotate %318 by %c383_i32_117 dim 1 : vector<8x384xf32>, i32 -> vector<8x384xf32>
    %c562 = arith.constant 562 : index
    %c0_118 = arith.constant 0 : index
    %321 = vector.load %arg4[%c562, %c0_118] : memref<632x40xf32, #tpu.memory_space<vmem>>, vector<16x24xf32>
    %322 = vector.extract_strided_slice %321 {offsets = [0, 0], sizes = [16, 8], strides = [1, 1]} : vector<16x24xf32> to vector<16x8xf32>
    %cst_119 = arith.constant dense<0.000000e+00> : vector<16x384xf32>
    %323 = tpu.matmul %322, %319, %cst_119 {dimension_numbers = #tpu.dot_dimension_numbers<[1], [0], [0], [1], [0, 0, 1, 1], [], []>} : vector<16x8xf32>, vector<8x384xf32>, vector<16x384xf32> -> vector<16x384xf32>
    %324 = vector.extract_strided_slice %321 {offsets = [0, 8], sizes = [16, 8], strides = [1, 1]} : vector<16x24xf32> to vector<16x8xf32>
    %cst_120 = arith.constant dense<0.000000e+00> : vector<16x384xf32>
    %325 = tpu.matmul %324, %318, %cst_120 {dimension_numbers = #tpu.dot_dimension_numbers<[1], [0], [0], [1], [0, 0, 1, 1], [], []>} : vector<16x8xf32>, vector<8x384xf32>, vector<16x384xf32> -> vector<16x384xf32>
    %326 = arith.addf %323, %325 : vector<16x384xf32>
    %327 = vector.extract_strided_slice %321 {offsets = [0, 16], sizes = [16, 8], strides = [1, 1]} : vector<16x24xf32> to vector<16x8xf32>
    %cst_121 = arith.constant dense<0.000000e+00> : vector<16x384xf32>
    %328 = tpu.matmul %327, %320, %cst_121 {dimension_numbers = #tpu.dot_dimension_numbers<[1], [0], [0], [1], [0, 0, 1, 1], [], []>} : vector<16x8xf32>, vector<8x384xf32>, vector<16x384xf32> -> vector<16x384xf32>
    %329 = arith.addf %326, %328 : vector<16x384xf32>
    %330 = vector.extract_strided_slice %314 {offsets = [0, 0], sizes = [16, 384], strides = [1, 1]} : vector<32x384xf32> to vector<16x384xf32>
    %331 = arith.addf %329, %330 : vector<16x384xf32>
    %332 = vector.extract_strided_slice %331 {offsets = [0, 0], sizes = [8, 384], strides = [1, 1]} : vector<16x384xf32> to vector<8x384xf32>
    %333 = math.tanh %332 : vector<8x384xf32>
    %334 = vector.extract_strided_slice %331 {offsets = [8, 0], sizes = [8, 384], strides = [1, 1]} : vector<16x384xf32> to vector<8x384xf32>
    %335 = arith.negf %334 : vector<8x384xf32>
    %336 = math.exp %335 : vector<8x384xf32>
    %cst_122 = arith.constant 1.000000e+00 : f32
    %337 = vector.broadcast %cst_122 : f32 to vector<8x384xf32>
    %338 = arith.addf %337, %336 : vector<8x384xf32>
    %339 = arith.divf %337, %338 : vector<8x384xf32>
    %340 = arith.mulf %333, %339 : vector<8x384xf32>
    %c610 = arith.constant 610 : index
    %c0_123 = arith.constant 0 : index
    %341 = vector.load %arg4[%c610, %c0_123] : memref<632x40xf32, #tpu.memory_space<vmem>>, vector<6x8xf32>
    %cst_124 = arith.constant dense<0.000000e+00> : vector<6x384xf32>
    %342 = tpu.matmul %341, %340, %cst_124 {dimension_numbers = #tpu.dot_dimension_numbers<[1], [0], [0], [1], [0, 0, 1, 1], [], []>} : vector<6x8xf32>, vector<8x384xf32>, vector<6x384xf32> -> vector<6x384xf32>
    %c594 = arith.constant 594 : index
    %c0_125 = arith.constant 0 : index
    %343 = vector.load %arg4[%c594, %c0_125] : memref<632x40xf32, #tpu.memory_space<vmem>>, vector<8x8xf32>
    %cst_126 = arith.constant dense<0.000000e+00> : vector<8x384xf32>
    %344 = tpu.matmul %343, %340, %cst_126 {dimension_numbers = #tpu.dot_dimension_numbers<[1], [0], [0], [1], [0, 0, 1, 1], [], []>} : vector<8x8xf32>, vector<8x384xf32>, vector<8x384xf32> -> vector<8x384xf32>
    %345 = arith.addf %308, %344 : vector<8x384xf32>
    %c602 = arith.constant 602 : index
    %c0_127 = arith.constant 0 : index
    %346 = vector.load %arg4[%c602, %c0_127] : memref<632x40xf32, #tpu.memory_space<vmem>>, vector<8x1xf32>
    %347 = vector.broadcast %346 : vector<8x1xf32> to vector<8x384xf32>
    %348 = arith.addf %345, %347 : vector<8x384xf32>
    %cst_128 = arith.constant 0.000000e+00 : f32
    %349 = vector.shape_cast %9 : vector<1x384xi1> to vector<1x384xi1>
    %350 = vector.broadcast %349 : vector<1x384xi1> to vector<8x384xi1>
    %351 = vector.broadcast %cst_128 : f32 to vector<8x384xf32>
    %352 = arith.select %350, %348, %351 : vector<8x384xi1>, vector<8x384xf32>
    %c2_i32_129 = arith.constant 2 : i32
    %353 = tpu.dynamic_rotate %352 by %c2_i32_129 dim 1 : vector<8x384xf32>, i32 -> vector<8x384xf32>
    %c382_i32_130 = arith.constant 382 : i32
    %354 = tpu.dynamic_rotate %352 by %c382_i32_130 dim 1 : vector<8x384xf32>, i32 -> vector<8x384xf32>
    %c578 = arith.constant 578 : index
    %c0_131 = arith.constant 0 : index
    %355 = vector.load %arg4[%c578, %c0_131] : memref<632x40xf32, #tpu.memory_space<vmem>>, vector<16x24xf32>
    %356 = vector.extract_strided_slice %355 {offsets = [0, 0], sizes = [16, 8], strides = [1, 1]} : vector<16x24xf32> to vector<16x8xf32>
    %cst_132 = arith.constant dense<0.000000e+00> : vector<16x384xf32>
    %357 = tpu.matmul %356, %353, %cst_132 {dimension_numbers = #tpu.dot_dimension_numbers<[1], [0], [0], [1], [0, 0, 1, 1], [], []>} : vector<16x8xf32>, vector<8x384xf32>, vector<16x384xf32> -> vector<16x384xf32>
    %358 = vector.extract_strided_slice %355 {offsets = [0, 8], sizes = [16, 8], strides = [1, 1]} : vector<16x24xf32> to vector<16x8xf32>
    %cst_133 = arith.constant dense<0.000000e+00> : vector<16x384xf32>
    %359 = tpu.matmul %358, %352, %cst_133 {dimension_numbers = #tpu.dot_dimension_numbers<[1], [0], [0], [1], [0, 0, 1, 1], [], []>} : vector<16x8xf32>, vector<8x384xf32>, vector<16x384xf32> -> vector<16x384xf32>
    %360 = arith.addf %357, %359 : vector<16x384xf32>
    %361 = vector.extract_strided_slice %355 {offsets = [0, 16], sizes = [16, 8], strides = [1, 1]} : vector<16x24xf32> to vector<16x8xf32>
    %cst_134 = arith.constant dense<0.000000e+00> : vector<16x384xf32>
    %362 = tpu.matmul %361, %354, %cst_134 {dimension_numbers = #tpu.dot_dimension_numbers<[1], [0], [0], [1], [0, 0, 1, 1], [], []>} : vector<16x8xf32>, vector<8x384xf32>, vector<16x384xf32> -> vector<16x384xf32>
    %363 = arith.addf %360, %362 : vector<16x384xf32>
    %364 = vector.extract_strided_slice %314 {offsets = [16, 0], sizes = [16, 384], strides = [1, 1]} : vector<32x384xf32> to vector<16x384xf32>
    %365 = arith.addf %363, %364 : vector<16x384xf32>
    %366 = vector.extract_strided_slice %365 {offsets = [0, 0], sizes = [8, 384], strides = [1, 1]} : vector<16x384xf32> to vector<8x384xf32>
    %367 = math.tanh %366 : vector<8x384xf32>
    %368 = vector.extract_strided_slice %365 {offsets = [8, 0], sizes = [8, 384], strides = [1, 1]} : vector<16x384xf32> to vector<8x384xf32>
    %369 = arith.negf %368 : vector<8x384xf32>
    %370 = math.exp %369 : vector<8x384xf32>
    %cst_135 = arith.constant 1.000000e+00 : f32
    %371 = vector.broadcast %cst_135 : f32 to vector<8x384xf32>
    %372 = arith.addf %371, %370 : vector<8x384xf32>
    %373 = arith.divf %371, %372 : vector<8x384xf32>
    %374 = arith.mulf %367, %373 : vector<8x384xf32>
    %c616 = arith.constant 616 : index
    %c0_136 = arith.constant 0 : index
    %375 = vector.load %arg4[%c616, %c0_136] : memref<632x40xf32, #tpu.memory_space<vmem>>, vector<6x8xf32>
    %cst_137 = arith.constant dense<0.000000e+00> : vector<6x384xf32>
    %376 = tpu.matmul %375, %374, %cst_137 {dimension_numbers = #tpu.dot_dimension_numbers<[1], [0], [0], [1], [0, 0, 1, 1], [], []>} : vector<6x8xf32>, vector<8x384xf32>, vector<6x384xf32> -> vector<6x384xf32>
    %377 = arith.addf %342, %376 : vector<6x384xf32>
    %c622 = arith.constant 622 : index
    %c0_138 = arith.constant 0 : index
    %378 = vector.load %arg4[%c622, %c0_138] : memref<632x40xf32, #tpu.memory_space<vmem>>, vector<6x1xf32>
    %379 = vector.broadcast %378 : vector<6x1xf32> to vector<6x384xf32>
    %380 = arith.addf %377, %379 : vector<6x384xf32>
    %381 = vector.extract_strided_slice %380 {offsets = [0, 0], sizes = [3, 384], strides = [1, 1]} : vector<6x384xf32> to vector<3x384xf32>
    %382 = vector.extract_strided_slice %380 {offsets = [3, 0], sizes = [3, 384], strides = [1, 1]} : vector<6x384xf32> to vector<3x384xf32>
    %383 = vector.extract_strided_slice %382 {offsets = [0, 128], sizes = [3, 128], strides = [1, 1]} : vector<3x384xf32> to vector<3x128xf32>
    %c0_139 = arith.constant 0 : index
    %c0_140 = arith.constant 0 : index
    %c0_141 = arith.constant 0 : index
    %384 = vector.load %arg10[%c0_139, %c0_140, %c0_141] : memref<1x3x128xf32, #tpu.memory_space<vmem>>, vector<1x3x128xf32>
    %385 = vector.shape_cast %384 : vector<1x3x128xf32> to vector<3x128xf32>
    %386 = vector.shape_cast %383 : vector<3x128xf32> to vector<1x3x128xf32>
    tpu.vector_store %arg10[%c0_139, %c0_140, %c0_141], %386 {strides = array<i32>} : memref<1x3x128xf32, #tpu.memory_space<vmem>>, vector<1x3x128xf32>,
    %387 = math.exp %382 : vector<3x384xf32>
    %388 = arith.mulf %387, %304 : vector<3x384xf32>
    %389 = arith.addf %388, %381 : vector<3x384xf32>
    %390 = vector.extract_strided_slice %303 {offsets = [0, 128], sizes = [3, 128], strides = [1, 1]} : vector<3x384xf32> to vector<3x128xf32>
    %c0_142 = arith.constant 0 : index
    %c0_143 = arith.constant 0 : index
    %c0_144 = arith.constant 0 : index
    %391 = vector.load %arg6[%c0_142, %c0_143, %c0_144] : memref<1x6x128xf32, #tpu.memory_space<vmem>>, vector<1x3x128xf32>
    %392 = vector.shape_cast %391 : vector<1x3x128xf32> to vector<3x128xf32>
    %393 = vector.shape_cast %390 : vector<3x128xf32> to vector<1x3x128xf32>
    tpu.vector_store %arg6[%c0_142, %c0_143, %c0_144], %393 {strides = array<i32>} : memref<1x6x128xf32, #tpu.memory_space<vmem>>, vector<1x3x128xf32>,
    %394 = vector.extract_strided_slice %389 {offsets = [0, 128], sizes = [3, 128], strides = [1, 1]} : vector<3x384xf32> to vector<3x128xf32>
    %c0_145 = arith.constant 0 : index
    %c3 = arith.constant 3 : index
    %c0_146 = arith.constant 0 : index
    %395 = vector.load %arg6[%c0_145, %c3, %c0_146] : memref<1x6x128xf32, #tpu.memory_space<vmem>>, vector<1x3x128xf32>
    %396 = vector.shape_cast %395 : vector<1x3x128xf32> to vector<3x128xf32>
    %397 = vector.shape_cast %394 : vector<3x128xf32> to vector<1x3x128xf32>
    tpu.vector_store %arg6[%c0_145, %c3, %c0_146], %397 {strides = array<i32>} : memref<1x6x128xf32, #tpu.memory_space<vmem>>, vector<1x3x128xf32>,
    return
  }
  func.func @transform_0(%arg0: i32, %arg1: i32) -> (i32, i32, i32, i32) {
    %c0_i32 = arith.constant 0 : i32
    %c0_i32_0 = arith.constant 0 : i32
    %c0_i32_1 = arith.constant 0 : i32
    return %arg0, %arg1, %c0_i32, %c0_i32_0 : i32, i32, i32, i32
  }
  func.func @transform_1(%arg0: i32, %arg1: i32) -> (i32, i32, i32, i32) {
    %c0_i32 = arith.constant 0 : i32
    %c0_i32_0 = arith.constant 0 : i32
    %c0_i32_1 = arith.constant 0 : i32
    return %arg0, %arg1, %c0_i32, %c0_i32_0 : i32, i32, i32, i32
  }
  func.func @transform_2(%arg0: i32, %arg1: i32) -> (i32, i32) {
    %c0_i32 = arith.constant 0 : i32
    %c0_i32_0 = arith.constant 0 : i32
    %c0_i32_1 = arith.constant 0 : i32
    return %c0_i32, %c0_i32_0 : i32, i32
  }
  func.func @transform_3(%arg0: i32, %arg1: i32) -> (i32, i32, i32) {
    %c0_i32 = arith.constant 0 : i32
    %c0_i32_0 = arith.constant 0 : i32
    return %arg0, %c0_i32, %arg1 : i32, i32, i32
  }
  func.func @transform_4(%arg0: i32, %arg1: i32) -> (i32, i32, i32) {
    %c0_i32 = arith.constant 0 : i32
    %c0_i32_0 = arith.constant 0 : i32
    return %arg0, %c0_i32, %arg1 : i32, i32, i32
  }
  func.func @transform_5(%arg0: i32, %arg1: i32) -> (i32, i32, i32) {
    %c0_i32 = arith.constant 0 : i32
    %c0_i32_0 = arith.constant 0 : i32
    return %arg0, %c0_i32, %arg1 : i32, i32, i32
  }
  func.func @transform_6(%arg0: i32, %arg1: i32) -> (i32, i32, i32) {
    %c0_i32 = arith.constant 0 : i32
    %c0_i32_0 = arith.constant 0 : i32
    return %arg0, %c0_i32, %arg1 : i32, i32, i32
  }
  func.func @transform_7(%arg0: i32, %arg1: i32) -> (i32, i32, i32) {
    %c0_i32 = arith.constant 0 : i32
    %c0_i32_0 = arith.constant 0 : i32
    return %arg0, %c0_i32, %arg1 : i32, i32, i32
  }
  func.func @transform_8(%arg0: i32, %arg1: i32) -> (i32, i32, i32) {
    %c0_i32 = arith.constant 0 : i32
    %c0_i32_0 = arith.constant 0 : i32
    return %arg0, %c0_i32, %arg1 : i32, i32, i32
  }
}

</mosaic_0001>

<llo_original>
// kernel: waveglow_forward.1
$region0: #{waveglow_forward.1}
  #allocation0 [shape = 'u32[]', space=smem, size = 0x4, offset = 0x4, fixed_abs, tag = 'smem constant byte address 0x4 - core index']
  #allocation1 [shape = 'u32[72,128]{1,0:T(1,128)}', space=vmem, size = 0x9000, scoped, tag = 'internal scratch']
  %s0 = inlined_call_operand.vmem [shape: f32[2,1,8,384], index: 0, kind: input, shape index: {}]
  %s1 = inlined_call_operand.vmem [shape: bf16[2,1,40,384], index: 1, kind: input, shape index: {}]
  %s2 = inlined_call_operand.vmem [shape: f32[632,40], index: 2, kind: input, shape index: {}]
  %s3 = inlined_call_operand.vmem [shape: f32[2,2,128], index: 3, kind: output, shape index: {0}]
  %s4 = inlined_call_operand.vmem [shape: f32[2,6,128], index: 4, kind: output, shape index: {1}]
  %s5 = inlined_call_operand.hbm [shape: f32[2,4,128], index: 5, kind: output, shape index: {2}]
  %s6 = inlined_call_operand.hbm [shape: f32[2,4,128], index: 6, kind: output, shape index: {3}]
  %s7 = inlined_call_operand.vmem [shape: f32[2,3,128], index: 7, kind: output, shape index: {4}]
  %s8 = inlined_call_operand.vmem [shape: f32[2,3,128], index: 8, kind: output, shape index: {5}]
  %9 = xla_tuple %s3, %s4, %s5, %s6, %s7, %s8
  %s10 = sld [smem:[#allocation0]]
  $region85: #{waveglow_forward.1} parent=0
    _
  %s12 = ssub.s32 1, %s10
  %s13 = scalar_select 0, %s12, %s10
  $region1: #{waveglow_forward.1} parent=0
    #allocation2 [shape = 'u8[4096]{0}', space=vmem, size = 0x1000, scoped, tag = 'output window, operand 2']
    #allocation3 [shape = 's32[2]{0}', space=sflag, size = 0x8, scoped, tag = 'scoped memory for waveglow_forward.1']
    #allocation4 [shape = 'u8[4096]{0}', space=vmem, size = 0x1000, scoped, tag = 'output window, operand 3']
    #allocation5 [shape = 's32[2]{0}', space=sflag, size = 0x8, scoped, tag = 'scoped memory for waveglow_forward.1']
    %14 = vsyncpa [#allocation3], 0
    %s15 = scalar_lea.sflag [#allocation3], 1
    %16 = vsyncpa %s15, 0
    %17 = vsyncpa [#allocation5], 0
    %s18 = scalar_lea.sflag [#allocation5], 1
    %19 = vsyncpa %s18, 0
    loop: start=0, step=1, limit=4
    $region2: #{waveglow_forward.1} parent=1 // loop_pre_header
      _
    $region3: #{waveglow_forward.1} parent=1 // loop_header
      %s21 = sphi 0, %s25
      %p22 = scmp.ge.s32.totalorder %s21, 4
      %s28 = sphi 0, %s40
      %s29 = sphi 0, %s36
      %s30 = sphi 0, %s28
      %s31 = sphi 0, %s29
      %s32 = sphi 0, %s30
      %s33 = sphi 0, %s31
      %s45 = sphi 0, %s47
      %s48 = sphi 0, %s45
      %s49 = sphi 0, %s48
      %s65 = sphi 0, %s49
      %s73 = sphi 0, %s75
      %s76 = sphi 0, %s73
      %s77 = sphi 0, %s76
      %s93 = sphi 0, %s77
      %s97 = sphi 0, %s97
      %s99 = sphi 0, %s97
      %s100 = sphi 0, %s99
      %s114 = sphi 0, %s100
      %s122 = sphi 0, %s124
      %s125 = sphi 0, %s122
      %s126 = sphi 0, %s125
      %s142 = sphi 0, %s126
      %s150 = sphi 0, %s152
      %s153 = sphi 0, %s150
      %s154 = sphi 0, %s153
      %s170 = sphi 0, %s154
      %s178 = sphi 0, %s180
      %s181 = sphi 0, %s178
      %s182 = sphi 0, %s181
      %s198 = sphi 0, %s182
      %s206 = sphi 0, %s208
      %s209 = sphi 0, %s206
      %s210 = sphi 0, %s209
      %s226 = sphi 0, %s210
      %s234 = sphi 0, %s236
      %s237 = sphi 0, %s234
      %s238 = sphi 0, %s237
      %s254 = sphi 0, %s238
      %s262 = sphi 0, %s264
      %s265 = sphi 0, %s262
      %s266 = sphi 0, %s265
      %s282 = sphi 0, %s266
    $region4: #{waveglow_forward.1} parent=1 // loop_header_branch
      %24 = sbr.rel (%p22) target = $region8
    $region5: #{waveglow_forward.1} parent=1 // loop_body
      %s26 = ssub.s32 %s21, 1
      %s27 = ssub.s32 %s21, 2
      %s34 = sadd.s32 1, %s29
      %p35 = scmp.ge.s32.totalorder %s34, 1
      %s36 = scalar_select %p35, 0, %s34
      %s37 = sadd.s32 1, %s28
      %s38 = scalar_select %p35, %s37, %s28
      %p39 = scmp.ge.s32.totalorder %s38, 2
      %s40 = scalar_select %p39, 0, %s38
      %s41 = ssub.s32 %s28, %s40
      %s42 = ssub.s32 %s29, %s36
      %s43 = sor.u32 %s41, %s42
      %p44 = scmp.eq.s32.totalorder %s43, 0
      %s46 = sadd.s32 %s45, 1
      %s47 = scalar_select %p44, %s45, %s46
      %p50 = pneg %p44
      %p51 = scmp.eq.s32.totalorder %s21, 1
      %p52 = por %p50, %p51
      %p53 = scmp.ne.s32.totalorder %s45, %s48
      %p54 = scmp.eq.s32.totalorder %s21, 0
      %p55 = por %p53, %p54
      %p56 = scmp.ne.s32.totalorder %s45, %s48
      %p57 = scmp.eq.s32.totalorder %s26, 1
      %p58 = por %p56, %p57
      %p59 = scmp.ne.s32.totalorder %s48, %s49
      %p60 = scmp.eq.s32.totalorder %s26, 0
      %p61 = por %p59, %p60
      %p62 = scmp.ne.s32.totalorder %s48, %s49
      %p63 = scmp.eq.s32.totalorder %s27, 1
      %p64 = por %p62, %p63
      %p66 = scmp.ne.s32.totalorder %s49, %s65
      %p67 = scmp.eq.s32.totalorder %s27, 0
      %p68 = por %p66, %p67
      %s69 = ssub.s32 %s28, %s40
      %s70 = ssub.s32 %s29, %s36
      %s71 = sor.u32 %s69, %s70
      %p72 = scmp.eq.s32.totalorder %s71, 0
      %s74 = sadd.s32 %s73, 1
      %s75 = scalar_select %p72, %s73, %s74
      %p78 = pneg %p72
      %p79 = scmp.eq.s32.totalorder %s21, 1
      %p80 = por %p78, %p79
      %p81 = scmp.ne.s32.totalorder %s73, %s76
      %p82 = scmp.eq.s32.totalorder %s21, 0
      %p83 = por %p81, %p82
      %p84 = scmp.ne.s32.totalorder %s73, %s76
      %p85 = scmp.eq.s32.totalorder %s26, 1
      %p86 = por %p84, %p85
      %p87 = scmp.ne.s32.totalorder %s76, %s77
      %p88 = scmp.eq.s32.totalorder %s26, 0
      %p89 = por %p87, %p88
      %p90 = scmp.ne.s32.totalorder %s76, %s77
      %p91 = scmp.eq.s32.totalorder %s27, 1
      %p92 = por %p90, %p91
      %p94 = scmp.ne.s32.totalorder %s77, %s93
      %p95 = scmp.eq.s32.totalorder %s27, 0
      %p96 = por %p94, %p95
      %s98 = sadd.s32 %s97, 1
      %p101 = scmp.eq.s32.totalorder %s21, 1
      %p102 = scmp.ne.s32.totalorder %s97, %s99
      %p103 = scmp.eq.s32.totalorder %s21, 0
      %p104 = por %p102, %p103
      %p105 = scmp.ne.s32.totalorder %s97, %s99
      %p106 = scmp.eq.s32.totalorder %s26, 1
      %p107 = por %p105, %p106
      %p108 = scmp.ne.s32.totalorder %s99, %s100
      %p109 = scmp.eq.s32.totalorder %s26, 0
      %p110 = por %p108, %p109
      %p111 = scmp.ne.s32.totalorder %s99, %s100
      %p112 = scmp.eq.s32.totalorder %s27, 1
      %p113 = por %p111, %p112
      %p115 = scmp.ne.s32.totalorder %s100, %s114
      %p116 = scmp.eq.s32.totalorder %s27, 0
      %p117 = por %p115, %p116
      %s118 = ssub.s32 %s28, %s40
      %s119 = ssub.s32 %s29, %s36
      %s120 = sor.u32 %s118, %s119
      %p121 = scmp.eq.s32.totalorder %s120, 0
      %s123 = sadd.s32 %s122, 1
      %s124 = scalar_select %p121, %s122, %s123
      %p127 = pneg %p121
      %p128 = scmp.eq.s32.totalorder %s21, 1
      %p129 = por %p127, %p128
      %p130 = scmp.ne.s32.totalorder %s122, %s125
      %p131 = scmp.eq.s32.totalorder %s21, 0
      %p132 = por %p130, %p131
      %p133 = scmp.ne.s32.totalorder %s122, %s125
      %p134 = scmp.eq.s32.totalorder %s26, 1
      %p135 = por %p133, %p134
      %p136 = scmp.ne.s32.totalorder %s125, %s126
      %p137 = scmp.eq.s32.totalorder %s26, 0
      %p138 = por %p136, %p137
      %p139 = scmp.ne.s32.totalorder %s125, %s126
      %p140 = scmp.eq.s32.totalorder %s27, 1
      %p141 = por %p139, %p140
      %p143 = scmp.ne.s32.totalorder %s126, %s142
      %p144 = scmp.eq.s32.totalorder %s27, 0
      %p145 = por %p143, %p144
      %s146 = ssub.s32 %s28, %s40
      %s147 = ssub.s32 %s29, %s36
      %s148 = sor.u32 %s146, %s147
      %p149 = scmp.eq.s32.totalorder %s148, 0
      %s151 = sadd.s32 %s150, 1
      %s152 = scalar_select %p149, %s150, %s151
      %p155 = pneg %p149
      %p156 = scmp.eq.s32.totalorder %s21, 1
      %p157 = por %p155, %p156
      %p158 = scmp.ne.s32.totalorder %s150, %s153
      %p159 = scmp.eq.s32.totalorder %s21, 0
      %p160 = por %p158, %p159
      %p161 = scmp.ne.s32.totalorder %s150, %s153
      %p162 = scmp.eq.s32.totalorder %s26, 1
      %p163 = por %p161, %p162
      %p164 = scmp.ne.s32.totalorder %s153, %s154
      %p165 = scmp.eq.s32.totalorder %s26, 0
      %p166 = por %p164, %p165
      %p167 = scmp.ne.s32.totalorder %s153, %s154
      %p168 = scmp.eq.s32.totalorder %s27, 1
      %p169 = por %p167, %p168
      %p171 = scmp.ne.s32.totalorder %s154, %s170
      %p172 = scmp.eq.s32.totalorder %s27, 0
      %p173 = por %p171, %p172
      %s174 = ssub.s32 %s28, %s40
      %s175 = ssub.s32 %s29, %s36
      %s176 = sor.u32 %s174, %s175
      %p177 = scmp.eq.s32.totalorder %s176, 0
      %s179 = sadd.s32 %s178, 1
      %s180 = scalar_select %p177, %s178, %s179
      %p183 = pneg %p177
      %p184 = scmp.eq.s32.totalorder %s21, 1
      %p185 = por %p183, %p184
      %p186 = scmp.ne.s32.totalorder %s178, %s181
      %p187 = scmp.eq.s32.totalorder %s21, 0
      %p188 = por %p186, %p187
      %p189 = scmp.ne.s32.totalorder %s178, %s181
      %p190 = scmp.eq.s32.totalorder %s26, 1
      %p191 = por %p189, %p190
      %p192 = scmp.ne.s32.totalorder %s181, %s182
      %p193 = scmp.eq.s32.totalorder %s26, 0
      %p194 = por %p192, %p193
      %p195 = scmp.ne.s32.totalorder %s181, %s182
      %p196 = scmp.eq.s32.totalorder %s27, 1
      %p197 = por %p195, %p196
      %p199 = scmp.ne.s32.totalorder %s182, %s198
      %p200 = scmp.eq.s32.totalorder %s27, 0
      %p201 = por %p199, %p200
      %s202 = ssub.s32 %s28, %s40
      %s203 = ssub.s32 %s29, %s36
      %s204 = sor.u32 %s202, %s203
      %p205 = scmp.eq.s32.totalorder %s204, 0
      %s207 = sadd.s32 %s206, 1
      %s208 = scalar_select %p205, %s206, %s207
      %p211 = pneg %p205
      %p212 = scmp.eq.s32.totalorder %s21, 1
      %p213 = por %p211, %p212
      %p214 = scmp.ne.s32.totalorder %s206, %s209
      %p215 = scmp.eq.s32.totalorder %s21, 0
      %p216 = por %p214, %p215
      %p217 = scmp.ne.s32.totalorder %s206, %s209
      %p218 = scmp.eq.s32.totalorder %s26, 1
      %p219 = por %p217, %p218
      %p220 = scmp.ne.s32.totalorder %s209, %s210
      %p221 = scmp.eq.s32.totalorder %s26, 0
      %p222 = por %p220, %p221
      %p223 = scmp.ne.s32.totalorder %s209, %s210
      %p224 = scmp.eq.s32.totalorder %s27, 1
      %p225 = por %p223, %p224
      %p227 = scmp.ne.s32.totalorder %s210, %s226
      %p228 = scmp.eq.s32.totalorder %s27, 0
      %p229 = por %p227, %p228
      %s230 = ssub.s32 %s28, %s40
      %s231 = ssub.s32 %s29, %s36
      %s232 = sor.u32 %s230, %s231
      %p233 = scmp.eq.s32.totalorder %s232, 0
      %s235 = sadd.s32 %s234, 1
      %s236 = scalar_select %p233, %s234, %s235
      %p239 = pneg %p233
      %p240 = scmp.eq.s32.totalorder %s21, 1
      %p241 = por %p239, %p240
      %p242 = scmp.ne.s32.totalorder %s234, %s237
      %p243 = scmp.eq.s32.totalorder %s21, 0
      %p244 = por %p242, %p243
      %p245 = scmp.ne.s32.totalorder %s234, %s237
      %p246 = scmp.eq.s32.totalorder %s26, 1
      %p247 = por %p245, %p246
      %p248 = scmp.ne.s32.totalorder %s237, %s238
      %p249 = scmp.eq.s32.totalorder %s26, 0
      %p250 = por %p248, %p249
      %p251 = scmp.ne.s32.totalorder %s237, %s238
      %p252 = scmp.eq.s32.totalorder %s27, 1
      %p253 = por %p251, %p252
      %p255 = scmp.ne.s32.totalorder %s238, %s254
      %p256 = scmp.eq.s32.totalorder %s27, 0
      %p257 = por %p255, %p256
      %s258 = ssub.s32 %s28, %s40
      %s259 = ssub.s32 %s29, %s36
      %s260 = sor.u32 %s258, %s259
      %p261 = scmp.eq.s32.totalorder %s260, 0
      %s263 = sadd.s32 %s262, 1
      %s264 = scalar_select %p261, %s262, %s263
      %p267 = pneg %p261
      %p268 = scmp.eq.s32.totalorder %s21, 1
      %p269 = por %p267, %p268
      %p270 = scmp.ne.s32.totalorder %s262, %s265
      %p271 = scmp.eq.s32.totalorder %s21, 0
      %p272 = por %p270, %p271
      %p273 = scmp.ne.s32.totalorder %s262, %s265
      %p274 = scmp.eq.s32.totalorder %s26, 1
      %p275 = por %p273, %p274
      %p276 = scmp.ne.s32.totalorder %s265, %s266
      %p277 = scmp.eq.s32.totalorder %s26, 0
      %p278 = por %p276, %p277
      %p279 = scmp.ne.s32.totalorder %s265, %s266
      %p280 = scmp.eq.s32.totalorder %s27, 1
      %p281 = por %p279, %p280
      %p283 = scmp.ne.s32.totalorder %s266, %s282
      %p284 = scmp.eq.s32.totalorder %s27, 0
      %p285 = por %p283, %p284
      %p286 = scmp.le.s32.totalorder 1, %s21
      %p287 = scmp.lt.s32.totalorder %s21, 3
      %p288 = pnand %p286, %p287
      %p289 = pneg %p288
      // Predicated region
      $region9: #{waveglow_forward.1} parent=5 // pred_check
        _
      $region10: #{waveglow_forward.1} parent=5 // pred_check_branch
        %291 = sbr.rel (%p288) target = $region12
      $region11: #{waveglow_forward.1} parent=5 // pred_region
        %s292 = ssub.s32 %s21, 1
        // Predicated region
        $region13: #{waveglow_forward.1} parent=11 // pred_check
          %p293 = pneg %p110
        $region14: #{waveglow_forward.1} parent=11 // pred_check_branch
          %295 = sbr.rel (%p293) target = $region16
        $region15: #{waveglow_forward.1} parent=11 // pred_region
          _
        $region16: #{waveglow_forward.1} parent=11 // pred_fallthru
          _
      $region12: #{waveglow_forward.1} parent=5 // pred_fallthru
        _
      %p296 = scmp.lt.s32.totalorder %s21, 2
      // Predicated region
      $region17: #{waveglow_forward.1} parent=5 // pred_check
        %p297 = pneg %p296
      $region18: #{waveglow_forward.1} parent=5 // pred_check_branch
        %299 = sbr.rel (%p297) target = $region20
      $region19: #{waveglow_forward.1} parent=5 // pred_region
        // Predicated region
        $region21: #{waveglow_forward.1} parent=19 // pred_check
          %p300 = pneg %p55
        $region22: #{waveglow_forward.1} parent=19 // pred_check_branch
          %302 = sbr.rel (%p300) target = $region24
        $region23: #{waveglow_forward.1} parent=19 // pred_region
          %p303 = scmp.lt.s32.totalorder %s28, 1
          %s304 = scalar_select %p303, %s28, 1
          %p305 = scmp.lt.s32.totalorder %s29, 0
          %s306 = scalar_select %p305, %s29, 0
          %s307 = smul.addr %s306, 3
          %s308 = smul.addr %s304, 3
          %s309 = sadd.s32 %s307, %s308
          %s310 = smul.addr %s309, 8
          %s311 = scalar_lea.vmem %s0, %s310
        $region24: #{waveglow_forward.1} parent=19 // pred_fallthru
          _
        // Predicated region
        $region25: #{waveglow_forward.1} parent=19 // pred_check
          %p312 = pneg %p83
        $region26: #{waveglow_forward.1} parent=19 // pred_check_branch
          %314 = sbr.rel (%p312) target = $region28
        $region27: #{waveglow_forward.1} parent=19 // pred_region
          %p315 = scmp.lt.s32.totalorder %s28, 1
          %s316 = scalar_select %p315, %s28, 1
          %p317 = scmp.lt.s32.totalorder %s29, 0
          %s318 = scalar_select %p317, %s29, 0
          %s319 = smul.addr %s318, 15
          %s320 = smul.addr %s316, 15
          %s321 = sadd.s32 %s319, %s320
          %s322 = smul.addr %s321, 4
          %s323 = scalar_lea.vmem %s1, %s322
        $region28: #{waveglow_forward.1} parent=19 // pred_fallthru
          _
      $region20: #{waveglow_forward.1} parent=5 // pred_fallthru
        _
      %p324 = scmp.le.s32.totalorder 1, %s21
      %p325 = scmp.lt.s32.totalorder %s21, 3
      %p326 = pnand %p324, %p325
      %p327 = pneg %p326
      // Predicated region
      $region29: #{waveglow_forward.1} parent=5 // pred_check
        _
      $region30: #{waveglow_forward.1} parent=5 // pred_check_branch
        %329 = sbr.rel (%p326) target = $region32
      $region31: #{waveglow_forward.1} parent=5 // pred_region
        %s330 = ssub.s32 %s21, 1
        %p331 = scmp.lt.s32.totalorder %s30, 1
        %s332 = scalar_select %p331, %s30, 1
        %p333 = scmp.lt.s32.totalorder %s31, 0
        %s334 = scalar_select %p333, %s31, 0
        %s335 = smul.addr %s334, 3
        %s336 = smul.addr %s332, 3
        %s337 = sadd.s32 %s335, %s336
        %s338 = smul.addr %s337, 8
        %s339 = scalar_lea.vmem %s0, %s338
        %p340 = pneg %p61
        %p341 = pneg %p58
        %p342 = scmp.lt.s32.totalorder %s30, 1
        %s343 = scalar_select %p342, %s30, 1
        %p344 = scmp.lt.s32.totalorder %s31, 0
        %s345 = scalar_select %p344, %s31, 0
        %s346 = smul.addr %s345, 15
        %s347 = smul.addr %s343, 15
        %s348 = sadd.s32 %s346, %s347
        %s349 = smul.addr %s348, 4
        %s350 = scalar_lea.vmem %s1, %s349
        %p351 = pneg %p89
        %p352 = pneg %p86
        %p353 = pneg %p110
        %p354 = pneg %p107
        %p355 = pneg %p138
        %p356 = pneg %p135
        %p357 = scmp.lt.s32.totalorder %s30, 1
        %s358 = scalar_select %p357, %s30, 1
        %p359 = scmp.lt.s32.totalorder %s31, 0
        %s360 = scalar_select %p359, %s31, 0
        %s361 = sadd.s32 %s360, %s358
        %s362 = smul.addr %s361, 2
        %s363 = scalar_lea.vmem %s3, %s362
        %p364 = pneg %p166
        %p365 = pneg %p163
        %p366 = scmp.lt.s32.totalorder %s30, 1
        %s367 = scalar_select %p366, %s30, 1
        %p368 = scmp.lt.s32.totalorder %s31, 0
        %s369 = scalar_select %p368, %s31, 0
        %s370 = sadd.s32 %s369, %s367
        %s371 = smul.addr %s370, 8
        %s372 = scalar_lea.vmem %s4, %s371
        %p373 = pneg %p194
        %p374 = pneg %p191
        %s375 = sand.u32 %s181, 1
        %s376 = scalar_lea.sflag [#allocation3], %s375
        %s377 = sand.u32 %s181, 1
        %s378 = smul.addr %s377, 4
        %s379 = scalar_lea.vmem [#allocation2], %s378
        %p380 = pneg %p222
        %p381 = pneg %p219
        %s382 = sand.u32 %s209, 1
        %s383 = scalar_lea.sflag [#allocation5], %s382
        %s384 = sand.u32 %s209, 1
        %s385 = smul.addr %s384, 4
        %s386 = scalar_lea.vmem [#allocation4], %s385
        %p387 = pneg %p250
        %p388 = pneg %p247
        %p389 = scmp.lt.s32.totalorder %s30, 1
        %s390 = scalar_select %p389, %s30, 1
        %p391 = scmp.lt.s32.totalorder %s31, 0
        %s392 = scalar_select %p391, %s31, 0
        %s393 = sadd.s32 %s392, %s390
        %s394 = smul.addr %s393, 4
        %s395 = scalar_lea.vmem %s7, %s394
        %p396 = pneg %p278
        %p397 = pneg %p275
        %p398 = scmp.lt.s32.totalorder %s30, 1
        %s399 = scalar_select %p398, %s30, 1
        %p400 = scmp.lt.s32.totalorder %s31, 0
        %s401 = scalar_select %p400, %s31, 0
        %s402 = sadd.s32 %s401, %s399
        %s403 = smul.addr %s402, 4
        %s404 = scalar_lea.vmem %s8, %s403
        %p405 = scmp.lt.s32.totalorder %s30, 1
        %s406 = scalar_select %p405, %s30, 1
        %p407 = scmp.lt.s32.totalorder %s31, 0
        %s408 = scalar_select %p407, %s31, 0
        %s409 = smul.addr %s408, 3
        %s410 = smul.addr %s406, 3
        %s411 = sadd.s32 %s409, %s410
        %s412 = smul.addr %s411, 8
        %s413 = scalar_lea.vmem %s0, %s412
        %p414 = scmp.lt.s32.totalorder %s30, 1
        %s415 = scalar_select %p414, %s30, 1
        %p416 = scmp.lt.s32.totalorder %s31, 0
        %s417 = scalar_select %p416, %s31, 0
        %s418 = smul.addr %s417, 15
        %s419 = smul.addr %s415, 15
        %s420 = sadd.s32 %s418, %s419
        %s421 = smul.addr %s420, 4
        %s422 = scalar_lea.vmem %s1, %s421
        %p423 = scmp.lt.s32.totalorder %s30, 1
        %s424 = scalar_select %p423, %s30, 1
        %p425 = scmp.lt.s32.totalorder %s31, 0
        %s426 = scalar_select %p425, %s31, 0
        %s427 = sadd.s32 %s426, %s424
        %s428 = smul.addr %s427, 2
        %s429 = scalar_lea.vmem %s3, %s428
        %p430 = scmp.lt.s32.totalorder %s30, 1
        %s431 = scalar_select %p430, %s30, 1
        %p432 = scmp.lt.s32.totalorder %s31, 0
        %s433 = scalar_select %p432, %s31, 0
        %s434 = sadd.s32 %s433, %s431
        %s435 = smul.addr %s434, 8
        %s436 = scalar_lea.vmem %s4, %s435
        %p437 = scmp.lt.s32.totalorder %s30, 1
        %s438 = scalar_select %p437, %s30, 1
        %p439 = scmp.lt.s32.totalorder %s31, 0
        %s440 = scalar_select %p439, %s31, 0
        %s441 = sadd.s32 %s440, %s438
        %s442 = smul.addr %s441, 4
        %s443 = scalar_lea.vmem %s7, %s442
        %p444 = scmp.lt.s32.totalorder %s30, 1
        %s445 = scalar_select %p444, %s30, 1
        %p446 = scmp.lt.s32.totalorder %s31, 0
        %s447 = scalar_select %p446, %s31, 0
        %s448 = sadd.s32 %s447, %s445
        %s449 = smul.addr %s448, 4
        %s450 = scalar_lea.vmem %s8, %s449
        %s452 = smul.u32 %s31, 128
        %s453 = ssub.s32 %s452, 128
        %v454 = vlaneseq
        %v455 = vand.u32 %v454, 127
        %v456 = vadd.s32 %v455, 128
        %v457 = vadd.s32 %v455, 256
        %v458 = vstv %s453
        %v459 = vadd.s32 %v458, %v455
        %v460 = vadd.s32 %v458, %v456
        %v461 = vadd.s32 %v458, %v457
        %vm462 = vcmp.ge.s32.totalorder %v459, 0
        %vm463 = vcmp.ge.s32.totalorder %v460, 0
        %vm464 = vcmp.ge.s32.totalorder %v461, 0
        %vm465 = vcmp.lt.s32.totalorder %v459, 6
        %vm466 = vcmp.lt.s32.totalorder %v460, 6
        %vm467 = vcmp.lt.s32.totalorder %v461, 6
        %vm468 = vmand %vm462, %vm465
        %vm469 = vmand %vm463, %vm466
        %vm470 = vmand %vm464, %vm467
        %v471 = vld [vmem:[%s413] sm:$0xff]
        %v472 = vld [vmem:[%s413 + $0x8] sm:$0xff]
        %v473 = vld [vmem:[%s413 + $0x10] sm:$0xff]
        %v474 = vld [vmem:[%s422] sm:$0xff]
        %v475 = vld [vmem:[%s422 + $0x8] sm:$0xf]
        %v476 = vld [vmem:[%s422 + $0xc] sm:$0xff]
        %v477 = vld [vmem:[%s422 + $0x14] sm:$0xf]
        %v478 = vld [vmem:[%s422 + $0x18] sm:$0xff]
        %v479 = vld [vmem:[%s422 + $0x20] sm:$0xf]
        %v480 = vld [vmem:[%s422 + $0x24] sm:$0xff]
        %v481 = vld [vmem:[%s422 + $0x2c] sm:$0xf]
        %v482 = vld [vmem:[%s422 + $0x30] sm:$0xff]
        %v483 = vld [vmem:[%s422 + $0x38] sm:$0xf]
        %v484 = vld [vmem:[%s2] sm:$0xff]
        %v485 = vld [vmem:[%s2 + $0x8] sm:$0xff]
        %vm486 = vcmask 64512
        %v488 = vsel %vm486, %v484, 0
        %v491 = vsel %vm486, %v485, 0
        %493 = vmatpush.msra.mxu0 0.0
        %494 = vmatpush.msra.mxu0 0.0
        %495 = vmatpush.msra.mxu0 0.0
        %496 = vmatpush.msra.mxu0 0.0
        %497 = vmatpush.msra.mxu0 0.0
        %498 = vmatpush.msra.mxu0 0.0
        %499 = vmatpush.msra.mxu0 0.0
        %500 = vmatpush.msra.mxu0 0.0
        %501 = vmatpush.msra.mxu0 0.0
        %502 = vmatpush.msra.mxu0 0.0
        %503 = vmatpush.msra.mxu0 0.0
        %504 = vmatpush.msra.mxu0 0.0
        %505 = vmatpush.msra.mxu0 0.0
        %506 = vmatpush.msra.mxu0 0.0
        %507 = vmatpush.msra.mxu0 0.0
        %508 = vmatpush.msra.mxu0 %v471
        %509 = vmatmul.f32.gmra.mxu0 %v488
        %v510 = vpop.f32.mrf.mxu0
        %v511 = vadd.f32 0.0, %v510
        %512 = vmatmul.f32.gmra.mxu0 %v491
        %v513 = vpop.f32.mrf.mxu0
        %v514 = vadd.f32 0.0, %v513
        %515 = vdwg.mxu0
        %516 = vmatpush.msra.mxu0 0.0
        %517 = vmatpush.msra.mxu0 0.0
        %518 = vmatpush.msra.mxu0 0.0
        %519 = vmatpush.msra.mxu0 0.0
        %520 = vmatpush.msra.mxu0 0.0
        %521 = vmatpush.msra.mxu0 0.0
        %522 = vmatpush.msra.mxu0 0.0
        %523 = vmatpush.msra.mxu0 0.0
        %524 = vmatpush.msra.mxu0 0.0
        %525 = vmatpush.msra.mxu0 0.0
        %526 = vmatpush.msra.mxu0 0.0
        %527 = vmatpush.msra.mxu0 0.0
        %528 = vmatpush.msra.mxu0 0.0
        %529 = vmatpush.msra.mxu0 0.0
        %530 = vmatpush.msra.mxu0 0.0
        %531 = vmatpush.msra.mxu0 %v472
        %532 = vmatmul.f32.gmra.mxu0 %v488
        %v533 = vpop.f32.mrf.mxu0
        %v534 = vadd.f32 0.0, %v533
        %535 = vmatmul.f32.gmra.mxu0 %v491
        %v536 = vpop.f32.mrf.mxu0
        %v537 = vadd.f32 0.0, %v536
        %538 = vdwg.mxu0
        %539 = vmatpush.msra.mxu0 0.0
        %540 = vmatpush.msra.mxu0 0.0
        %541 = vmatpush.msra.mxu0 0.0
        %542 = vmatpush.msra.mxu0 0.0
        %543 = vmatpush.msra.mxu0 0.0
        %544 = vmatpush.msra.mxu0 0.0
        %545 = vmatpush.msra.mxu0 0.0
        %546 = vmatpush.msra.mxu0 0.0
        %547 = vmatpush.msra.mxu0 0.0
        %548 = vmatpush.msra.mxu0 0.0
        %549 = vmatpush.msra.mxu0 0.0
        %550 = vmatpush.msra.mxu0 0.0
        %551 = vmatpush.msra.mxu0 0.0
        %552 = vmatpush.msra.mxu0 0.0
        %553 = vmatpush.msra.mxu0 0.0
        %554 = vmatpush.msra.mxu0 %v473
        %555 = vmatmul.f32.gmra.mxu0 %v488
        %v556 = vpop.f32.mrf.mxu0
        %v557 = vadd.f32 0.0, %v556
        %558 = vmatmul.f32.gmra.mxu0 %v491
        %v559 = vpop.f32.mrf.mxu0
        %v560 = vadd.f32 0.0, %v559
        %561 = vdwg.mxu0
        %v562 = vld [vmem:[%s2 + $0x10] sm:$0xff]
        %564 = vset.pattern.permute.xlu0 0
        %565 = vperm.xlu0 %564, %v562
        %v566 = vpop.permute.xlu0 %565
        %v568 = vadd.f32 %v514, %v566
        %v569 = vadd.f32 %v537, %v566
        %v570 = vadd.f32 %v560, %v566
        %v571 = vld [vmem:[%s2 + $0x18] sm:$0xff]
        %v572 = vld [vmem:[%s2 + $0x20] sm:$0xff]
        %v573 = vld [vmem:[%s2 + $0x28] sm:$0xff]
        %v574 = vld [vmem:[%s2 + $0x30] sm:$0xff]
        %v575 = vpack.c.bf16 %v572, %v571
        %v576 = vpack.c.bf16 %v574, %v573
        %v577 = vld [vmem:[%s2 + $0x38] sm:$0xff]
        %v578 = vld [vmem:[%s2 + $0x40] sm:$0xff]
        %v579 = vld [vmem:[%s2 + $0x48] sm:$0xff]
        %v580 = vld [vmem:[%s2 + $0x50] sm:$0xff]
        %582 = vset.pattern.permute.xlu0 0
        %583 = vperm.xlu0 %582, %v577
        %v584 = vpop.permute.xlu0 %583
        %587 = vset.pattern.permute.xlu0 0
        %588 = vperm.xlu0 %587, %v578
        %v589 = vpop.permute.xlu0 %588
        %592 = vset.pattern.permute.xlu0 0
        %593 = vperm.xlu0 %592, %v579
        %v594 = vpop.permute.xlu0 %593
        %597 = vset.pattern.permute.xlu0 0
        %598 = vperm.xlu0 %597, %v580
        %v599 = vpop.permute.xlu0 %598
        %v611 = vunpack.c.l.b16 %v474
        %v612 = vunpack.c.h.b16 %v474
        %v613 = vunpack.c.l.b16 %v475
        %v614 = vunpack.c.l.b16 %v476
        %v615 = vunpack.c.h.b16 %v476
        %v616 = vunpack.c.l.b16 %v477
        %v617 = vunpack.c.l.b16 %v478
        %v618 = vunpack.c.h.b16 %v478
        %v619 = vunpack.c.l.b16 %v479
        %v620 = vunpack.c.l.b16 %v480
        %v621 = vunpack.c.h.b16 %v480
        %v622 = vunpack.c.l.b16 %v481
        %v623 = vunpack.c.l.b16 %v482
        %v624 = vunpack.c.h.b16 %v482
        %v625 = vunpack.c.l.b16 %v483
        %v626 = vpack.c.b16 %v614, %v611
        %v627 = vpack.c.b16 %v615, %v612
        %v628 = vpack.c.b16 %v616, %v613
        %v629 = vpack.c.b16 %v620, %v617
        %v630 = vpack.c.b16 %v621, %v618
        %v631 = vpack.c.b16 %v622, %v619
        %v632 = vpack.c.b16 %v623, %v623
        %v633 = vpack.c.b16 %v624, %v624
        %v634 = vpack.c.b16 %v625, %v625
        %vm641 = vcmask 326656
        %v643 = vsel %vm641, %v575, 0
        %v646 = vsel %vm641, %v576, 0
        %vm648 = vcmask 1043456
        %v650 = vsel %vm648, %v632, 0
        %v653 = vsel %vm648, %v633, 0
        %v656 = vsel %vm648, %v634, 0
        %658 = vmatpush.bf16.msra.mxu0 0
        %659 = vmatpush.bf16.msra.mxu0 0
        %660 = vmatpush.bf16.msra.mxu0 0
        %661 = vmatpush.bf16.msra.mxu0 0
        %662 = vmatpush.bf16.msra.mxu0 0
        %663 = vmatpush.bf16.msra.mxu0 %v650
        %664 = vmatpush.bf16.msra.mxu0 %v629
        %665 = vmatpush.bf16.msra.mxu0 %v626
        %666 = vmatmul.bf16.gmra.mxu0 %v643
        %v667 = vpop.f32.mrf.mxu0
        %v668 = vadd.f32 %v584, %v667
        %v669 = vpop.f32.mrf.mxu0
        %v670 = vadd.f32 %v589, %v669
        %671 = vmatmul.bf16.gmra.mxu0 %v646
        %v672 = vpop.f32.mrf.mxu0
        %v673 = vadd.f32 %v594, %v672
        %v674 = vpop.f32.mrf.mxu0
        %v675 = vadd.f32 %v599, %v674
        %676 = vdwg.mxu0
        %677 = vmatpush.bf16.msra.mxu0 0
        %678 = vmatpush.bf16.msra.mxu0 0
        %679 = vmatpush.bf16.msra.mxu0 0
        %680 = vmatpush.bf16.msra.mxu0 0
        %681 = vmatpush.bf16.msra.mxu0 0
        %682 = vmatpush.bf16.msra.mxu0 %v653
        %683 = vmatpush.bf16.msra.mxu0 %v630
        %684 = vmatpush.bf16.msra.mxu0 %v627
        %685 = vmatmul.bf16.gmra.mxu0 %v643
        %v686 = vpop.f32.mrf.mxu0
        %v687 = vadd.f32 %v584, %v686
        %v688 = vpop.f32.mrf.mxu0
        %v689 = vadd.f32 %v589, %v688
        %690 = vmatmul.bf16.gmra.mxu0 %v646
        %v691 = vpop.f32.mrf.mxu0
        %v692 = vadd.f32 %v594, %v691
        %v693 = vpop.f32.mrf.mxu0
        %v694 = vadd.f32 %v599, %v693
        %695 = vdwg.mxu0
        %696 = vmatpush.bf16.msra.mxu0 0
        %697 = vmatpush.bf16.msra.mxu0 0
        %698 = vmatpush.bf16.msra.mxu0 0
        %699 = vmatpush.bf16.msra.mxu0 0
        %700 = vmatpush.bf16.msra.mxu0 0
        %701 = vmatpush.bf16.msra.mxu0 %v656
        %702 = vmatpush.bf16.msra.mxu0 %v631
        %703 = vmatpush.bf16.msra.mxu0 %v628
        %704 = vmatmul.bf16.gmra.mxu0 %v643
        %v705 = vpop.f32.mrf.mxu0
        %v706 = vadd.f32 %v584, %v705
        %v707 = vpop.f32.mrf.mxu0
        %v708 = vadd.f32 %v589, %v707
        %709 = vmatmul.bf16.gmra.mxu0 %v646
        %v710 = vpop.f32.mrf.mxu0
        %v711 = vadd.f32 %v594, %v710
        %v712 = vpop.f32.mrf.mxu0
        %v713 = vadd.f32 %v599, %v712
        %714 = vdwg.mxu0
        %v715 = vsel %vm468, 1, 0
        %v716 = vsel %vm469, 1, 0
        %v717 = vsel %vm470, 1, 0
        %vm718 = vcmp.eq.s32.totalorder %v715, 1
        %vm719 = vcmp.eq.s32.totalorder %v716, 1
        %vm720 = vcmp.eq.s32.totalorder %v717, 1
        %v721 = vsel %vm718, %v568, 0.0
        %v722 = vsel %vm719, %v569, 0.0
        %v723 = vsel %vm720, %v570, 0.0
        %724 = vrot.lane.b32.xlu0 %v721, 1
        %v725 = vpop.permute.xlu0 %724
        %726 = vrot.lane.b32.xlu0 %v722, 1
        %v727 = vpop.permute.xlu0 %726
        %728 = vrot.lane.b32.xlu0 %v723, 1
        %v729 = vpop.permute.xlu0 %728
        %vm730 = vcmp.lt.s32.totalorder %v455, 1
        %v731 = vsel %vm730, %v727, %v729
        %v732 = vsel %vm730, %v725, %v727
        %v733 = vsel %vm730, %v729, %v725
        %734 = vrot.lane.b32.xlu0 %v721, 127
        %v735 = vpop.permute.xlu0 %734
        %736 = vrot.lane.b32.xlu0 %v722, 127
        %v737 = vpop.permute.xlu0 %736
        %738 = vrot.lane.b32.xlu0 %v723, 127
        %v739 = vpop.permute.xlu0 %738
        %vm740 = vcmp.lt.s32.totalorder %v455, 127
        %v741 = vsel %vm740, %v737, %v739
        %v742 = vsel %vm740, %v735, %v737
        %v743 = vsel %vm740, %v739, %v735
        %v744 = vld [vmem:[%s2 + $0x58] sm:$0xff]
        %v745 = vld [vmem:[%s2 + $0x60] sm:$0xff]
        %748 = vrot.lane.b32.xlu0 %v744, 120
        %v749 = vpop.permute.xlu0 %748
        %750 = vrot.lane.b32.xlu0 %v745, 120
        %v751 = vpop.permute.xlu0 %750
        %v752 = vsel %vm486, %v749, 0
        %v754 = vsel %vm486, %v751, 0
        %756 = vmatpush.msra.mxu0 0.0
        %757 = vmatpush.msra.mxu0 0.0
        %758 = vmatpush.msra.mxu0 0.0
        %759 = vmatpush.msra.mxu0 0.0
        %760 = vmatpush.msra.mxu0 0.0
        %761 = vmatpush.msra.mxu0 0.0
        %762 = vmatpush.msra.mxu0 0.0
        %763 = vmatpush.msra.mxu0 0.0
        %764 = vmatpush.msra.mxu0 0.0
        %765 = vmatpush.msra.mxu0 0.0
        %766 = vmatpush.msra.mxu0 0.0
        %767 = vmatpush.msra.mxu0 0.0
        %768 = vmatpush.msra.mxu0 0.0
        %769 = vmatpush.msra.mxu0 0.0
        %770 = vmatpush.msra.mxu0 0.0
        %771 = vmatpush.msra.mxu0 %v721
        %772 = vmatmul.f32.gmra.mxu0 %v752
        %v773 = vpop.f32.mrf.mxu0
        %v774 = vadd.f32 0.0, %v773
        %775 = vmatmul.f32.gmra.mxu0 %v754
        %v776 = vpop.f32.mrf.mxu0
        %v777 = vadd.f32 0.0, %v776
        %778 = vdwg.mxu0
        %779 = vmatpush.msra.mxu0 0.0
        %780 = vmatpush.msra.mxu0 0.0
        %781 = vmatpush.msra.mxu0 0.0
        %782 = vmatpush.msra.mxu0 0.0
        %783 = vmatpush.msra.mxu0 0.0
        %784 = vmatpush.msra.mxu0 0.0
        %785 = vmatpush.msra.mxu0 0.0
        %786 = vmatpush.msra.mxu0 0.0
        %787 = vmatpush.msra.mxu0 0.0
        %788 = vmatpush.msra.mxu0 0.0
        %789 = vmatpush.msra.mxu0 0.0
        %790 = vmatpush.msra.mxu0 0.0
        %791 = vmatpush.msra.mxu0 0.0
        %792 = vmatpush.msra.mxu0 0.0
        %793 = vmatpush.msra.mxu0 0.0
        %794 = vmatpush.msra.mxu0 %v722
        %795 = vmatmul.f32.gmra.mxu0 %v752
        %v796 = vpop.f32.mrf.mxu0
        %v797 = vadd.f32 0.0, %v796
        %798 = vmatmul.f32.gmra.mxu0 %v754
        %v799 = vpop.f32.mrf.mxu0
        %v800 = vadd.f32 0.0, %v799
        %801 = vdwg.mxu0
        %802 = vmatpush.msra.mxu0 0.0
        %803 = vmatpush.msra.mxu0 0.0
        %804 = vmatpush.msra.mxu0 0.0
        %805 = vmatpush.msra.mxu0 0.0
        %806 = vmatpush.msra.mxu0 0.0
        %807 = vmatpush.msra.mxu0 0.0
        %808 = vmatpush.msra.mxu0 0.0
        %809 = vmatpush.msra.mxu0 0.0
        %810 = vmatpush.msra.mxu0 0.0
        %811 = vmatpush.msra.mxu0 0.0
        %812 = vmatpush.msra.mxu0 0.0
        %813 = vmatpush.msra.mxu0 0.0
        %814 = vmatpush.msra.mxu0 0.0
        %815 = vmatpush.msra.mxu0 0.0
        %816 = vmatpush.msra.mxu0 0.0
        %817 = vmatpush.msra.mxu0 %v723
        %818 = vmatmul.f32.gmra.mxu0 %v752
        %v819 = vpop.f32.mrf.mxu0
        %v820 = vadd.f32 0.0, %v819
        %821 = vmatmul.f32.gmra.mxu0 %v754
        %v822 = vpop.f32.mrf.mxu0
        %v823 = vadd.f32 0.0, %v822
        %824 = vdwg.mxu0
        %v825 = vsel %vm486, %v744, 0
        %v827 = vsel %vm486, %v745, 0
        %829 = vmatpush.msra.mxu0 0.0
        %830 = vmatpush.msra.mxu0 0.0
        %831 = vmatpush.msra.mxu0 0.0
        %832 = vmatpush.msra.mxu0 0.0
        %833 = vmatpush.msra.mxu0 0.0
        %834 = vmatpush.msra.mxu0 0.0
        %835 = vmatpush.msra.mxu0 0.0
        %836 = vmatpush.msra.mxu0 0.0
        %837 = vmatpush.msra.mxu0 0.0
        %838 = vmatpush.msra.mxu0 0.0
        %839 = vmatpush.msra.mxu0 0.0
        %840 = vmatpush.msra.mxu0 0.0
        %841 = vmatpush.msra.mxu0 0.0
        %842 = vmatpush.msra.mxu0 0.0
        %843 = vmatpush.msra.mxu0 0.0
        %844 = vmatpush.msra.mxu0 %v733
        %845 = vmatmul.f32.gmra.mxu0 %v825
        %v846 = vpop.f32.mrf.mxu0
        %v847 = vadd.f32 %v774, %v846
        %848 = vmatmul.f32.gmra.mxu0 %v827
        %v849 = vpop.f32.mrf.mxu0
        %v850 = vadd.f32 %v777, %v849
        %851 = vdwg.mxu0
        %852 = vmatpush.msra.mxu0 0.0
        %853 = vmatpush.msra.mxu0 0.0
        %854 = vmatpush.msra.mxu0 0.0
        %855 = vmatpush.msra.mxu0 0.0
        %856 = vmatpush.msra.mxu0 0.0
        %857 = vmatpush.msra.mxu0 0.0
        %858 = vmatpush.msra.mxu0 0.0
        %859 = vmatpush.msra.mxu0 0.0
        %860 = vmatpush.msra.mxu0 0.0
        %861 = vmatpush.msra.mxu0 0.0
        %862 = vmatpush.msra.mxu0 0.0
        %863 = vmatpush.msra.mxu0 0.0
        %864 = vmatpush.msra.mxu0 0.0
        %865 = vmatpush.msra.mxu0 0.0
        %866 = vmatpush.msra.mxu0 0.0
        %867 = vmatpush.msra.mxu0 %v732
        %868 = vmatmul.f32.gmra.mxu0 %v825
        %v869 = vpop.f32.mrf.mxu0
        %v870 = vadd.f32 %v797, %v869
        %871 = vmatmul.f32.gmra.mxu0 %v827
        %v872 = vpop.f32.mrf.mxu0
        %v873 = vadd.f32 %v800, %v872
        %874 = vdwg.mxu0
        %875 = vmatpush.msra.mxu0 0.0
        %876 = vmatpush.msra.mxu0 0.0
        %877 = vmatpush.msra.mxu0 0.0
        %878 = vmatpush.msra.mxu0 0.0
        %879 = vmatpush.msra.mxu0 0.0
        %880 = vmatpush.msra.mxu0 0.0
        %881 = vmatpush.msra.mxu0 0.0
        %882 = vmatpush.msra.mxu0 0.0
        %883 = vmatpush.msra.mxu0 0.0
        %884 = vmatpush.msra.mxu0 0.0
        %885 = vmatpush.msra.mxu0 0.0
        %886 = vmatpush.msra.mxu0 0.0
        %887 = vmatpush.msra.mxu0 0.0
        %888 = vmatpush.msra.mxu0 0.0
        %889 = vmatpush.msra.mxu0 0.0
        %890 = vmatpush.msra.mxu0 %v731
        %891 = vmatmul.f32.gmra.mxu0 %v825
        %v892 = vpop.f32.mrf.mxu0
        %v893 = vadd.f32 %v820, %v892
        %894 = vmatmul.f32.gmra.mxu0 %v827
        %v895 = vpop.f32.mrf.mxu0
        %v896 = vadd.f32 %v823, %v895
        %897 = vdwg.mxu0
        %898 = vrot.lane.b32.xlu0 %v744, 112
        %v899 = vpop.permute.xlu0 %898
        %900 = vrot.lane.b32.xlu0 %v745, 112
        %v901 = vpop.permute.xlu0 %900
        %v902 = vsel %vm486, %v899, 0
        %v904 = vsel %vm486, %v901, 0
        %906 = vmatpush.msra.mxu0 0.0
        %907 = vmatpush.msra.mxu0 0.0
        %908 = vmatpush.msra.mxu0 0.0
        %909 = vmatpush.msra.mxu0 0.0
        %910 = vmatpush.msra.mxu0 0.0
        %911 = vmatpush.msra.mxu0 0.0
        %912 = vmatpush.msra.mxu0 0.0
        %913 = vmatpush.msra.mxu0 0.0
        %914 = vmatpush.msra.mxu0 0.0
        %915 = vmatpush.msra.mxu0 0.0
        %916 = vmatpush.msra.mxu0 0.0
        %917 = vmatpush.msra.mxu0 0.0
        %918 = vmatpush.msra.mxu0 0.0
        %919 = vmatpush.msra.mxu0 0.0
        %920 = vmatpush.msra.mxu0 0.0
        %921 = vmatpush.msra.mxu0 %v742
        %922 = vmatmul.f32.gmra.mxu0 %v902
        %v923 = vpop.f32.mrf.mxu0
        %v924 = vadd.f32 0.0, %v923
        %925 = vmatmul.f32.gmra.mxu0 %v904
        %v926 = vpop.f32.mrf.mxu0
        %v927 = vadd.f32 0.0, %v926
        %928 = vdwg.mxu0
        %929 = vmatpush.msra.mxu0 0.0
        %930 = vmatpush.msra.mxu0 0.0
        %931 = vmatpush.msra.mxu0 0.0
        %932 = vmatpush.msra.mxu0 0.0
        %933 = vmatpush.msra.mxu0 0.0
        %934 = vmatpush.msra.mxu0 0.0
        %935 = vmatpush.msra.mxu0 0.0
        %936 = vmatpush.msra.mxu0 0.0
        %937 = vmatpush.msra.mxu0 0.0
        %938 = vmatpush.msra.mxu0 0.0
        %939 = vmatpush.msra.mxu0 0.0
        %940 = vmatpush.msra.mxu0 0.0
        %941 = vmatpush.msra.mxu0 0.0
        %942 = vmatpush.msra.mxu0 0.0
        %943 = vmatpush.msra.mxu0 0.0
        %944 = vmatpush.msra.mxu0 %v741
        %945 = vmatmul.f32.gmra.mxu0 %v902
        %v946 = vpop.f32.mrf.mxu0
        %v947 = vadd.f32 0.0, %v946
        %948 = vmatmul.f32.gmra.mxu0 %v904
        %v949 = vpop.f32.mrf.mxu0
        %v950 = vadd.f32 0.0, %v949
        %951 = vdwg.mxu0
        %952 = vmatpush.msra.mxu0 0.0
        %953 = vmatpush.msra.mxu0 0.0
        %954 = vmatpush.msra.mxu0 0.0
        %955 = vmatpush.msra.mxu0 0.0
        %956 = vmatpush.msra.mxu0 0.0
        %957 = vmatpush.msra.mxu0 0.0
        %958 = vmatpush.msra.mxu0 0.0
        %959 = vmatpush.msra.mxu0 0.0
        %960 = vmatpush.msra.mxu0 0.0
        %961 = vmatpush.msra.mxu0 0.0
        %962 = vmatpush.msra.mxu0 0.0
        %963 = vmatpush.msra.mxu0 0.0
        %964 = vmatpush.msra.mxu0 0.0
        %965 = vmatpush.msra.mxu0 0.0
        %966 = vmatpush.msra.mxu0 0.0
        %967 = vmatpush.msra.mxu0 %v743
        %968 = vmatmul.f32.gmra.mxu0 %v902
        %v969 = vpop.f32.mrf.mxu0
        %v970 = vadd.f32 0.0, %v969
        %971 = vmatmul.f32.gmra.mxu0 %v904
        %v972 = vpop.f32.mrf.mxu0
        %v973 = vadd.f32 0.0, %v972
        %974 = vdwg.mxu0
        %v975 = vadd.f32 %v847, %v924
        %v976 = vadd.f32 %v870, %v947
        %v977 = vadd.f32 %v893, %v970
        %v978 = vadd.f32 %v850, %v927
        %v979 = vadd.f32 %v873, %v950
        %v980 = vadd.f32 %v896, %v973
        %v981 = vadd.f32 %v975, %v668
        %v982 = vadd.f32 %v976, %v687
        %v983 = vadd.f32 %v977, %v706
        %v984 = vadd.f32 %v978, %v670
        %v985 = vadd.f32 %v979, %v689
        %v986 = vadd.f32 %v980, %v708
        %v987 = vtanh.pop %v981
        %v988 = vtanh.pop %v982
        %v989 = vtanh.pop %v983
        %v990 = vxor.u32 %v984, 2147483648
        %v991 = vxor.u32 %v985, 2147483648
        %v992 = vxor.u32 %v986, 2147483648
        %v993 = vmul.f32 %v990, 1.442695
        %v994 = vpow.pop %v993
        %v995 = vmul.f32 %v991, 1.442695
        %v996 = vpow.pop %v995
        %v997 = vmul.f32 %v992, 1.442695
        %v998 = vpow.pop %v997
        %v999 = vadd.f32 %v994, 1.0
        %v1000 = vadd.f32 %v996, 1.0
        %v1001 = vadd.f32 %v998, 1.0
        %v1002 = vrcp.pop %v999
        %v1003 = vmul.f32 %v999, %v1002
        %v1004 = vsub.f32 1.0, %v1003
        %v1005 = vmul.f32 %v1002, %v1004
        %v1006 = vadd.f32 %v1002, %v1005
        %vm1007 = vweird.f32 %v999
        %vm1008 = vweird.f32 %v1002
        %vm1009 = vmor %vm1007, %vm1008
        %v1010 = vsel %vm1009, %v1002, %v1006
        %v1011 = vand.u32 2147483647, %v999
        %vm1012 = vcmp.eq.f32.partialorder %v1011, 8.507059e+37
        %v1013 = vand.u32 %v999, 2147483648
        %v1014 = vor.u32 1.1754944e-38, %v1013
        %v1015 = vsel %vm1012, %v1014, %v1010
        %v1016 = vmul.f32 1.0, %v1015
        %v1017 = vrcp.pop %v1000
        %v1018 = vmul.f32 %v1000, %v1017
        %v1019 = vsub.f32 1.0, %v1018
        %v1020 = vmul.f32 %v1017, %v1019
        %v1021 = vadd.f32 %v1017, %v1020
        %vm1022 = vweird.f32 %v1000
        %vm1023 = vweird.f32 %v1017
        %vm1024 = vmor %vm1022, %vm1023
        %v1025 = vsel %vm1024, %v1017, %v1021
        %v1026 = vand.u32 2147483647, %v1000
        %vm1027 = vcmp.eq.f32.partialorder %v1026, 8.507059e+37
        %v1028 = vand.u32 %v1000, 2147483648
        %v1029 = vor.u32 1.1754944e-38, %v1028
        %v1030 = vsel %vm1027, %v1029, %v1025
        %v1031 = vmul.f32 1.0, %v1030
        %v1032 = vrcp.pop %v1001
        %v1033 = vmul.f32 %v1001, %v1032
        %v1034 = vsub.f32 1.0, %v1033
        %v1035 = vmul.f32 %v1032, %v1034
        %v1036 = vadd.f32 %v1032, %v1035
        %vm1037 = vweird.f32 %v1001
        %vm1038 = vweird.f32 %v1032
        %vm1039 = vmor %vm1037, %vm1038
        %v1040 = vsel %vm1039, %v1032, %v1036
        %v1041 = vand.u32 2147483647, %v1001
        %vm1042 = vcmp.eq.f32.partialorder %v1041, 8.507059e+37
        %v1043 = vand.u32 %v1001, 2147483648
        %v1044 = vor.u32 1.1754944e-38, %v1043
        %v1045 = vsel %vm1042, %v1044, %v1040
        %v1046 = vmul.f32 1.0, %v1045
        %v1047 = vmul.f32 %v987, %v1016
        %v1048 = vmul.f32 %v988, %v1031
        %v1049 = vmul.f32 %v989, %v1046
        %v1050 = vld [vmem:[%s2 + $0x88] sm:$0xff]
        %v1051 = vld [vmem:[%s2 + $0x78] sm:$0xff]
        %v1053 = vsel %vm486, %v1051, 0
        %1055 = vmatpush.msra.mxu0 0.0
        %1056 = vmatpush.msra.mxu0 0.0
        %1057 = vmatpush.msra.mxu0 0.0
        %1058 = vmatpush.msra.mxu0 0.0
        %1059 = vmatpush.msra.mxu0 0.0
        %1060 = vmatpush.msra.mxu0 0.0
        %1061 = vmatpush.msra.mxu0 0.0
        %1062 = vmatpush.msra.mxu0 0.0
        %1063 = vmatpush.msra.mxu0 0.0
        %1064 = vmatpush.msra.mxu0 0.0
        %1065 = vmatpush.msra.mxu0 0.0
        %1066 = vmatpush.msra.mxu0 0.0
        %1067 = vmatpush.msra.mxu0 0.0
        %1068 = vmatpush.msra.mxu0 0.0
        %1069 = vmatpush.msra.mxu0 0.0
        %1070 = vmatpush.msra.mxu0 %v1047
        %1071 = vmatmul.f32.gmra.mxu0 %v1053
        %v1072 = vpop.f32.mrf.mxu0
        %v1073 = vadd.f32 0.0, %v1072
        %1074 = vdwg.mxu0
        %1075 = vmatpush.msra.mxu0 0.0
        %1076 = vmatpush.msra.mxu0 0.0
        %1077 = vmatpush.msra.mxu0 0.0
        %1078 = vmatpush.msra.mxu0 0.0
        %1079 = vmatpush.msra.mxu0 0.0
        %1080 = vmatpush.msra.mxu0 0.0
        %1081 = vmatpush.msra.mxu0 0.0
        %1082 = vmatpush.msra.mxu0 0.0
        %1083 = vmatpush.msra.mxu0 0.0
        %1084 = vmatpush.msra.mxu0 0.0
        %1085 = vmatpush.msra.mxu0 0.0
        %1086 = vmatpush.msra.mxu0 0.0
        %1087 = vmatpush.msra.mxu0 0.0
        %1088 = vmatpush.msra.mxu0 0.0
        %1089 = vmatpush.msra.mxu0 0.0
        %1090 = vmatpush.msra.mxu0 %v1048
        %1091 = vmatmul.f32.gmra.mxu0 %v1053
        %v1092 = vpop.f32.mrf.mxu0
        %v1093 = vadd.f32 0.0, %v1092
        %1094 = vdwg.mxu0
        %1095 = vmatpush.msra.mxu0 0.0
        %1096 = vmatpush.msra.mxu0 0.0
        %1097 = vmatpush.msra.mxu0 0.0
        %1098 = vmatpush.msra.mxu0 0.0
        %1099 = vmatpush.msra.mxu0 0.0
        %1100 = vmatpush.msra.mxu0 0.0
        %1101 = vmatpush.msra.mxu0 0.0
        %1102 = vmatpush.msra.mxu0 0.0
        %1103 = vmatpush.msra.mxu0 0.0
        %1104 = vmatpush.msra.mxu0 0.0
        %1105 = vmatpush.msra.mxu0 0.0
        %1106 = vmatpush.msra.mxu0 0.0
        %1107 = vmatpush.msra.mxu0 0.0
        %1108 = vmatpush.msra.mxu0 0.0
        %1109 = vmatpush.msra.mxu0 0.0
        %1110 = vmatpush.msra.mxu0 %v1049
        %1111 = vmatmul.f32.gmra.mxu0 %v1053
        %v1112 = vpop.f32.mrf.mxu0
        %v1113 = vadd.f32 0.0, %v1112
        %1114 = vdwg.mxu0
        %v1115 = vadd.f32 %v568, %v1073
        %v1116 = vadd.f32 %v569, %v1093
        %v1117 = vadd.f32 %v570, %v1113
        %v1118 = vld [vmem:[%s2 + $0x80] sm:$0xff]
        %1120 = vset.pattern.permute.xlu0 0
        %1121 = vperm.xlu0 %1120, %v1118
        %v1122 = vpop.permute.xlu0 %1121
        %v1124 = vadd.f32 %v1115, %v1122
        %v1125 = vadd.f32 %v1116, %v1122
        %v1126 = vadd.f32 %v1117, %v1122
        %v1127 = vsel %vm718, %v1124, 0.0
        %v1128 = vsel %vm719, %v1125, 0.0
        %v1129 = vsel %vm720, %v1126, 0.0
        %1130 = vrot.lane.b32.xlu0 %v1127, 2
        %v1131 = vpop.permute.xlu0 %1130
        %1132 = vrot.lane.b32.xlu0 %v1128, 2
        %v1133 = vpop.permute.xlu0 %1132
        %1134 = vrot.lane.b32.xlu0 %v1129, 2
        %v1135 = vpop.permute.xlu0 %1134
        %vm1136 = vcmp.lt.s32.totalorder %v455, 2
        %v1137 = vsel %vm1136, %v1133, %v1135
        %v1138 = vsel %vm1136, %v1131, %v1133
        %v1139 = vsel %vm1136, %v1135, %v1131
        %1140 = vrot.lane.b32.xlu0 %v1127, 126
        %v1141 = vpop.permute.xlu0 %1140
        %1142 = vrot.lane.b32.xlu0 %v1128, 126
        %v1143 = vpop.permute.xlu0 %1142
        %1144 = vrot.lane.b32.xlu0 %v1129, 126
        %v1145 = vpop.permute.xlu0 %1144
        %vm1146 = vcmp.lt.s32.totalorder %v455, 126
        %v1147 = vsel %vm1146, %v1143, %v1145
        %v1148 = vsel %vm1146, %v1141, %v1143
        %v1149 = vsel %vm1146, %v1145, %v1141
        %v1150 = vld [vmem:[%s2 + $0x68] sm:$0xff]
        %v1151 = vld [vmem:[%s2 + $0x70] sm:$0xff]
        %1154 = vrot.lane.b32.xlu0 %v1150, 120
        %v1155 = vpop.permute.xlu0 %1154
        %1156 = vrot.lane.b32.xlu0 %v1151, 120
        %v1157 = vpop.permute.xlu0 %1156
        %v1158 = vsel %vm486, %v1155, 0
        %v1160 = vsel %vm486, %v1157, 0
        %1162 = vmatpush.msra.mxu0 0.0
        %1163 = vmatpush.msra.mxu0 0.0
        %1164 = vmatpush.msra.mxu0 0.0
        %1165 = vmatpush.msra.mxu0 0.0
        %1166 = vmatpush.msra.mxu0 0.0
        %1167 = vmatpush.msra.mxu0 0.0
        %1168 = vmatpush.msra.mxu0 0.0
        %1169 = vmatpush.msra.mxu0 0.0
        %1170 = vmatpush.msra.mxu0 0.0
        %1171 = vmatpush.msra.mxu0 0.0
        %1172 = vmatpush.msra.mxu0 0.0
        %1173 = vmatpush.msra.mxu0 0.0
        %1174 = vmatpush.msra.mxu0 0.0
        %1175 = vmatpush.msra.mxu0 0.0
        %1176 = vmatpush.msra.mxu0 0.0
        %1177 = vmatpush.msra.mxu0 %v1127
        %1178 = vmatmul.f32.gmra.mxu0 %v1158
        %v1179 = vpop.f32.mrf.mxu0
        %v1180 = vadd.f32 0.0, %v1179
        %1181 = vmatmul.f32.gmra.mxu0 %v1160
        %v1182 = vpop.f32.mrf.mxu0
        %v1183 = vadd.f32 0.0, %v1182
        %1184 = vdwg.mxu0
        %1185 = vmatpush.msra.mxu0 0.0
        %1186 = vmatpush.msra.mxu0 0.0
        %1187 = vmatpush.msra.mxu0 0.0
        %1188 = vmatpush.msra.mxu0 0.0
        %1189 = vmatpush.msra.mxu0 0.0
        %1190 = vmatpush.msra.mxu0 0.0
        %1191 = vmatpush.msra.mxu0 0.0
        %1192 = vmatpush.msra.mxu0 0.0
        %1193 = vmatpush.msra.mxu0 0.0
        %1194 = vmatpush.msra.mxu0 0.0
        %1195 = vmatpush.msra.mxu0 0.0
        %1196 = vmatpush.msra.mxu0 0.0
        %1197 = vmatpush.msra.mxu0 0.0
        %1198 = vmatpush.msra.mxu0 0.0
        %1199 = vmatpush.msra.mxu0 0.0
        %1200 = vmatpush.msra.mxu0 %v1128
        %1201 = vmatmul.f32.gmra.mxu0 %v1158
        %v1202 = vpop.f32.mrf.mxu0
        %v1203 = vadd.f32 0.0, %v1202
        %1204 = vmatmul.f32.gmra.mxu0 %v1160
        %v1205 = vpop.f32.mrf.mxu0
        %v1206 = vadd.f32 0.0, %v1205
        %1207 = vdwg.mxu0
        %1208 = vmatpush.msra.mxu0 0.0
        %1209 = vmatpush.msra.mxu0 0.0
        %1210 = vmatpush.msra.mxu0 0.0
        %1211 = vmatpush.msra.mxu0 0.0
        %1212 = vmatpush.msra.mxu0 0.0
        %1213 = vmatpush.msra.mxu0 0.0
        %1214 = vmatpush.msra.mxu0 0.0
        %1215 = vmatpush.msra.mxu0 0.0
        %1216 = vmatpush.msra.mxu0 0.0
        %1217 = vmatpush.msra.mxu0 0.0
        %1218 = vmatpush.msra.mxu0 0.0
        %1219 = vmatpush.msra.mxu0 0.0
        %1220 = vmatpush.msra.mxu0 0.0
        %1221 = vmatpush.msra.mxu0 0.0
        %1222 = vmatpush.msra.mxu0 0.0
        %1223 = vmatpush.msra.mxu0 %v1129
        %1224 = vmatmul.f32.gmra.mxu0 %v1158
        %v1225 = vpop.f32.mrf.mxu0
        %v1226 = vadd.f32 0.0, %v1225
        %1227 = vmatmul.f32.gmra.mxu0 %v1160
        %v1228 = vpop.f32.mrf.mxu0
        %v1229 = vadd.f32 0.0, %v1228
        %1230 = vdwg.mxu0
        %v1231 = vsel %vm486, %v1150, 0
        %v1233 = vsel %vm486, %v1151, 0
        %1235 = vmatpush.msra.mxu0 0.0
        %1236 = vmatpush.msra.mxu0 0.0
        %1237 = vmatpush.msra.mxu0 0.0
        %1238 = vmatpush.msra.mxu0 0.0
        %1239 = vmatpush.msra.mxu0 0.0
        %1240 = vmatpush.msra.mxu0 0.0
        %1241 = vmatpush.msra.mxu0 0.0
        %1242 = vmatpush.msra.mxu0 0.0
        %1243 = vmatpush.msra.mxu0 0.0
        %1244 = vmatpush.msra.mxu0 0.0
        %1245 = vmatpush.msra.mxu0 0.0
        %1246 = vmatpush.msra.mxu0 0.0
        %1247 = vmatpush.msra.mxu0 0.0
        %1248 = vmatpush.msra.mxu0 0.0
        %1249 = vmatpush.msra.mxu0 0.0
        %1250 = vmatpush.msra.mxu0 %v1139
        %1251 = vmatmul.f32.gmra.mxu0 %v1231
        %v1252 = vpop.f32.mrf.mxu0
        %v1253 = vadd.f32 %v1180, %v1252
        %1254 = vmatmul.f32.gmra.mxu0 %v1233
        %v1255 = vpop.f32.mrf.mxu0
        %v1256 = vadd.f32 %v1183, %v1255
        %1257 = vdwg.mxu0
        %1258 = vmatpush.msra.mxu0 0.0
        %1259 = vmatpush.msra.mxu0 0.0
        %1260 = vmatpush.msra.mxu0 0.0
        %1261 = vmatpush.msra.mxu0 0.0
        %1262 = vmatpush.msra.mxu0 0.0
        %1263 = vmatpush.msra.mxu0 0.0
        %1264 = vmatpush.msra.mxu0 0.0
        %1265 = vmatpush.msra.mxu0 0.0
        %1266 = vmatpush.msra.mxu0 0.0
        %1267 = vmatpush.msra.mxu0 0.0
        %1268 = vmatpush.msra.mxu0 0.0
        %1269 = vmatpush.msra.mxu0 0.0
        %1270 = vmatpush.msra.mxu0 0.0
        %1271 = vmatpush.msra.mxu0 0.0
        %1272 = vmatpush.msra.mxu0 0.0
        %1273 = vmatpush.msra.mxu0 %v1138
        %1274 = vmatmul.f32.gmra.mxu0 %v1231
        %v1275 = vpop.f32.mrf.mxu0
        %v1276 = vadd.f32 %v1203, %v1275
        %1277 = vmatmul.f32.gmra.mxu0 %v1233
        %v1278 = vpop.f32.mrf.mxu0
        %v1279 = vadd.f32 %v1206, %v1278
        %1280 = vdwg.mxu0
        %1281 = vmatpush.msra.mxu0 0.0
        %1282 = vmatpush.msra.mxu0 0.0
        %1283 = vmatpush.msra.mxu0 0.0
        %1284 = vmatpush.msra.mxu0 0.0
        %1285 = vmatpush.msra.mxu0 0.0
        %1286 = vmatpush.msra.mxu0 0.0
        %1287 = vmatpush.msra.mxu0 0.0
        %1288 = vmatpush.msra.mxu0 0.0
        %1289 = vmatpush.msra.mxu0 0.0
        %1290 = vmatpush.msra.mxu0 0.0
        %1291 = vmatpush.msra.mxu0 0.0
        %1292 = vmatpush.msra.mxu0 0.0
        %1293 = vmatpush.msra.mxu0 0.0
        %1294 = vmatpush.msra.mxu0 0.0
        %1295 = vmatpush.msra.mxu0 0.0
        %1296 = vmatpush.msra.mxu0 %v1137
        %1297 = vmatmul.f32.gmra.mxu0 %v1231
        %v1298 = vpop.f32.mrf.mxu0
        %v1299 = vadd.f32 %v1226, %v1298
        %1300 = vmatmul.f32.gmra.mxu0 %v1233
        %v1301 = vpop.f32.mrf.mxu0
        %v1302 = vadd.f32 %v1229, %v1301
        %1303 = vdwg.mxu0
        %1304 = vrot.lane.b32.xlu0 %v1150, 112
        %v1305 = vpop.permute.xlu0 %1304
        %1306 = vrot.lane.b32.xlu0 %v1151, 112
        %v1307 = vpop.permute.xlu0 %1306
        %v1308 = vsel %vm486, %v1305, 0
        %v1310 = vsel %vm486, %v1307, 0
        %1312 = vmatpush.msra.mxu0 0.0
        %1313 = vmatpush.msra.mxu0 0.0
        %1314 = vmatpush.msra.mxu0 0.0
        %1315 = vmatpush.msra.mxu0 0.0
        %1316 = vmatpush.msra.mxu0 0.0
        %1317 = vmatpush.msra.mxu0 0.0
        %1318 = vmatpush.msra.mxu0 0.0
        %1319 = vmatpush.msra.mxu0 0.0
        %1320 = vmatpush.msra.mxu0 0.0
        %1321 = vmatpush.msra.mxu0 0.0
        %1322 = vmatpush.msra.mxu0 0.0
        %1323 = vmatpush.msra.mxu0 0.0
        %1324 = vmatpush.msra.mxu0 0.0
        %1325 = vmatpush.msra.mxu0 0.0
        %1326 = vmatpush.msra.mxu0 0.0
        %1327 = vmatpush.msra.mxu0 %v1148
        %1328 = vmatmul.f32.gmra.mxu0 %v1308
        %v1329 = vpop.f32.mrf.mxu0
        %v1330 = vadd.f32 0.0, %v1329
        %1331 = vmatmul.f32.gmra.mxu0 %v1310
        %v1332 = vpop.f32.mrf.mxu0
        %v1333 = vadd.f32 0.0, %v1332
        %1334 = vdwg.mxu0
        %1335 = vmatpush.msra.mxu0 0.0
        %1336 = vmatpush.msra.mxu0 0.0
        %1337 = vmatpush.msra.mxu0 0.0
        %1338 = vmatpush.msra.mxu0 0.0
        %1339 = vmatpush.msra.mxu0 0.0
        %1340 = vmatpush.msra.mxu0 0.0
        %1341 = vmatpush.msra.mxu0 0.0
        %1342 = vmatpush.msra.mxu0 0.0
        %1343 = vmatpush.msra.mxu0 0.0
        %1344 = vmatpush.msra.mxu0 0.0
        %1345 = vmatpush.msra.mxu0 0.0
        %1346 = vmatpush.msra.mxu0 0.0
        %1347 = vmatpush.msra.mxu0 0.0
        %1348 = vmatpush.msra.mxu0 0.0
        %1349 = vmatpush.msra.mxu0 0.0
        %1350 = vmatpush.msra.mxu0 %v1147
        %1351 = vmatmul.f32.gmra.mxu0 %v1308
        %v1352 = vpop.f32.mrf.mxu0
        %v1353 = vadd.f32 0.0, %v1352
        %1354 = vmatmul.f32.gmra.mxu0 %v1310
        %v1355 = vpop.f32.mrf.mxu0
        %v1356 = vadd.f32 0.0, %v1355
        %1357 = vdwg.mxu0
        %1358 = vmatpush.msra.mxu0 0.0
        %1359 = vmatpush.msra.mxu0 0.0
        %1360 = vmatpush.msra.mxu0 0.0
        %1361 = vmatpush.msra.mxu0 0.0
        %1362 = vmatpush.msra.mxu0 0.0
        %1363 = vmatpush.msra.mxu0 0.0
        %1364 = vmatpush.msra.mxu0 0.0
        %1365 = vmatpush.msra.mxu0 0.0
        %1366 = vmatpush.msra.mxu0 0.0
        %1367 = vmatpush.msra.mxu0 0.0
        %1368 = vmatpush.msra.mxu0 0.0
        %1369 = vmatpush.msra.mxu0 0.0
        %1370 = vmatpush.msra.mxu0 0.0
        %1371 = vmatpush.msra.mxu0 0.0
        %1372 = vmatpush.msra.mxu0 0.0
        %1373 = vmatpush.msra.mxu0 %v1149
        %1374 = vmatmul.f32.gmra.mxu0 %v1308
        %v1375 = vpop.f32.mrf.mxu0
        %v1376 = vadd.f32 0.0, %v1375
        %1377 = vmatmul.f32.gmra.mxu0 %v1310
        %v1378 = vpop.f32.mrf.mxu0
        %v1379 = vadd.f32 0.0, %v1378
        %1380 = vdwg.mxu0
        %v1381 = vadd.f32 %v1253, %v1330
        %v1382 = vadd.f32 %v1276, %v1353
        %v1383 = vadd.f32 %v1299, %v1376
        %v1384 = vadd.f32 %v1256, %v1333
        %v1385 = vadd.f32 %v1279, %v1356
        %v1386 = vadd.f32 %v1302, %v1379
        %v1387 = vadd.f32 %v1381, %v673
        %v1388 = vadd.f32 %v1382, %v692
        %v1389 = vadd.f32 %v1383, %v711
        %v1390 = vadd.f32 %v1384, %v675
        %v1391 = vadd.f32 %v1385, %v694
        %v1392 = vadd.f32 %v1386, %v713
        %v1393 = vtanh.pop %v1387
        %v1394 = vtanh.pop %v1388
        %v1395 = vtanh.pop %v1389
        %v1396 = vxor.u32 %v1390, 2147483648
        %v1397 = vxor.u32 %v1391, 2147483648
        %v1398 = vxor.u32 %v1392, 2147483648
        %v1399 = vmul.f32 %v1396, 1.442695
        %v1400 = vpow.pop %v1399
        %v1401 = vmul.f32 %v1397, 1.442695
        %v1402 = vpow.pop %v1401
        %v1403 = vmul.f32 %v1398, 1.442695
        %v1404 = vpow.pop %v1403
        %v1405 = vadd.f32 %v1400, 1.0
        %v1406 = vadd.f32 %v1402, 1.0
        %v1407 = vadd.f32 %v1404, 1.0
        %v1408 = vrcp.pop %v1405
        %v1409 = vmul.f32 %v1405, %v1408
        %v1410 = vsub.f32 1.0, %v1409
        %v1411 = vmul.f32 %v1408, %v1410
        %v1412 = vadd.f32 %v1408, %v1411
        %vm1413 = vweird.f32 %v1405
        %vm1414 = vweird.f32 %v1408
        %vm1415 = vmor %vm1413, %vm1414
        %v1416 = vsel %vm1415, %v1408, %v1412
        %v1417 = vand.u32 2147483647, %v1405
        %vm1418 = vcmp.eq.f32.partialorder %v1417, 8.507059e+37
        %v1419 = vand.u32 %v1405, 2147483648
        %v1420 = vor.u32 1.1754944e-38, %v1419
        %v1421 = vsel %vm1418, %v1420, %v1416
        %v1422 = vmul.f32 1.0, %v1421
        %v1423 = vrcp.pop %v1406
        %v1424 = vmul.f32 %v1406, %v1423
        %v1425 = vsub.f32 1.0, %v1424
        %v1426 = vmul.f32 %v1423, %v1425
        %v1427 = vadd.f32 %v1423, %v1426
        %vm1428 = vweird.f32 %v1406
        %vm1429 = vweird.f32 %v1423
        %vm1430 = vmor %vm1428, %vm1429
        %v1431 = vsel %vm1430, %v1423, %v1427
        %v1432 = vand.u32 2147483647, %v1406
        %vm1433 = vcmp.eq.f32.partialorder %v1432, 8.507059e+37
        %v1434 = vand.u32 %v1406, 2147483648
        %v1435 = vor.u32 1.1754944e-38, %v1434
        %v1436 = vsel %vm1433, %v1435, %v1431
        %v1437 = vmul.f32 1.0, %v1436
        %v1438 = vrcp.pop %v1407
        %v1439 = vmul.f32 %v1407, %v1438
        %v1440 = vsub.f32 1.0, %v1439
        %v1441 = vmul.f32 %v1438, %v1440
        %v1442 = vadd.f32 %v1438, %v1441
        %vm1443 = vweird.f32 %v1407
        %vm1444 = vweird.f32 %v1438
        %vm1445 = vmor %vm1443, %vm1444
        %v1446 = vsel %vm1445, %v1438, %v1442
        %v1447 = vand.u32 2147483647, %v1407
        %vm1448 = vcmp.eq.f32.partialorder %v1447, 8.507059e+37
        %v1449 = vand.u32 %v1407, 2147483648
        %v1450 = vor.u32 1.1754944e-38, %v1449
        %v1451 = vsel %vm1448, %v1450, %v1446
        %v1452 = vmul.f32 1.0, %v1451
        %v1453 = vmul.f32 %v1393, %v1422
        %v1454 = vmul.f32 %v1394, %v1437
        %v1455 = vmul.f32 %v1395, %v1452
        %v1456 = vld [vmem:[%s2 + $0x90] sm:$0xff]
        %v1458 = vsel %vm486, %v1456, 0
        %1460 = vmatpush.msra.mxu0 0.0
        %1461 = vmatpush.msra.mxu0 0.0
        %1462 = vmatpush.msra.mxu0 0.0
        %1463 = vmatpush.msra.mxu0 0.0
        %1464 = vmatpush.msra.mxu0 0.0
        %1465 = vmatpush.msra.mxu0 0.0
        %1466 = vmatpush.msra.mxu0 0.0
        %1467 = vmatpush.msra.mxu0 0.0
        %1468 = vmatpush.msra.mxu0 0.0
        %1469 = vmatpush.msra.mxu0 0.0
        %1470 = vmatpush.msra.mxu0 0.0
        %1471 = vmatpush.msra.mxu0 0.0
        %1472 = vmatpush.msra.mxu0 0.0
        %1473 = vmatpush.msra.mxu0 0.0
        %1474 = vmatpush.msra.mxu0 0.0
        %1475 = vmatpush.msra.mxu0 %v1453
        %1476 = vmatmul.f32.gmra.mxu0 %v1458
        %v1477 = vpop.f32.mrf.mxu0
        %v1478 = vadd.f32 0.0, %v1477
        %1479 = vdwg.mxu0
        %1480 = vmatpush.msra.mxu0 0.0
        %1481 = vmatpush.msra.mxu0 0.0
        %1482 = vmatpush.msra.mxu0 0.0
        %1483 = vmatpush.msra.mxu0 0.0
        %1484 = vmatpush.msra.mxu0 0.0
        %1485 = vmatpush.msra.mxu0 0.0
        %1486 = vmatpush.msra.mxu0 0.0
        %1487 = vmatpush.msra.mxu0 0.0
        %1488 = vmatpush.msra.mxu0 0.0
        %1489 = vmatpush.msra.mxu0 0.0
        %1490 = vmatpush.msra.mxu0 0.0
        %1491 = vmatpush.msra.mxu0 0.0
        %1492 = vmatpush.msra.mxu0 0.0
        %1493 = vmatpush.msra.mxu0 0.0
        %1494 = vmatpush.msra.mxu0 0.0
        %1495 = vmatpush.msra.mxu0 %v1454
        %1496 = vmatmul.f32.gmra.mxu0 %v1458
        %v1497 = vpop.f32.mrf.mxu0
        %v1498 = vadd.f32 0.0, %v1497
        %1499 = vdwg.mxu0
        %1500 = vmatpush.msra.mxu0 0.0
        %1501 = vmatpush.msra.mxu0 0.0
        %1502 = vmatpush.msra.mxu0 0.0
        %1503 = vmatpush.msra.mxu0 0.0
        %1504 = vmatpush.msra.mxu0 0.0
        %1505 = vmatpush.msra.mxu0 0.0
        %1506 = vmatpush.msra.mxu0 0.0
        %1507 = vmatpush.msra.mxu0 0.0
        %1508 = vmatpush.msra.mxu0 0.0
        %1509 = vmatpush.msra.mxu0 0.0
        %1510 = vmatpush.msra.mxu0 0.0
        %1511 = vmatpush.msra.mxu0 0.0
        %1512 = vmatpush.msra.mxu0 0.0
        %1513 = vmatpush.msra.mxu0 0.0
        %1514 = vmatpush.msra.mxu0 0.0
        %1515 = vmatpush.msra.mxu0 %v1455
        %1516 = vmatmul.f32.gmra.mxu0 %v1458
        %v1517 = vpop.f32.mrf.mxu0
        %v1518 = vadd.f32 0.0, %v1517
        %1519 = vdwg.mxu0
        %v1521 = vsel %vm486, %v1050, 0
        %1523 = vmatpush.msra.mxu0 0.0
        %1524 = vmatpush.msra.mxu0 0.0
        %1525 = vmatpush.msra.mxu0 0.0
        %1526 = vmatpush.msra.mxu0 0.0
        %1527 = vmatpush.msra.mxu0 0.0
        %1528 = vmatpush.msra.mxu0 0.0
        %1529 = vmatpush.msra.mxu0 0.0
        %1530 = vmatpush.msra.mxu0 0.0
        %1531 = vmatpush.msra.mxu0 0.0
        %1532 = vmatpush.msra.mxu0 0.0
        %1533 = vmatpush.msra.mxu0 0.0
        %1534 = vmatpush.msra.mxu0 0.0
        %1535 = vmatpush.msra.mxu0 0.0
        %1536 = vmatpush.msra.mxu0 0.0
        %1537 = vmatpush.msra.mxu0 0.0
        %1538 = vmatpush.msra.mxu0 %v1047
        %1539 = vmatmul.f32.gmra.mxu0 %v1521
        %v1540 = vpop.f32.mrf.mxu0
        %v1541 = vadd.f32 %v1478, %v1540
        %1542 = vdwg.mxu0
        %1543 = vmatpush.msra.mxu0 0.0
        %1544 = vmatpush.msra.mxu0 0.0
        %1545 = vmatpush.msra.mxu0 0.0
        %1546 = vmatpush.msra.mxu0 0.0
        %1547 = vmatpush.msra.mxu0 0.0
        %1548 = vmatpush.msra.mxu0 0.0
        %1549 = vmatpush.msra.mxu0 0.0
        %1550 = vmatpush.msra.mxu0 0.0
        %1551 = vmatpush.msra.mxu0 0.0
        %1552 = vmatpush.msra.mxu0 0.0
        %1553 = vmatpush.msra.mxu0 0.0
        %1554 = vmatpush.msra.mxu0 0.0
        %1555 = vmatpush.msra.mxu0 0.0
        %1556 = vmatpush.msra.mxu0 0.0
        %1557 = vmatpush.msra.mxu0 0.0
        %1558 = vmatpush.msra.mxu0 %v1048
        %1559 = vmatmul.f32.gmra.mxu0 %v1521
        %v1560 = vpop.f32.mrf.mxu0
        %v1561 = vadd.f32 %v1498, %v1560
        %1562 = vdwg.mxu0
        %1563 = vmatpush.msra.mxu0 0.0
        %1564 = vmatpush.msra.mxu0 0.0
        %1565 = vmatpush.msra.mxu0 0.0
        %1566 = vmatpush.msra.mxu0 0.0
        %1567 = vmatpush.msra.mxu0 0.0
        %1568 = vmatpush.msra.mxu0 0.0
        %1569 = vmatpush.msra.mxu0 0.0
        %1570 = vmatpush.msra.mxu0 0.0
        %1571 = vmatpush.msra.mxu0 0.0
        %1572 = vmatpush.msra.mxu0 0.0
        %1573 = vmatpush.msra.mxu0 0.0
        %1574 = vmatpush.msra.mxu0 0.0
        %1575 = vmatpush.msra.mxu0 0.0
        %1576 = vmatpush.msra.mxu0 0.0
        %1577 = vmatpush.msra.mxu0 0.0
        %1578 = vmatpush.msra.mxu0 %v1049
        %1579 = vmatmul.f32.gmra.mxu0 %v1521
        %v1580 = vpop.f32.mrf.mxu0
        %v1581 = vadd.f32 %v1518, %v1580
        %1582 = vdwg.mxu0
        %v1583 = vld [vmem:[%s2 + $0x98] sm:$0xff]
        %1585 = vset.pattern.permute.xlu0 0
        %1586 = vperm.xlu0 %1585, %v1583
        %v1587 = vpop.permute.xlu0 %1586
        %v1589 = vadd.f32 %v1541, %v1587
        %v1590 = vadd.f32 %v1561, %v1587
        %v1591 = vadd.f32 %v1581, %v1587
        %1592 = vst [vmem:[%s379 - $0x4] sm:$0xf0] %v1590
        %v1593 = vmul.f32 %v1589, 1.442695
        %v1594 = vpow.pop %v1593
        %v1595 = vmul.f32 %v1590, 1.442695
        %v1596 = vpow.pop %v1595
        %v1597 = vmul.f32 %v1591, 1.442695
        %v1598 = vpow.pop %v1597
        %v1599 = vmul.f32 %v1594, %v511
        %v1600 = vmul.f32 %v1596, %v534
        %v1601 = vmul.f32 %v1598, %v557
        %v1605 = vrot.slane %v1589, 4
        %v1606 = vrot.slane %v1590, 4
        %v1607 = vrot.slane %v1591, 4
        %v1611 = vadd.f32 %v1599, %v1605
        %v1612 = vadd.f32 %v1600, %v1606
        %v1613 = vadd.f32 %v1601, %v1607
        %v1614 = vsel %vm648, %v511, %v1611
        %v1615 = vsel %vm648, %v534, %v1612
        %v1616 = vsel %vm648, %v557, %v1613
        %v1617 = vsel %vm718, %v1614, 0.0
        %v1618 = vsel %vm719, %v1615, 0.0
        %v1619 = vsel %vm720, %v1616, 0.0
        %v1620 = vld [vmem:[%s2 + $0xa0] sm:$0xff]
        %v1621 = vld [vmem:[%s2 + $0xa8] sm:$0xff]
        %v1623 = vsel %vm486, %v1620, 0
        %v1626 = vsel %vm486, %v1621, 0
        %1628 = vmatpush.msra.mxu0 0.0
        %1629 = vmatpush.msra.mxu0 0.0
        %1630 = vmatpush.msra.mxu0 0.0
        %1631 = vmatpush.msra.mxu0 0.0
        %1632 = vmatpush.msra.mxu0 0.0
        %1633 = vmatpush.msra.mxu0 0.0
        %1634 = vmatpush.msra.mxu0 0.0
        %1635 = vmatpush.msra.mxu0 0.0
        %1636 = vmatpush.msra.mxu0 0.0
        %1637 = vmatpush.msra.mxu0 0.0
        %1638 = vmatpush.msra.mxu0 0.0
        %1639 = vmatpush.msra.mxu0 0.0
        %1640 = vmatpush.msra.mxu0 0.0
        %1641 = vmatpush.msra.mxu0 0.0
        %1642 = vmatpush.msra.mxu0 0.0
        %1643 = vmatpush.msra.mxu0 %v1617
        %1644 = vmatmul.f32.gmra.mxu0 %v1623
        %v1645 = vpop.f32.mrf.mxu0
        %v1646 = vadd.f32 0.0, %v1645
        %1647 = vmatmul.f32.gmra.mxu0 %v1626
        %v1648 = vpop.f32.mrf.mxu0
        %v1649 = vadd.f32 0.0, %v1648
        %1650 = vdwg.mxu0
        %1651 = vmatpush.msra.mxu0 0.0
        %1652 = vmatpush.msra.mxu0 0.0
        %1653 = vmatpush.msra.mxu0 0.0
        %1654 = vmatpush.msra.mxu0 0.0
        %1655 = vmatpush.msra.mxu0 0.0
        %1656 = vmatpush.msra.mxu0 0.0
        %1657 = vmatpush.msra.mxu0 0.0
        %1658 = vmatpush.msra.mxu0 0.0
        %1659 = vmatpush.msra.mxu0 0.0
        %1660 = vmatpush.msra.mxu0 0.0
        %1661 = vmatpush.msra.mxu0 0.0
        %1662 = vmatpush.msra.mxu0 0.0
        %1663 = vmatpush.msra.mxu0 0.0
        %1664 = vmatpush.msra.mxu0 0.0
        %1665 = vmatpush.msra.mxu0 0.0
        %1666 = vmatpush.msra.mxu0 %v1618
        %1667 = vmatmul.f32.gmra.mxu0 %v1623
        %v1668 = vpop.f32.mrf.mxu0
        %v1669 = vadd.f32 0.0, %v1668
        %1670 = vmatmul.f32.gmra.mxu0 %v1626
        %v1671 = vpop.f32.mrf.mxu0
        %v1672 = vadd.f32 0.0, %v1671
        %1673 = vdwg.mxu0
        %1674 = vmatpush.msra.mxu0 0.0
        %1675 = vmatpush.msra.mxu0 0.0
        %1676 = vmatpush.msra.mxu0 0.0
        %1677 = vmatpush.msra.mxu0 0.0
        %1678 = vmatpush.msra.mxu0 0.0
        %1679 = vmatpush.msra.mxu0 0.0
        %1680 = vmatpush.msra.mxu0 0.0
        %1681 = vmatpush.msra.mxu0 0.0
        %1682 = vmatpush.msra.mxu0 0.0
        %1683 = vmatpush.msra.mxu0 0.0
        %1684 = vmatpush.msra.mxu0 0.0
        %1685 = vmatpush.msra.mxu0 0.0
        %1686 = vmatpush.msra.mxu0 0.0
        %1687 = vmatpush.msra.mxu0 0.0
        %1688 = vmatpush.msra.mxu0 0.0
        %1689 = vmatpush.msra.mxu0 %v1619
        %1690 = vmatmul.f32.gmra.mxu0 %v1623
        %v1691 = vpop.f32.mrf.mxu0
        %v1692 = vadd.f32 0.0, %v1691
        %1693 = vmatmul.f32.gmra.mxu0 %v1626
        %v1694 = vpop.f32.mrf.mxu0
        %v1695 = vadd.f32 0.0, %v1694
        %1696 = vdwg.mxu0
        %v1697 = vld [vmem:[%s2 + $0xb0] sm:$0xff]
        %1699 = vset.pattern.permute.xlu0 0
        %1700 = vperm.xlu0 %1699, %v1697
        %v1701 = vpop.permute.xlu0 %1700
        %v1703 = vadd.f32 %v1649, %v1701
        %v1704 = vadd.f32 %v1672, %v1701
        %v1705 = vadd.f32 %v1695, %v1701
        %v1706 = vld [vmem:[%s2 + $0xb8] sm:$0xff]
        %v1707 = vld [vmem:[%s2 + $0xc0] sm:$0xff]
        %v1708 = vld [vmem:[%s2 + $0xc8] sm:$0xff]
        %v1709 = vld [vmem:[%s2 + $0xd0] sm:$0xff]
        %v1710 = vpack.c.bf16 %v1707, %v1706
        %v1711 = vpack.c.bf16 %v1709, %v1708
        %v1712 = vld [vmem:[%s2 + $0xd8] sm:$0xff]
        %v1713 = vld [vmem:[%s2 + $0xe0] sm:$0xff]
        %v1714 = vld [vmem:[%s2 + $0xe8] sm:$0xff]
        %v1715 = vld [vmem:[%s2 + $0xf0] sm:$0xff]
        %1717 = vset.pattern.permute.xlu0 0
        %1718 = vperm.xlu0 %1717, %v1712
        %v1719 = vpop.permute.xlu0 %1718
        %1722 = vset.pattern.permute.xlu0 0
        %1723 = vperm.xlu0 %1722, %v1713
        %v1724 = vpop.permute.xlu0 %1723
        %1727 = vset.pattern.permute.xlu0 0
        %1728 = vperm.xlu0 %1727, %v1714
        %v1729 = vpop.permute.xlu0 %1728
        %1732 = vset.pattern.permute.xlu0 0
        %1733 = vperm.xlu0 %1732, %v1715
        %v1734 = vpop.permute.xlu0 %1733
        %v1737 = vsel %vm641, %v1710, 0
        %v1740 = vsel %vm641, %v1711, 0
        %1742 = vmatpush.bf16.msra.mxu0 0
        %1743 = vmatpush.bf16.msra.mxu0 0
        %1744 = vmatpush.bf16.msra.mxu0 0
        %1745 = vmatpush.bf16.msra.mxu0 0
        %1746 = vmatpush.bf16.msra.mxu0 0
        %1747 = vmatpush.bf16.msra.mxu0 %v650
        %1748 = vmatpush.bf16.msra.mxu0 %v629
        %1749 = vmatpush.bf16.msra.mxu0 %v626
        %1750 = vmatmul.bf16.gmra.mxu0 %v1737
        %v1751 = vpop.f32.mrf.mxu0
        %v1752 = vadd.f32 %v1719, %v1751
        %v1753 = vpop.f32.mrf.mxu0
        %v1754 = vadd.f32 %v1724, %v1753
        %1755 = vmatmul.bf16.gmra.mxu0 %v1740
        %v1756 = vpop.f32.mrf.mxu0
        %v1757 = vadd.f32 %v1729, %v1756
        %v1758 = vpop.f32.mrf.mxu0
        %v1759 = vadd.f32 %v1734, %v1758
        %1760 = vdwg.mxu0
        %1761 = vmatpush.bf16.msra.mxu0 0
        %1762 = vmatpush.bf16.msra.mxu0 0
        %1763 = vmatpush.bf16.msra.mxu0 0
        %1764 = vmatpush.bf16.msra.mxu0 0
        %1765 = vmatpush.bf16.msra.mxu0 0
        %1766 = vmatpush.bf16.msra.mxu0 %v653
        %1767 = vmatpush.bf16.msra.mxu0 %v630
        %1768 = vmatpush.bf16.msra.mxu0 %v627
        %1769 = vmatmul.bf16.gmra.mxu0 %v1737
        %v1770 = vpop.f32.mrf.mxu0
        %v1771 = vadd.f32 %v1719, %v1770
        %v1772 = vpop.f32.mrf.mxu0
        %v1773 = vadd.f32 %v1724, %v1772
        %1774 = vmatmul.bf16.gmra.mxu0 %v1740
        %v1775 = vpop.f32.mrf.mxu0
        %v1776 = vadd.f32 %v1729, %v1775
        %v1777 = vpop.f32.mrf.mxu0
        %v1778 = vadd.f32 %v1734, %v1777
        %1779 = vdwg.mxu0
        %1780 = vmatpush.bf16.msra.mxu0 0
        %1781 = vmatpush.bf16.msra.mxu0 0
        %1782 = vmatpush.bf16.msra.mxu0 0
        %1783 = vmatpush.bf16.msra.mxu0 0
        %1784 = vmatpush.bf16.msra.mxu0 0
        %1785 = vmatpush.bf16.msra.mxu0 %v656
        %1786 = vmatpush.bf16.msra.mxu0 %v631
        %1787 = vmatpush.bf16.msra.mxu0 %v628
        %1788 = vmatmul.bf16.gmra.mxu0 %v1737
        %v1789 = vpop.f32.mrf.mxu0
        %v1790 = vadd.f32 %v1719, %v1789
        %v1791 = vpop.f32.mrf.mxu0
        %v1792 = vadd.f32 %v1724, %v1791
        %1793 = vmatmul.bf16.gmra.mxu0 %v1740
        %v1794 = vpop.f32.mrf.mxu0
        %v1795 = vadd.f32 %v1729, %v1794
        %v1796 = vpop.f32.mrf.mxu0
        %v1797 = vadd.f32 %v1734, %v1796
        %1798 = vdwg.mxu0
        %v1799 = vsel %vm718, %v1703, 0.0
        %v1800 = vsel %vm719, %v1704, 0.0
        %v1801 = vsel %vm720, %v1705, 0.0
        %1802 = vrot.lane.b32.xlu0 %v1799, 1
        %v1803 = vpop.permute.xlu0 %1802
        %1804 = vrot.lane.b32.xlu0 %v1800, 1
        %v1805 = vpop.permute.xlu0 %1804
        %1806 = vrot.lane.b32.xlu0 %v1801, 1
        %v1807 = vpop.permute.xlu0 %1806
        %v1808 = vsel %vm730, %v1805, %v1807
        %v1809 = vsel %vm730, %v1803, %v1805
        %v1810 = vsel %vm730, %v1807, %v1803
        %1811 = vrot.lane.b32.xlu0 %v1799, 127
        %v1812 = vpop.permute.xlu0 %1811
        %1813 = vrot.lane.b32.xlu0 %v1800, 127
        %v1814 = vpop.permute.xlu0 %1813
        %1815 = vrot.lane.b32.xlu0 %v1801, 127
        %v1816 = vpop.permute.xlu0 %1815
        %v1817 = vsel %vm740, %v1814, %v1816
        %v1818 = vsel %vm740, %v1812, %v1814
        %v1819 = vsel %vm740, %v1816, %v1812
        %v1820 = vld [vmem:[%s2 + $0xf8] sm:$0xff]
        %v1821 = vld [vmem:[%s2 + $0x100] sm:$0xff]
        %1824 = vrot.lane.b32.xlu0 %v1820, 120
        %v1825 = vpop.permute.xlu0 %1824
        %1826 = vrot.lane.b32.xlu0 %v1821, 120
        %v1827 = vpop.permute.xlu0 %1826
        %v1828 = vsel %vm486, %v1825, 0
        %v1830 = vsel %vm486, %v1827, 0
        %1832 = vmatpush.msra.mxu0 0.0
        %1833 = vmatpush.msra.mxu0 0.0
        %1834 = vmatpush.msra.mxu0 0.0
        %1835 = vmatpush.msra.mxu0 0.0
        %1836 = vmatpush.msra.mxu0 0.0
        %1837 = vmatpush.msra.mxu0 0.0
        %1838 = vmatpush.msra.mxu0 0.0
        %1839 = vmatpush.msra.mxu0 0.0
        %1840 = vmatpush.msra.mxu0 0.0
        %1841 = vmatpush.msra.mxu0 0.0
        %1842 = vmatpush.msra.mxu0 0.0
        %1843 = vmatpush.msra.mxu0 0.0
        %1844 = vmatpush.msra.mxu0 0.0
        %1845 = vmatpush.msra.mxu0 0.0
        %1846 = vmatpush.msra.mxu0 0.0
        %1847 = vmatpush.msra.mxu0 %v1799
        %1848 = vmatmul.f32.gmra.mxu0 %v1828
        %v1849 = vpop.f32.mrf.mxu0
        %v1850 = vadd.f32 0.0, %v1849
        %1851 = vmatmul.f32.gmra.mxu0 %v1830
        %v1852 = vpop.f32.mrf.mxu0
        %v1853 = vadd.f32 0.0, %v1852
        %1854 = vdwg.mxu0
        %1855 = vmatpush.msra.mxu0 0.0
        %1856 = vmatpush.msra.mxu0 0.0
        %1857 = vmatpush.msra.mxu0 0.0
        %1858 = vmatpush.msra.mxu0 0.0
        %1859 = vmatpush.msra.mxu0 0.0
        %1860 = vmatpush.msra.mxu0 0.0
        %1861 = vmatpush.msra.mxu0 0.0
        %1862 = vmatpush.msra.mxu0 0.0
        %1863 = vmatpush.msra.mxu0 0.0
        %1864 = vmatpush.msra.mxu0 0.0
        %1865 = vmatpush.msra.mxu0 0.0
        %1866 = vmatpush.msra.mxu0 0.0
        %1867 = vmatpush.msra.mxu0 0.0
        %1868 = vmatpush.msra.mxu0 0.0
        %1869 = vmatpush.msra.mxu0 0.0
        %1870 = vmatpush.msra.mxu0 %v1800
        %1871 = vmatmul.f32.gmra.mxu0 %v1828
        %v1872 = vpop.f32.mrf.mxu0
        %v1873 = vadd.f32 0.0, %v1872
        %1874 = vmatmul.f32.gmra.mxu0 %v1830
        %v1875 = vpop.f32.mrf.mxu0
        %v1876 = vadd.f32 0.0, %v1875
        %1877 = vdwg.mxu0
        %1878 = vmatpush.msra.mxu0 0.0
        %1879 = vmatpush.msra.mxu0 0.0
        %1880 = vmatpush.msra.mxu0 0.0
        %1881 = vmatpush.msra.mxu0 0.0
        %1882 = vmatpush.msra.mxu0 0.0
        %1883 = vmatpush.msra.mxu0 0.0
        %1884 = vmatpush.msra.mxu0 0.0
        %1885 = vmatpush.msra.mxu0 0.0
        %1886 = vmatpush.msra.mxu0 0.0
        %1887 = vmatpush.msra.mxu0 0.0
        %1888 = vmatpush.msra.mxu0 0.0
        %1889 = vmatpush.msra.mxu0 0.0
        %1890 = vmatpush.msra.mxu0 0.0
        %1891 = vmatpush.msra.mxu0 0.0
        %1892 = vmatpush.msra.mxu0 0.0
        %1893 = vmatpush.msra.mxu0 %v1801
        %1894 = vmatmul.f32.gmra.mxu0 %v1828
        %v1895 = vpop.f32.mrf.mxu0
        %v1896 = vadd.f32 0.0, %v1895
        %1897 = vmatmul.f32.gmra.mxu0 %v1830
        %v1898 = vpop.f32.mrf.mxu0
        %v1899 = vadd.f32 0.0, %v1898
        %1900 = vdwg.mxu0
        %v1901 = vsel %vm486, %v1820, 0
        %v1903 = vsel %vm486, %v1821, 0
        %1905 = vmatpush.msra.mxu0 0.0
        %1906 = vmatpush.msra.mxu0 0.0
        %1907 = vmatpush.msra.mxu0 0.0
        %1908 = vmatpush.msra.mxu0 0.0
        %1909 = vmatpush.msra.mxu0 0.0
        %1910 = vmatpush.msra.mxu0 0.0
        %1911 = vmatpush.msra.mxu0 0.0
        %1912 = vmatpush.msra.mxu0 0.0
        %1913 = vmatpush.msra.mxu0 0.0
        %1914 = vmatpush.msra.mxu0 0.0
        %1915 = vmatpush.msra.mxu0 0.0
        %1916 = vmatpush.msra.mxu0 0.0
        %1917 = vmatpush.msra.mxu0 0.0
        %1918 = vmatpush.msra.mxu0 0.0
        %1919 = vmatpush.msra.mxu0 0.0
        %1920 = vmatpush.msra.mxu0 %v1810
        %1921 = vmatmul.f32.gmra.mxu0 %v1901
        %v1922 = vpop.f32.mrf.mxu0
        %v1923 = vadd.f32 %v1850, %v1922
        %1924 = vmatmul.f32.gmra.mxu0 %v1903
        %v1925 = vpop.f32.mrf.mxu0
        %v1926 = vadd.f32 %v1853, %v1925
        %1927 = vdwg.mxu0
        %1928 = vmatpush.msra.mxu0 0.0
        %1929 = vmatpush.msra.mxu0 0.0
        %1930 = vmatpush.msra.mxu0 0.0
        %1931 = vmatpush.msra.mxu0 0.0
        %1932 = vmatpush.msra.mxu0 0.0
        %1933 = vmatpush.msra.mxu0 0.0
        %1934 = vmatpush.msra.mxu0 0.0
        %1935 = vmatpush.msra.mxu0 0.0
        %1936 = vmatpush.msra.mxu0 0.0
        %1937 = vmatpush.msra.mxu0 0.0
        %1938 = vmatpush.msra.mxu0 0.0
        %1939 = vmatpush.msra.mxu0 0.0
        %1940 = vmatpush.msra.mxu0 0.0
        %1941 = vmatpush.msra.mxu0 0.0
        %1942 = vmatpush.msra.mxu0 0.0
        %1943 = vmatpush.msra.mxu0 %v1809
        %1944 = vmatmul.f32.gmra.mxu0 %v1901
        %v1945 = vpop.f32.mrf.mxu0
        %v1946 = vadd.f32 %v1873, %v1945
        %1947 = vmatmul.f32.gmra.mxu0 %v1903
        %v1948 = vpop.f32.mrf.mxu0
        %v1949 = vadd.f32 %v1876, %v1948
        %1950 = vdwg.mxu0
        %1951 = vmatpush.msra.mxu0 0.0
        %1952 = vmatpush.msra.mxu0 0.0
        %1953 = vmatpush.msra.mxu0 0.0
        %1954 = vmatpush.msra.mxu0 0.0
        %1955 = vmatpush.msra.mxu0 0.0
        %1956 = vmatpush.msra.mxu0 0.0
        %1957 = vmatpush.msra.mxu0 0.0
        %1958 = vmatpush.msra.mxu0 0.0
        %1959 = vmatpush.msra.mxu0 0.0
        %1960 = vmatpush.msra.mxu0 0.0
        %1961 = vmatpush.msra.mxu0 0.0
        %1962 = vmatpush.msra.mxu0 0.0
        %1963 = vmatpush.msra.mxu0 0.0
        %1964 = vmatpush.msra.mxu0 0.0
        %1965 = vmatpush.msra.mxu0 0.0
        %1966 = vmatpush.msra.mxu0 %v1808
        %1967 = vmatmul.f32.gmra.mxu0 %v1901
        %v1968 = vpop.f32.mrf.mxu0
        %v1969 = vadd.f32 %v1896, %v1968
        %1970 = vmatmul.f32.gmra.mxu0 %v1903
        %v1971 = vpop.f32.mrf.mxu0
        %v1972 = vadd.f32 %v1899, %v1971
        %1973 = vdwg.mxu0
        %1974 = vrot.lane.b32.xlu0 %v1820, 112
        %v1975 = vpop.permute.xlu0 %1974
        %1976 = vrot.lane.b32.xlu0 %v1821, 112
        %v1977 = vpop.permute.xlu0 %1976
        %v1978 = vsel %vm486, %v1975, 0
        %v1980 = vsel %vm486, %v1977, 0
        %1982 = vmatpush.msra.mxu0 0.0
        %1983 = vmatpush.msra.mxu0 0.0
        %1984 = vmatpush.msra.mxu0 0.0
        %1985 = vmatpush.msra.mxu0 0.0
        %1986 = vmatpush.msra.mxu0 0.0
        %1987 = vmatpush.msra.mxu0 0.0
        %1988 = vmatpush.msra.mxu0 0.0
        %1989 = vmatpush.msra.mxu0 0.0
        %1990 = vmatpush.msra.mxu0 0.0
        %1991 = vmatpush.msra.mxu0 0.0
        %1992 = vmatpush.msra.mxu0 0.0
        %1993 = vmatpush.msra.mxu0 0.0
        %1994 = vmatpush.msra.mxu0 0.0
        %1995 = vmatpush.msra.mxu0 0.0
        %1996 = vmatpush.msra.mxu0 0.0
        %1997 = vmatpush.msra.mxu0 %v1818
        %1998 = vmatmul.f32.gmra.mxu0 %v1978
        %v1999 = vpop.f32.mrf.mxu0
        %v2000 = vadd.f32 0.0, %v1999
        %2001 = vmatmul.f32.gmra.mxu0 %v1980
        %v2002 = vpop.f32.mrf.mxu0
        %v2003 = vadd.f32 0.0, %v2002
        %2004 = vdwg.mxu0
        %2005 = vmatpush.msra.mxu0 0.0
        %2006 = vmatpush.msra.mxu0 0.0
        %2007 = vmatpush.msra.mxu0 0.0
        %2008 = vmatpush.msra.mxu0 0.0
        %2009 = vmatpush.msra.mxu0 0.0
        %2010 = vmatpush.msra.mxu0 0.0
        %2011 = vmatpush.msra.mxu0 0.0
        %2012 = vmatpush.msra.mxu0 0.0
        %2013 = vmatpush.msra.mxu0 0.0
        %2014 = vmatpush.msra.mxu0 0.0
        %2015 = vmatpush.msra.mxu0 0.0
        %2016 = vmatpush.msra.mxu0 0.0
        %2017 = vmatpush.msra.mxu0 0.0
        %2018 = vmatpush.msra.mxu0 0.0
        %2019 = vmatpush.msra.mxu0 0.0
        %2020 = vmatpush.msra.mxu0 %v1817
        %2021 = vmatmul.f32.gmra.mxu0 %v1978
        %v2022 = vpop.f32.mrf.mxu0
        %v2023 = vadd.f32 0.0, %v2022
        %2024 = vmatmul.f32.gmra.mxu0 %v1980
        %v2025 = vpop.f32.mrf.mxu0
        %v2026 = vadd.f32 0.0, %v2025
        %2027 = vdwg.mxu0
        %2028 = vmatpush.msra.mxu0 0.0
        %2029 = vmatpush.msra.mxu0 0.0
        %2030 = vmatpush.msra.mxu0 0.0
        %2031 = vmatpush.msra.mxu0 0.0
        %2032 = vmatpush.msra.mxu0 0.0
        %2033 = vmatpush.msra.mxu0 0.0
        %2034 = vmatpush.msra.mxu0 0.0
        %2035 = vmatpush.msra.mxu0 0.0
        %2036 = vmatpush.msra.mxu0 0.0
        %2037 = vmatpush.msra.mxu0 0.0
        %2038 = vmatpush.msra.mxu0 0.0
        %2039 = vmatpush.msra.mxu0 0.0
        %2040 = vmatpush.msra.mxu0 0.0
        %2041 = vmatpush.msra.mxu0 0.0
        %2042 = vmatpush.msra.mxu0 0.0
        %2043 = vmatpush.msra.mxu0 %v1819
        %2044 = vmatmul.f32.gmra.mxu0 %v1978
        %v2045 = vpop.f32.mrf.mxu0
        %v2046 = vadd.f32 0.0, %v2045
        %2047 = vmatmul.f32.gmra.mxu0 %v1980
        %v2048 = vpop.f32.mrf.mxu0
        %v2049 = vadd.f32 0.0, %v2048
        %2050 = vdwg.mxu0
        %v2051 = vadd.f32 %v1923, %v2000
        %v2052 = vadd.f32 %v1946, %v2023
        %v2053 = vadd.f32 %v1969, %v2046
        %v2054 = vadd.f32 %v1926, %v2003
        %v2055 = vadd.f32 %v1949, %v2026
        %v2056 = vadd.f32 %v1972, %v2049
        %v2057 = vadd.f32 %v2051, %v1752
        %v2058 = vadd.f32 %v2052, %v1771
        %v2059 = vadd.f32 %v2053, %v1790
        %v2060 = vadd.f32 %v2054, %v1754
        %v2061 = vadd.f32 %v2055, %v1773
        %v2062 = vadd.f32 %v2056, %v1792
        %v2063 = vtanh.pop %v2057
        %v2064 = vtanh.pop %v2058
        %v2065 = vtanh.pop %v2059
        %v2066 = vxor.u32 %v2060, 2147483648
        %v2067 = vxor.u32 %v2061, 2147483648
        %v2068 = vxor.u32 %v2062, 2147483648
        %v2069 = vmul.f32 %v2066, 1.442695
        %v2070 = vpow.pop %v2069
        %v2071 = vmul.f32 %v2067, 1.442695
        %v2072 = vpow.pop %v2071
        %v2073 = vmul.f32 %v2068, 1.442695
        %v2074 = vpow.pop %v2073
        %v2075 = vadd.f32 %v2070, 1.0
        %v2076 = vadd.f32 %v2072, 1.0
        %v2077 = vadd.f32 %v2074, 1.0
        %v2078 = vrcp.pop %v2075
        %v2079 = vmul.f32 %v2075, %v2078
        %v2080 = vsub.f32 1.0, %v2079
        %v2081 = vmul.f32 %v2078, %v2080
        %v2082 = vadd.f32 %v2078, %v2081
        %vm2083 = vweird.f32 %v2075
        %vm2084 = vweird.f32 %v2078
        %vm2085 = vmor %vm2083, %vm2084
        %v2086 = vsel %vm2085, %v2078, %v2082
        %v2087 = vand.u32 2147483647, %v2075
        %vm2088 = vcmp.eq.f32.partialorder %v2087, 8.507059e+37
        %v2089 = vand.u32 %v2075, 2147483648
        %v2090 = vor.u32 1.1754944e-38, %v2089
        %v2091 = vsel %vm2088, %v2090, %v2086
        %v2092 = vmul.f32 1.0, %v2091
        %v2093 = vrcp.pop %v2076
        %v2094 = vmul.f32 %v2076, %v2093
        %v2095 = vsub.f32 1.0, %v2094
        %v2096 = vmul.f32 %v2093, %v2095
        %v2097 = vadd.f32 %v2093, %v2096
        %vm2098 = vweird.f32 %v2076
        %vm2099 = vweird.f32 %v2093
        %vm2100 = vmor %vm2098, %vm2099
        %v2101 = vsel %vm2100, %v2093, %v2097
        %v2102 = vand.u32 2147483647, %v2076
        %vm2103 = vcmp.eq.f32.partialorder %v2102, 8.507059e+37
        %v2104 = vand.u32 %v2076, 2147483648
        %v2105 = vor.u32 1.1754944e-38, %v2104
        %v2106 = vsel %vm2103, %v2105, %v2101
        %v2107 = vmul.f32 1.0, %v2106
        %v2108 = vrcp.pop %v2077
        %v2109 = vmul.f32 %v2077, %v2108
        %v2110 = vsub.f32 1.0, %v2109
        %v2111 = vmul.f32 %v2108, %v2110
        %v2112 = vadd.f32 %v2108, %v2111
        %vm2113 = vweird.f32 %v2077
        %vm2114 = vweird.f32 %v2108
        %vm2115 = vmor %vm2113, %vm2114
        %v2116 = vsel %vm2115, %v2108, %v2112
        %v2117 = vand.u32 2147483647, %v2077
        %vm2118 = vcmp.eq.f32.partialorder %v2117, 8.507059e+37
        %v2119 = vand.u32 %v2077, 2147483648
        %v2120 = vor.u32 1.1754944e-38, %v2119
        %v2121 = vsel %vm2118, %v2120, %v2116
        %v2122 = vmul.f32 1.0, %v2121
        %v2123 = vmul.f32 %v2063, %v2092
        %v2124 = vmul.f32 %v2064, %v2107
        %v2125 = vmul.f32 %v2065, %v2122
        %v2126 = vld [vmem:[%s2 + $0x128] sm:$0xff]
        %v2127 = vld [vmem:[%s2 + $0x118] sm:$0xff]
        %v2129 = vsel %vm486, %v2127, 0
        %2131 = vmatpush.msra.mxu0 0.0
        %2132 = vmatpush.msra.mxu0 0.0
        %2133 = vmatpush.msra.mxu0 0.0
        %2134 = vmatpush.msra.mxu0 0.0
        %2135 = vmatpush.msra.mxu0 0.0
        %2136 = vmatpush.msra.mxu0 0.0
        %2137 = vmatpush.msra.mxu0 0.0
        %2138 = vmatpush.msra.mxu0 0.0
        %2139 = vmatpush.msra.mxu0 0.0
        %2140 = vmatpush.msra.mxu0 0.0
        %2141 = vmatpush.msra.mxu0 0.0
        %2142 = vmatpush.msra.mxu0 0.0
        %2143 = vmatpush.msra.mxu0 0.0
        %2144 = vmatpush.msra.mxu0 0.0
        %2145 = vmatpush.msra.mxu0 0.0
        %2146 = vmatpush.msra.mxu0 %v2123
        %2147 = vmatmul.f32.gmra.mxu0 %v2129
        %v2148 = vpop.f32.mrf.mxu0
        %v2149 = vadd.f32 0.0, %v2148
        %2150 = vdwg.mxu0
        %2151 = vmatpush.msra.mxu0 0.0
        %2152 = vmatpush.msra.mxu0 0.0
        %2153 = vmatpush.msra.mxu0 0.0
        %2154 = vmatpush.msra.mxu0 0.0
        %2155 = vmatpush.msra.mxu0 0.0
        %2156 = vmatpush.msra.mxu0 0.0
        %2157 = vmatpush.msra.mxu0 0.0
        %2158 = vmatpush.msra.mxu0 0.0
        %2159 = vmatpush.msra.mxu0 0.0
        %2160 = vmatpush.msra.mxu0 0.0
        %2161 = vmatpush.msra.mxu0 0.0
        %2162 = vmatpush.msra.mxu0 0.0
        %2163 = vmatpush.msra.mxu0 0.0
        %2164 = vmatpush.msra.mxu0 0.0
        %2165 = vmatpush.msra.mxu0 0.0
        %2166 = vmatpush.msra.mxu0 %v2124
        %2167 = vmatmul.f32.gmra.mxu0 %v2129
        %v2168 = vpop.f32.mrf.mxu0
        %v2169 = vadd.f32 0.0, %v2168
        %2170 = vdwg.mxu0
        %2171 = vmatpush.msra.mxu0 0.0
        %2172 = vmatpush.msra.mxu0 0.0
        %2173 = vmatpush.msra.mxu0 0.0
        %2174 = vmatpush.msra.mxu0 0.0
        %2175 = vmatpush.msra.mxu0 0.0
        %2176 = vmatpush.msra.mxu0 0.0
        %2177 = vmatpush.msra.mxu0 0.0
        %2178 = vmatpush.msra.mxu0 0.0
        %2179 = vmatpush.msra.mxu0 0.0
        %2180 = vmatpush.msra.mxu0 0.0
        %2181 = vmatpush.msra.mxu0 0.0
        %2182 = vmatpush.msra.mxu0 0.0
        %2183 = vmatpush.msra.mxu0 0.0
        %2184 = vmatpush.msra.mxu0 0.0
        %2185 = vmatpush.msra.mxu0 0.0
        %2186 = vmatpush.msra.mxu0 %v2125
        %2187 = vmatmul.f32.gmra.mxu0 %v2129
        %v2188 = vpop.f32.mrf.mxu0
        %v2189 = vadd.f32 0.0, %v2188
        %2190 = vdwg.mxu0
        %v2191 = vadd.f32 %v1703, %v2149
        %v2192 = vadd.f32 %v1704, %v2169
        %v2193 = vadd.f32 %v1705, %v2189
        %v2194 = vld [vmem:[%s2 + $0x120] sm:$0xff]
        %2196 = vset.pattern.permute.xlu0 0
        %2197 = vperm.xlu0 %2196, %v2194
        %v2198 = vpop.permute.xlu0 %2197
        %v2200 = vadd.f32 %v2191, %v2198
        %v2201 = vadd.f32 %v2192, %v2198
        %v2202 = vadd.f32 %v2193, %v2198
        %v2203 = vsel %vm718, %v2200, 0.0
        %v2204 = vsel %vm719, %v2201, 0.0
        %v2205 = vsel %vm720, %v2202, 0.0
        %2206 = vrot.lane.b32.xlu0 %v2203, 2
        %v2207 = vpop.permute.xlu0 %2206
        %2208 = vrot.lane.b32.xlu0 %v2204, 2
        %v2209 = vpop.permute.xlu0 %2208
        %2210 = vrot.lane.b32.xlu0 %v2205, 2
        %v2211 = vpop.permute.xlu0 %2210
        %v2212 = vsel %vm1136, %v2209, %v2211
        %v2213 = vsel %vm1136, %v2207, %v2209
        %v2214 = vsel %vm1136, %v2211, %v2207
        %2215 = vrot.lane.b32.xlu0 %v2203, 126
        %v2216 = vpop.permute.xlu0 %2215
        %2217 = vrot.lane.b32.xlu0 %v2204, 126
        %v2218 = vpop.permute.xlu0 %2217
        %2219 = vrot.lane.b32.xlu0 %v2205, 126
        %v2220 = vpop.permute.xlu0 %2219
        %v2221 = vsel %vm1146, %v2218, %v2220
        %v2222 = vsel %vm1146, %v2216, %v2218
        %v2223 = vsel %vm1146, %v2220, %v2216
        %v2224 = vld [vmem:[%s2 + $0x108] sm:$0xff]
        %v2225 = vld [vmem:[%s2 + $0x110] sm:$0xff]
        %2228 = vrot.lane.b32.xlu0 %v2224, 120
        %v2229 = vpop.permute.xlu0 %2228
        %2230 = vrot.lane.b32.xlu0 %v2225, 120
        %v2231 = vpop.permute.xlu0 %2230
        %v2232 = vsel %vm486, %v2229, 0
        %v2234 = vsel %vm486, %v2231, 0
        %2236 = vmatpush.msra.mxu0 0.0
        %2237 = vmatpush.msra.mxu0 0.0
        %2238 = vmatpush.msra.mxu0 0.0
        %2239 = vmatpush.msra.mxu0 0.0
        %2240 = vmatpush.msra.mxu0 0.0
        %2241 = vmatpush.msra.mxu0 0.0
        %2242 = vmatpush.msra.mxu0 0.0
        %2243 = vmatpush.msra.mxu0 0.0
        %2244 = vmatpush.msra.mxu0 0.0
        %2245 = vmatpush.msra.mxu0 0.0
        %2246 = vmatpush.msra.mxu0 0.0
        %2247 = vmatpush.msra.mxu0 0.0
        %2248 = vmatpush.msra.mxu0 0.0
        %2249 = vmatpush.msra.mxu0 0.0
        %2250 = vmatpush.msra.mxu0 0.0
        %2251 = vmatpush.msra.mxu0 %v2203
        %2252 = vmatmul.f32.gmra.mxu0 %v2232
        %v2253 = vpop.f32.mrf.mxu0
        %v2254 = vadd.f32 0.0, %v2253
        %2255 = vmatmul.f32.gmra.mxu0 %v2234
        %v2256 = vpop.f32.mrf.mxu0
        %v2257 = vadd.f32 0.0, %v2256
        %2258 = vdwg.mxu0
        %2259 = vmatpush.msra.mxu0 0.0
        %2260 = vmatpush.msra.mxu0 0.0
        %2261 = vmatpush.msra.mxu0 0.0
        %2262 = vmatpush.msra.mxu0 0.0
        %2263 = vmatpush.msra.mxu0 0.0
        %2264 = vmatpush.msra.mxu0 0.0
        %2265 = vmatpush.msra.mxu0 0.0
        %2266 = vmatpush.msra.mxu0 0.0
        %2267 = vmatpush.msra.mxu0 0.0
        %2268 = vmatpush.msra.mxu0 0.0
        %2269 = vmatpush.msra.mxu0 0.0
        %2270 = vmatpush.msra.mxu0 0.0
        %2271 = vmatpush.msra.mxu0 0.0
        %2272 = vmatpush.msra.mxu0 0.0
        %2273 = vmatpush.msra.mxu0 0.0
        %2274 = vmatpush.msra.mxu0 %v2204
        %2275 = vmatmul.f32.gmra.mxu0 %v2232
        %v2276 = vpop.f32.mrf.mxu0
        %v2277 = vadd.f32 0.0, %v2276
        %2278 = vmatmul.f32.gmra.mxu0 %v2234
        %v2279 = vpop.f32.mrf.mxu0
        %v2280 = vadd.f32 0.0, %v2279
        %2281 = vdwg.mxu0
        %2282 = vmatpush.msra.mxu0 0.0
        %2283 = vmatpush.msra.mxu0 0.0
        %2284 = vmatpush.msra.mxu0 0.0
        %2285 = vmatpush.msra.mxu0 0.0
        %2286 = vmatpush.msra.mxu0 0.0
        %2287 = vmatpush.msra.mxu0 0.0
        %2288 = vmatpush.msra.mxu0 0.0
        %2289 = vmatpush.msra.mxu0 0.0
        %2290 = vmatpush.msra.mxu0 0.0
        %2291 = vmatpush.msra.mxu0 0.0
        %2292 = vmatpush.msra.mxu0 0.0
        %2293 = vmatpush.msra.mxu0 0.0
        %2294 = vmatpush.msra.mxu0 0.0
        %2295 = vmatpush.msra.mxu0 0.0
        %2296 = vmatpush.msra.mxu0 0.0
        %2297 = vmatpush.msra.mxu0 %v2205
        %2298 = vmatmul.f32.gmra.mxu0 %v2232
        %v2299 = vpop.f32.mrf.mxu0
        %v2300 = vadd.f32 0.0, %v2299
        %2301 = vmatmul.f32.gmra.mxu0 %v2234
        %v2302 = vpop.f32.mrf.mxu0
        %v2303 = vadd.f32 0.0, %v2302
        %2304 = vdwg.mxu0
        %v2305 = vsel %vm486, %v2224, 0
        %v2307 = vsel %vm486, %v2225, 0
        %2309 = vmatpush.msra.mxu0 0.0
        %2310 = vmatpush.msra.mxu0 0.0
        %2311 = vmatpush.msra.mxu0 0.0
        %2312 = vmatpush.msra.mxu0 0.0
        %2313 = vmatpush.msra.mxu0 0.0
        %2314 = vmatpush.msra.mxu0 0.0
        %2315 = vmatpush.msra.mxu0 0.0
        %2316 = vmatpush.msra.mxu0 0.0
        %2317 = vmatpush.msra.mxu0 0.0
        %2318 = vmatpush.msra.mxu0 0.0
        %2319 = vmatpush.msra.mxu0 0.0
        %2320 = vmatpush.msra.mxu0 0.0
        %2321 = vmatpush.msra.mxu0 0.0
        %2322 = vmatpush.msra.mxu0 0.0
        %2323 = vmatpush.msra.mxu0 0.0
        %2324 = vmatpush.msra.mxu0 %v2214
        %2325 = vmatmul.f32.gmra.mxu0 %v2305
        %v2326 = vpop.f32.mrf.mxu0
        %v2327 = vadd.f32 %v2254, %v2326
        %2328 = vmatmul.f32.gmra.mxu0 %v2307
        %v2329 = vpop.f32.mrf.mxu0
        %v2330 = vadd.f32 %v2257, %v2329
        %2331 = vdwg.mxu0
        %2332 = vmatpush.msra.mxu0 0.0
        %2333 = vmatpush.msra.mxu0 0.0
        %2334 = vmatpush.msra.mxu0 0.0
        %2335 = vmatpush.msra.mxu0 0.0
        %2336 = vmatpush.msra.mxu0 0.0
        %2337 = vmatpush.msra.mxu0 0.0
        %2338 = vmatpush.msra.mxu0 0.0
        %2339 = vmatpush.msra.mxu0 0.0
        %2340 = vmatpush.msra.mxu0 0.0
        %2341 = vmatpush.msra.mxu0 0.0
        %2342 = vmatpush.msra.mxu0 0.0
        %2343 = vmatpush.msra.mxu0 0.0
        %2344 = vmatpush.msra.mxu0 0.0
        %2345 = vmatpush.msra.mxu0 0.0
        %2346 = vmatpush.msra.mxu0 0.0
        %2347 = vmatpush.msra.mxu0 %v2213
        %2348 = vmatmul.f32.gmra.mxu0 %v2305
        %v2349 = vpop.f32.mrf.mxu0
        %v2350 = vadd.f32 %v2277, %v2349
        %2351 = vmatmul.f32.gmra.mxu0 %v2307
        %v2352 = vpop.f32.mrf.mxu0
        %v2353 = vadd.f32 %v2280, %v2352
        %2354 = vdwg.mxu0
        %2355 = vmatpush.msra.mxu0 0.0
        %2356 = vmatpush.msra.mxu0 0.0
        %2357 = vmatpush.msra.mxu0 0.0
        %2358 = vmatpush.msra.mxu0 0.0
        %2359 = vmatpush.msra.mxu0 0.0
        %2360 = vmatpush.msra.mxu0 0.0
        %2361 = vmatpush.msra.mxu0 0.0
        %2362 = vmatpush.msra.mxu0 0.0
        %2363 = vmatpush.msra.mxu0 0.0
        %2364 = vmatpush.msra.mxu0 0.0
        %2365 = vmatpush.msra.mxu0 0.0
        %2366 = vmatpush.msra.mxu0 0.0
        %2367 = vmatpush.msra.mxu0 0.0
        %2368 = vmatpush.msra.mxu0 0.0
        %2369 = vmatpush.msra.mxu0 0.0
        %2370 = vmatpush.msra.mxu0 %v2212
        %2371 = vmatmul.f32.gmra.mxu0 %v2305
        %v2372 = vpop.f32.mrf.mxu0
        %v2373 = vadd.f32 %v2300, %v2372
        %2374 = vmatmul.f32.gmra.mxu0 %v2307
        %v2375 = vpop.f32.mrf.mxu0
        %v2376 = vadd.f32 %v2303, %v2375
        %2377 = vdwg.mxu0
        %2378 = vrot.lane.b32.xlu0 %v2224, 112
        %v2379 = vpop.permute.xlu0 %2378
        %2380 = vrot.lane.b32.xlu0 %v2225, 112
        %v2381 = vpop.permute.xlu0 %2380
        %v2382 = vsel %vm486, %v2379, 0
        %v2384 = vsel %vm486, %v2381, 0
        %2386 = vmatpush.msra.mxu0 0.0
        %2387 = vmatpush.msra.mxu0 0.0
        %2388 = vmatpush.msra.mxu0 0.0
        %2389 = vmatpush.msra.mxu0 0.0
        %2390 = vmatpush.msra.mxu0 0.0
        %2391 = vmatpush.msra.mxu0 0.0
        %2392 = vmatpush.msra.mxu0 0.0
        %2393 = vmatpush.msra.mxu0 0.0
        %2394 = vmatpush.msra.mxu0 0.0
        %2395 = vmatpush.msra.mxu0 0.0
        %2396 = vmatpush.msra.mxu0 0.0
        %2397 = vmatpush.msra.mxu0 0.0
        %2398 = vmatpush.msra.mxu0 0.0
        %2399 = vmatpush.msra.mxu0 0.0
        %2400 = vmatpush.msra.mxu0 0.0
        %2401 = vmatpush.msra.mxu0 %v2222
        %2402 = vmatmul.f32.gmra.mxu0 %v2382
        %v2403 = vpop.f32.mrf.mxu0
        %v2404 = vadd.f32 0.0, %v2403
        %2405 = vmatmul.f32.gmra.mxu0 %v2384
        %v2406 = vpop.f32.mrf.mxu0
        %v2407 = vadd.f32 0.0, %v2406
        %2408 = vdwg.mxu0
        %2409 = vmatpush.msra.mxu0 0.0
        %2410 = vmatpush.msra.mxu0 0.0
        %2411 = vmatpush.msra.mxu0 0.0
        %2412 = vmatpush.msra.mxu0 0.0
        %2413 = vmatpush.msra.mxu0 0.0
        %2414 = vmatpush.msra.mxu0 0.0
        %2415 = vmatpush.msra.mxu0 0.0
        %2416 = vmatpush.msra.mxu0 0.0
        %2417 = vmatpush.msra.mxu0 0.0
        %2418 = vmatpush.msra.mxu0 0.0
        %2419 = vmatpush.msra.mxu0 0.0
        %2420 = vmatpush.msra.mxu0 0.0
        %2421 = vmatpush.msra.mxu0 0.0
        %2422 = vmatpush.msra.mxu0 0.0
        %2423 = vmatpush.msra.mxu0 0.0
        %2424 = vmatpush.msra.mxu0 %v2221
        %2425 = vmatmul.f32.gmra.mxu0 %v2382
        %v2426 = vpop.f32.mrf.mxu0
        %v2427 = vadd.f32 0.0, %v2426
        %2428 = vmatmul.f32.gmra.mxu0 %v2384
        %v2429 = vpop.f32.mrf.mxu0
        %v2430 = vadd.f32 0.0, %v2429
        %2431 = vdwg.mxu0
        %2432 = vmatpush.msra.mxu0 0.0
        %2433 = vmatpush.msra.mxu0 0.0
        %2434 = vmatpush.msra.mxu0 0.0
        %2435 = vmatpush.msra.mxu0 0.0
        %2436 = vmatpush.msra.mxu0 0.0
        %2437 = vmatpush.msra.mxu0 0.0
        %2438 = vmatpush.msra.mxu0 0.0
        %2439 = vmatpush.msra.mxu0 0.0
        %2440 = vmatpush.msra.mxu0 0.0
        %2441 = vmatpush.msra.mxu0 0.0
        %2442 = vmatpush.msra.mxu0 0.0
        %2443 = vmatpush.msra.mxu0 0.0
        %2444 = vmatpush.msra.mxu0 0.0
        %2445 = vmatpush.msra.mxu0 0.0
        %2446 = vmatpush.msra.mxu0 0.0
        %2447 = vmatpush.msra.mxu0 %v2223
        %2448 = vmatmul.f32.gmra.mxu0 %v2382
        %v2449 = vpop.f32.mrf.mxu0
        %v2450 = vadd.f32 0.0, %v2449
        %2451 = vmatmul.f32.gmra.mxu0 %v2384
        %v2452 = vpop.f32.mrf.mxu0
        %v2453 = vadd.f32 0.0, %v2452
        %2454 = vdwg.mxu0
        %v2455 = vadd.f32 %v2327, %v2404
        %v2456 = vadd.f32 %v2350, %v2427
        %v2457 = vadd.f32 %v2373, %v2450
        %v2458 = vadd.f32 %v2330, %v2407
        %v2459 = vadd.f32 %v2353, %v2430
        %v2460 = vadd.f32 %v2376, %v2453
        %v2461 = vadd.f32 %v2455, %v1757
        %v2462 = vadd.f32 %v2456, %v1776
        %v2463 = vadd.f32 %v2457, %v1795
        %v2464 = vadd.f32 %v2458, %v1759
        %v2465 = vadd.f32 %v2459, %v1778
        %v2466 = vadd.f32 %v2460, %v1797
        %v2467 = vtanh.pop %v2461
        %v2468 = vtanh.pop %v2462
        %v2469 = vtanh.pop %v2463
        %v2470 = vxor.u32 %v2464, 2147483648
        %v2471 = vxor.u32 %v2465, 2147483648
        %v2472 = vxor.u32 %v2466, 2147483648
        %v2473 = vmul.f32 %v2470, 1.442695
        %v2474 = vpow.pop %v2473
        %v2475 = vmul.f32 %v2471, 1.442695
        %v2476 = vpow.pop %v2475
        %v2477 = vmul.f32 %v2472, 1.442695
        %v2478 = vpow.pop %v2477
        %v2479 = vadd.f32 %v2474, 1.0
        %v2480 = vadd.f32 %v2476, 1.0
        %v2481 = vadd.f32 %v2478, 1.0
        %v2482 = vrcp.pop %v2479
        %v2483 = vmul.f32 %v2479, %v2482
        %v2484 = vsub.f32 1.0, %v2483
        %v2485 = vmul.f32 %v2482, %v2484
        %v2486 = vadd.f32 %v2482, %v2485
        %vm2487 = vweird.f32 %v2479
        %vm2488 = vweird.f32 %v2482
        %vm2489 = vmor %vm2487, %vm2488
        %v2490 = vsel %vm2489, %v2482, %v2486
        %v2491 = vand.u32 2147483647, %v2479
        %vm2492 = vcmp.eq.f32.partialorder %v2491, 8.507059e+37
        %v2493 = vand.u32 %v2479, 2147483648
        %v2494 = vor.u32 1.1754944e-38, %v2493
        %v2495 = vsel %vm2492, %v2494, %v2490
        %v2496 = vmul.f32 1.0, %v2495
        %v2497 = vrcp.pop %v2480
        %v2498 = vmul.f32 %v2480, %v2497
        %v2499 = vsub.f32 1.0, %v2498
        %v2500 = vmul.f32 %v2497, %v2499
        %v2501 = vadd.f32 %v2497, %v2500
        %vm2502 = vweird.f32 %v2480
        %vm2503 = vweird.f32 %v2497
        %vm2504 = vmor %vm2502, %vm2503
        %v2505 = vsel %vm2504, %v2497, %v2501
        %v2506 = vand.u32 2147483647, %v2480
        %vm2507 = vcmp.eq.f32.partialorder %v2506, 8.507059e+37
        %v2508 = vand.u32 %v2480, 2147483648
        %v2509 = vor.u32 1.1754944e-38, %v2508
        %v2510 = vsel %vm2507, %v2509, %v2505
        %v2511 = vmul.f32 1.0, %v2510
        %v2512 = vrcp.pop %v2481
        %v2513 = vmul.f32 %v2481, %v2512
        %v2514 = vsub.f32 1.0, %v2513
        %v2515 = vmul.f32 %v2512, %v2514
        %v2516 = vadd.f32 %v2512, %v2515
        %vm2517 = vweird.f32 %v2481
        %vm2518 = vweird.f32 %v2512
        %vm2519 = vmor %vm2517, %vm2518
        %v2520 = vsel %vm2519, %v2512, %v2516
        %v2521 = vand.u32 2147483647, %v2481
        %vm2522 = vcmp.eq.f32.partialorder %v2521, 8.507059e+37
        %v2523 = vand.u32 %v2481, 2147483648
        %v2524 = vor.u32 1.1754944e-38, %v2523
        %v2525 = vsel %vm2522, %v2524, %v2520
        %v2526 = vmul.f32 1.0, %v2525
        %v2527 = vmul.f32 %v2467, %v2496
        %v2528 = vmul.f32 %v2468, %v2511
        %v2529 = vmul.f32 %v2469, %v2526
        %v2530 = vld [vmem:[%s2 + $0x130] sm:$0xff]
        %v2532 = vsel %vm486, %v2530, 0
        %2534 = vmatpush.msra.mxu0 0.0
        %2535 = vmatpush.msra.mxu0 0.0
        %2536 = vmatpush.msra.mxu0 0.0
        %2537 = vmatpush.msra.mxu0 0.0
        %2538 = vmatpush.msra.mxu0 0.0
        %2539 = vmatpush.msra.mxu0 0.0
        %2540 = vmatpush.msra.mxu0 0.0
        %2541 = vmatpush.msra.mxu0 0.0
        %2542 = vmatpush.msra.mxu0 0.0
        %2543 = vmatpush.msra.mxu0 0.0
        %2544 = vmatpush.msra.mxu0 0.0
        %2545 = vmatpush.msra.mxu0 0.0
        %2546 = vmatpush.msra.mxu0 0.0
        %2547 = vmatpush.msra.mxu0 0.0
        %2548 = vmatpush.msra.mxu0 0.0
        %2549 = vmatpush.msra.mxu0 %v2527
        %2550 = vmatmul.f32.gmra.mxu0 %v2532
        %v2551 = vpop.f32.mrf.mxu0
        %v2552 = vadd.f32 0.0, %v2551
        %2553 = vdwg.mxu0
        %2554 = vmatpush.msra.mxu0 0.0
        %2555 = vmatpush.msra.mxu0 0.0
        %2556 = vmatpush.msra.mxu0 0.0
        %2557 = vmatpush.msra.mxu0 0.0
        %2558 = vmatpush.msra.mxu0 0.0
        %2559 = vmatpush.msra.mxu0 0.0
        %2560 = vmatpush.msra.mxu0 0.0
        %2561 = vmatpush.msra.mxu0 0.0
        %2562 = vmatpush.msra.mxu0 0.0
        %2563 = vmatpush.msra.mxu0 0.0
        %2564 = vmatpush.msra.mxu0 0.0
        %2565 = vmatpush.msra.mxu0 0.0
        %2566 = vmatpush.msra.mxu0 0.0
        %2567 = vmatpush.msra.mxu0 0.0
        %2568 = vmatpush.msra.mxu0 0.0
        %2569 = vmatpush.msra.mxu0 %v2528
        %2570 = vmatmul.f32.gmra.mxu0 %v2532
        %v2571 = vpop.f32.mrf.mxu0
        %v2572 = vadd.f32 0.0, %v2571
        %2573 = vdwg.mxu0
        %2574 = vmatpush.msra.mxu0 0.0
        %2575 = vmatpush.msra.mxu0 0.0
        %2576 = vmatpush.msra.mxu0 0.0
        %2577 = vmatpush.msra.mxu0 0.0
        %2578 = vmatpush.msra.mxu0 0.0
        %2579 = vmatpush.msra.mxu0 0.0
        %2580 = vmatpush.msra.mxu0 0.0
        %2581 = vmatpush.msra.mxu0 0.0
        %2582 = vmatpush.msra.mxu0 0.0
        %2583 = vmatpush.msra.mxu0 0.0
        %2584 = vmatpush.msra.mxu0 0.0
        %2585 = vmatpush.msra.mxu0 0.0
        %2586 = vmatpush.msra.mxu0 0.0
        %2587 = vmatpush.msra.mxu0 0.0
        %2588 = vmatpush.msra.mxu0 0.0
        %2589 = vmatpush.msra.mxu0 %v2529
        %2590 = vmatmul.f32.gmra.mxu0 %v2532
        %v2591 = vpop.f32.mrf.mxu0
        %v2592 = vadd.f32 0.0, %v2591
        %2593 = vdwg.mxu0
        %v2595 = vsel %vm486, %v2126, 0
        %2597 = vmatpush.msra.mxu0 0.0
        %2598 = vmatpush.msra.mxu0 0.0
        %2599 = vmatpush.msra.mxu0 0.0
        %2600 = vmatpush.msra.mxu0 0.0
        %2601 = vmatpush.msra.mxu0 0.0
        %2602 = vmatpush.msra.mxu0 0.0
        %2603 = vmatpush.msra.mxu0 0.0
        %2604 = vmatpush.msra.mxu0 0.0
        %2605 = vmatpush.msra.mxu0 0.0
        %2606 = vmatpush.msra.mxu0 0.0
        %2607 = vmatpush.msra.mxu0 0.0
        %2608 = vmatpush.msra.mxu0 0.0
        %2609 = vmatpush.msra.mxu0 0.0
        %2610 = vmatpush.msra.mxu0 0.0
        %2611 = vmatpush.msra.mxu0 0.0
        %2612 = vmatpush.msra.mxu0 %v2123
        %2613 = vmatmul.f32.gmra.mxu0 %v2595
        %v2614 = vpop.f32.mrf.mxu0
        %v2615 = vadd.f32 %v2552, %v2614
        %2616 = vdwg.mxu0
        %2617 = vmatpush.msra.mxu0 0.0
        %2618 = vmatpush.msra.mxu0 0.0
        %2619 = vmatpush.msra.mxu0 0.0
        %2620 = vmatpush.msra.mxu0 0.0
        %2621 = vmatpush.msra.mxu0 0.0
        %2622 = vmatpush.msra.mxu0 0.0
        %2623 = vmatpush.msra.mxu0 0.0
        %2624 = vmatpush.msra.mxu0 0.0
        %2625 = vmatpush.msra.mxu0 0.0
        %2626 = vmatpush.msra.mxu0 0.0
        %2627 = vmatpush.msra.mxu0 0.0
        %2628 = vmatpush.msra.mxu0 0.0
        %2629 = vmatpush.msra.mxu0 0.0
        %2630 = vmatpush.msra.mxu0 0.0
        %2631 = vmatpush.msra.mxu0 0.0
        %2632 = vmatpush.msra.mxu0 %v2124
        %2633 = vmatmul.f32.gmra.mxu0 %v2595
        %v2634 = vpop.f32.mrf.mxu0
        %v2635 = vadd.f32 %v2572, %v2634
        %2636 = vdwg.mxu0
        %2637 = vmatpush.msra.mxu0 0.0
        %2638 = vmatpush.msra.mxu0 0.0
        %2639 = vmatpush.msra.mxu0 0.0
        %2640 = vmatpush.msra.mxu0 0.0
        %2641 = vmatpush.msra.mxu0 0.0
        %2642 = vmatpush.msra.mxu0 0.0
        %2643 = vmatpush.msra.mxu0 0.0
        %2644 = vmatpush.msra.mxu0 0.0
        %2645 = vmatpush.msra.mxu0 0.0
        %2646 = vmatpush.msra.mxu0 0.0
        %2647 = vmatpush.msra.mxu0 0.0
        %2648 = vmatpush.msra.mxu0 0.0
        %2649 = vmatpush.msra.mxu0 0.0
        %2650 = vmatpush.msra.mxu0 0.0
        %2651 = vmatpush.msra.mxu0 0.0
        %2652 = vmatpush.msra.mxu0 %v2125
        %2653 = vmatmul.f32.gmra.mxu0 %v2595
        %v2654 = vpop.f32.mrf.mxu0
        %v2655 = vadd.f32 %v2592, %v2654
        %2656 = vdwg.mxu0
        %v2657 = vld [vmem:[%s2 + $0x138] sm:$0xff]
        %2659 = vset.pattern.permute.xlu0 0
        %2660 = vperm.xlu0 %2659, %v2657
        %v2661 = vpop.permute.xlu0 %2660
        %v2663 = vadd.f32 %v2615, %v2661
        %v2664 = vadd.f32 %v2635, %v2661
        %v2665 = vadd.f32 %v2655, %v2661
        %2666 = vst [vmem:[%s386 - $0x4] sm:$0xf0] %v2664
        %v2667 = vmul.f32 %v2663, 1.442695
        %v2668 = vpow.pop %v2667
        %v2669 = vmul.f32 %v2664, 1.442695
        %v2670 = vpow.pop %v2669
        %v2671 = vmul.f32 %v2665, 1.442695
        %v2672 = vpow.pop %v2671
        %v2673 = vmul.f32 %v2668, %v1646
        %v2674 = vmul.f32 %v2670, %v1669
        %v2675 = vmul.f32 %v2672, %v1692
        %v2679 = vrot.slane %v2663, 4
        %v2680 = vrot.slane %v2664, 4
        %v2681 = vrot.slane %v2665, 4
        %v2685 = vadd.f32 %v2673, %v2679
        %v2686 = vadd.f32 %v2674, %v2680
        %v2687 = vadd.f32 %v2675, %v2681
        %v2688 = vsel %vm648, %v1646, %v2685
        %v2689 = vsel %vm648, %v1669, %v2686
        %v2690 = vsel %vm648, %v1692, %v2687
        %v2691 = vsel %vm718, %v2688, 0.0
        %v2692 = vsel %vm719, %v2689, 0.0
        %v2693 = vsel %vm720, %v2690, 0.0
        %2694 = vst [vmem:[%s429] sm:$0x3] %v2692
        %v2695 = vld [vmem:[%s2 + $0x140] sm:$0xff]
        %v2696 = vld [vmem:[%s2 + $0x148] sm:$0xff]
        %v2700 = vrot.slane %v2691, 2
        %v2701 = vrot.slane %v2692, 2
        %v2702 = vrot.slane %v2693, 2
        %vm2703 = vcmask 48128
        %v2705 = vsel %vm2703, %v2695, 0
        %v2708 = vsel %vm2703, %v2696, 0
        %vm2710 = vcmask 1045504
        %v2711 = vsel %vm2710, %v2700, 0
        %v2713 = vsel %vm2710, %v2701, 0
        %v2715 = vsel %vm2710, %v2702, 0
        %2717 = vmatpush.msra.mxu0 0.0
        %2718 = vmatpush.msra.mxu0 0.0
        %2719 = vmatpush.msra.mxu0 0.0
        %2720 = vmatpush.msra.mxu0 0.0
        %2721 = vmatpush.msra.mxu0 0.0
        %2722 = vmatpush.msra.mxu0 0.0
        %2723 = vmatpush.msra.mxu0 0.0
        %2724 = vmatpush.msra.mxu0 0.0
        %2725 = vmatpush.msra.mxu0 0.0
        %2726 = vmatpush.msra.mxu0 0.0
        %2727 = vmatpush.msra.mxu0 0.0
        %2728 = vmatpush.msra.mxu0 0.0
        %2729 = vmatpush.msra.mxu0 0.0
        %2730 = vmatpush.msra.mxu0 0.0
        %2731 = vmatpush.msra.mxu0 0.0
        %2732 = vmatpush.msra.mxu0 %v2711
        %2733 = vmatmul.f32.gmra.mxu0 %v2705
        %v2734 = vpop.f32.mrf.mxu0
        %v2735 = vadd.f32 0.0, %v2734
        %2736 = vmatmul.f32.gmra.mxu0 %v2708
        %v2737 = vpop.f32.mrf.mxu0
        %v2738 = vadd.f32 0.0, %v2737
        %2739 = vdwg.mxu0
        %2740 = vmatpush.msra.mxu0 0.0
        %2741 = vmatpush.msra.mxu0 0.0
        %2742 = vmatpush.msra.mxu0 0.0
        %2743 = vmatpush.msra.mxu0 0.0
        %2744 = vmatpush.msra.mxu0 0.0
        %2745 = vmatpush.msra.mxu0 0.0
        %2746 = vmatpush.msra.mxu0 0.0
        %2747 = vmatpush.msra.mxu0 0.0
        %2748 = vmatpush.msra.mxu0 0.0
        %2749 = vmatpush.msra.mxu0 0.0
        %2750 = vmatpush.msra.mxu0 0.0
        %2751 = vmatpush.msra.mxu0 0.0
        %2752 = vmatpush.msra.mxu0 0.0
        %2753 = vmatpush.msra.mxu0 0.0
        %2754 = vmatpush.msra.mxu0 0.0
        %2755 = vmatpush.msra.mxu0 %v2713
        %2756 = vmatmul.f32.gmra.mxu0 %v2705
        %v2757 = vpop.f32.mrf.mxu0
        %v2758 = vadd.f32 0.0, %v2757
        %2759 = vmatmul.f32.gmra.mxu0 %v2708
        %v2760 = vpop.f32.mrf.mxu0
        %v2761 = vadd.f32 0.0, %v2760
        %2762 = vdwg.mxu0
        %2763 = vmatpush.msra.mxu0 0.0
        %2764 = vmatpush.msra.mxu0 0.0
        %2765 = vmatpush.msra.mxu0 0.0
        %2766 = vmatpush.msra.mxu0 0.0
        %2767 = vmatpush.msra.mxu0 0.0
        %2768 = vmatpush.msra.mxu0 0.0
        %2769 = vmatpush.msra.mxu0 0.0
        %2770 = vmatpush.msra.mxu0 0.0
        %2771 = vmatpush.msra.mxu0 0.0
        %2772 = vmatpush.msra.mxu0 0.0
        %2773 = vmatpush.msra.mxu0 0.0
        %2774 = vmatpush.msra.mxu0 0.0
        %2775 = vmatpush.msra.mxu0 0.0
        %2776 = vmatpush.msra.mxu0 0.0
        %2777 = vmatpush.msra.mxu0 0.0
        %2778 = vmatpush.msra.mxu0 %v2715
        %2779 = vmatmul.f32.gmra.mxu0 %v2705
        %v2780 = vpop.f32.mrf.mxu0
        %v2781 = vadd.f32 0.0, %v2780
        %2782 = vmatmul.f32.gmra.mxu0 %v2708
        %v2783 = vpop.f32.mrf.mxu0
        %v2784 = vadd.f32 0.0, %v2783
        %2785 = vdwg.mxu0
        %v2786 = vld [vmem:[%s2 + $0x150] sm:$0xff]
        %2788 = vset.pattern.permute.xlu0 0
        %2789 = vperm.xlu0 %2788, %v2786
        %v2790 = vpop.permute.xlu0 %2789
        %v2792 = vadd.f32 %v2738, %v2790
        %v2793 = vadd.f32 %v2761, %v2790
        %v2794 = vadd.f32 %v2784, %v2790
        %v2795 = vld [vmem:[%s2 + $0x158] sm:$0xff]
        %v2796 = vld [vmem:[%s2 + $0x160] sm:$0xff]
        %v2797 = vld [vmem:[%s2 + $0x168] sm:$0xff]
        %v2798 = vld [vmem:[%s2 + $0x170] sm:$0xff]
        %v2799 = vpack.c.bf16 %v2796, %v2795
        %v2800 = vpack.c.bf16 %v2798, %v2797
        %v2801 = vld [vmem:[%s2 + $0x178] sm:$0xff]
        %v2802 = vld [vmem:[%s2 + $0x180] sm:$0xff]
        %v2803 = vld [vmem:[%s2 + $0x188] sm:$0xff]
        %v2804 = vld [vmem:[%s2 + $0x190] sm:$0xff]
        %2806 = vset.pattern.permute.xlu0 0
        %2807 = vperm.xlu0 %2806, %v2801
        %v2808 = vpop.permute.xlu0 %2807
        %2811 = vset.pattern.permute.xlu0 0
        %2812 = vperm.xlu0 %2811, %v2802
        %v2813 = vpop.permute.xlu0 %2812
        %2816 = vset.pattern.permute.xlu0 0
        %2817 = vperm.xlu0 %2816, %v2803
        %v2818 = vpop.permute.xlu0 %2817
        %2821 = vset.pattern.permute.xlu0 0
        %2822 = vperm.xlu0 %2821, %v2804
        %v2823 = vpop.permute.xlu0 %2822
        %v2826 = vsel %vm641, %v2799, 0
        %v2829 = vsel %vm641, %v2800, 0
        %2831 = vmatpush.bf16.msra.mxu0 0
        %2832 = vmatpush.bf16.msra.mxu0 0
        %2833 = vmatpush.bf16.msra.mxu0 0
        %2834 = vmatpush.bf16.msra.mxu0 0
        %2835 = vmatpush.bf16.msra.mxu0 0
        %2836 = vmatpush.bf16.msra.mxu0 %v650
        %2837 = vmatpush.bf16.msra.mxu0 %v629
        %2838 = vmatpush.bf16.msra.mxu0 %v626
        %2839 = vmatmul.bf16.gmra.mxu0 %v2826
        %v2840 = vpop.f32.mrf.mxu0
        %v2841 = vadd.f32 %v2808, %v2840
        %v2842 = vpop.f32.mrf.mxu0
        %v2843 = vadd.f32 %v2813, %v2842
        %2844 = vmatmul.bf16.gmra.mxu0 %v2829
        %v2845 = vpop.f32.mrf.mxu0
        %v2846 = vadd.f32 %v2818, %v2845
        %v2847 = vpop.f32.mrf.mxu0
        %v2848 = vadd.f32 %v2823, %v2847
        %2849 = vdwg.mxu0
        %2850 = vmatpush.bf16.msra.mxu0 0
        %2851 = vmatpush.bf16.msra.mxu0 0
        %2852 = vmatpush.bf16.msra.mxu0 0
        %2853 = vmatpush.bf16.msra.mxu0 0
        %2854 = vmatpush.bf16.msra.mxu0 0
        %2855 = vmatpush.bf16.msra.mxu0 %v653
        %2856 = vmatpush.bf16.msra.mxu0 %v630
        %2857 = vmatpush.bf16.msra.mxu0 %v627
        %2858 = vmatmul.bf16.gmra.mxu0 %v2826
        %v2859 = vpop.f32.mrf.mxu0
        %v2860 = vadd.f32 %v2808, %v2859
        %v2861 = vpop.f32.mrf.mxu0
        %v2862 = vadd.f32 %v2813, %v2861
        %2863 = vmatmul.bf16.gmra.mxu0 %v2829
        %v2864 = vpop.f32.mrf.mxu0
        %v2865 = vadd.f32 %v2818, %v2864
        %v2866 = vpop.f32.mrf.mxu0
        %v2867 = vadd.f32 %v2823, %v2866
        %2868 = vdwg.mxu0
        %2869 = vmatpush.bf16.msra.mxu0 0
        %2870 = vmatpush.bf16.msra.mxu0 0
        %2871 = vmatpush.bf16.msra.mxu0 0
        %2872 = vmatpush.bf16.msra.mxu0 0
        %2873 = vmatpush.bf16.msra.mxu0 0
        %2874 = vmatpush.bf16.msra.mxu0 %v656
        %2875 = vmatpush.bf16.msra.mxu0 %v631
        %2876 = vmatpush.bf16.msra.mxu0 %v628
        %2877 = vmatmul.bf16.gmra.mxu0 %v2826
        %v2878 = vpop.f32.mrf.mxu0
        %v2879 = vadd.f32 %v2808, %v2878
        %v2880 = vpop.f32.mrf.mxu0
        %v2881 = vadd.f32 %v2813, %v2880
        %2882 = vmatmul.bf16.gmra.mxu0 %v2829
        %v2883 = vpop.f32.mrf.mxu0
        %v2884 = vadd.f32 %v2818, %v2883
        %v2885 = vpop.f32.mrf.mxu0
        %v2886 = vadd.f32 %v2823, %v2885
        %2887 = vdwg.mxu0
        %v2888 = vsel %vm718, %v2792, 0.0
        %v2889 = vsel %vm719, %v2793, 0.0
        %v2890 = vsel %vm720, %v2794, 0.0
        %2891 = vrot.lane.b32.xlu0 %v2888, 1
        %v2892 = vpop.permute.xlu0 %2891
        %2893 = vrot.lane.b32.xlu0 %v2889, 1
        %v2894 = vpop.permute.xlu0 %2893
        %2895 = vrot.lane.b32.xlu0 %v2890, 1
        %v2896 = vpop.permute.xlu0 %2895
        %v2897 = vsel %vm730, %v2894, %v2896
        %v2898 = vsel %vm730, %v2892, %v2894
        %v2899 = vsel %vm730, %v2896, %v2892
        %2900 = vrot.lane.b32.xlu0 %v2888, 127
        %v2901 = vpop.permute.xlu0 %2900
        %2902 = vrot.lane.b32.xlu0 %v2889, 127
        %v2903 = vpop.permute.xlu0 %2902
        %2904 = vrot.lane.b32.xlu0 %v2890, 127
        %v2905 = vpop.permute.xlu0 %2904
        %v2906 = vsel %vm740, %v2903, %v2905
        %v2907 = vsel %vm740, %v2901, %v2903
        %v2908 = vsel %vm740, %v2905, %v2901
        %v2909 = vld [vmem:[%s2 + $0x198] sm:$0xff]
        %v2910 = vld [vmem:[%s2 + $0x1a0] sm:$0xff]
        %2913 = vrot.lane.b32.xlu0 %v2909, 120
        %v2914 = vpop.permute.xlu0 %2913
        %2915 = vrot.lane.b32.xlu0 %v2910, 120
        %v2916 = vpop.permute.xlu0 %2915
        %v2917 = vsel %vm486, %v2914, 0
        %v2919 = vsel %vm486, %v2916, 0
        %2921 = vmatpush.msra.mxu0 0.0
        %2922 = vmatpush.msra.mxu0 0.0
        %2923 = vmatpush.msra.mxu0 0.0
        %2924 = vmatpush.msra.mxu0 0.0
        %2925 = vmatpush.msra.mxu0 0.0
        %2926 = vmatpush.msra.mxu0 0.0
        %2927 = vmatpush.msra.mxu0 0.0
        %2928 = vmatpush.msra.mxu0 0.0
        %2929 = vmatpush.msra.mxu0 0.0
        %2930 = vmatpush.msra.mxu0 0.0
        %2931 = vmatpush.msra.mxu0 0.0
        %2932 = vmatpush.msra.mxu0 0.0
        %2933 = vmatpush.msra.mxu0 0.0
        %2934 = vmatpush.msra.mxu0 0.0
        %2935 = vmatpush.msra.mxu0 0.0
        %2936 = vmatpush.msra.mxu0 %v2888
        %2937 = vmatmul.f32.gmra.mxu0 %v2917
        %v2938 = vpop.f32.mrf.mxu0
        %v2939 = vadd.f32 0.0, %v2938
        %2940 = vmatmul.f32.gmra.mxu0 %v2919
        %v2941 = vpop.f32.mrf.mxu0
        %v2942 = vadd.f32 0.0, %v2941
        %2943 = vdwg.mxu0
        %2944 = vmatpush.msra.mxu0 0.0
        %2945 = vmatpush.msra.mxu0 0.0
        %2946 = vmatpush.msra.mxu0 0.0
        %2947 = vmatpush.msra.mxu0 0.0
        %2948 = vmatpush.msra.mxu0 0.0
        %2949 = vmatpush.msra.mxu0 0.0
        %2950 = vmatpush.msra.mxu0 0.0
        %2951 = vmatpush.msra.mxu0 0.0
        %2952 = vmatpush.msra.mxu0 0.0
        %2953 = vmatpush.msra.mxu0 0.0
        %2954 = vmatpush.msra.mxu0 0.0
        %2955 = vmatpush.msra.mxu0 0.0
        %2956 = vmatpush.msra.mxu0 0.0
        %2957 = vmatpush.msra.mxu0 0.0
        %2958 = vmatpush.msra.mxu0 0.0
        %2959 = vmatpush.msra.mxu0 %v2889
        %2960 = vmatmul.f32.gmra.mxu0 %v2917
        %v2961 = vpop.f32.mrf.mxu0
        %v2962 = vadd.f32 0.0, %v2961
        %2963 = vmatmul.f32.gmra.mxu0 %v2919
        %v2964 = vpop.f32.mrf.mxu0
        %v2965 = vadd.f32 0.0, %v2964
        %2966 = vdwg.mxu0
        %2967 = vmatpush.msra.mxu0 0.0
        %2968 = vmatpush.msra.mxu0 0.0
        %2969 = vmatpush.msra.mxu0 0.0
        %2970 = vmatpush.msra.mxu0 0.0
        %2971 = vmatpush.msra.mxu0 0.0
        %2972 = vmatpush.msra.mxu0 0.0
        %2973 = vmatpush.msra.mxu0 0.0
        %2974 = vmatpush.msra.mxu0 0.0
        %2975 = vmatpush.msra.mxu0 0.0
        %2976 = vmatpush.msra.mxu0 0.0
        %2977 = vmatpush.msra.mxu0 0.0
        %2978 = vmatpush.msra.mxu0 0.0
        %2979 = vmatpush.msra.mxu0 0.0
        %2980 = vmatpush.msra.mxu0 0.0
        %2981 = vmatpush.msra.mxu0 0.0
        %2982 = vmatpush.msra.mxu0 %v2890
        %2983 = vmatmul.f32.gmra.mxu0 %v2917
        %v2984 = vpop.f32.mrf.mxu0
        %v2985 = vadd.f32 0.0, %v2984
        %2986 = vmatmul.f32.gmra.mxu0 %v2919
        %v2987 = vpop.f32.mrf.mxu0
        %v2988 = vadd.f32 0.0, %v2987
        %2989 = vdwg.mxu0
        %v2990 = vsel %vm486, %v2909, 0
        %v2992 = vsel %vm486, %v2910, 0
        %2994 = vmatpush.msra.mxu0 0.0
        %2995 = vmatpush.msra.mxu0 0.0
        %2996 = vmatpush.msra.mxu0 0.0
        %2997 = vmatpush.msra.mxu0 0.0
        %2998 = vmatpush.msra.mxu0 0.0
        %2999 = vmatpush.msra.mxu0 0.0
        %3000 = vmatpush.msra.mxu0 0.0
        %3001 = vmatpush.msra.mxu0 0.0
        %3002 = vmatpush.msra.mxu0 0.0
        %3003 = vmatpush.msra.mxu0 0.0
        %3004 = vmatpush.msra.mxu0 0.0
        %3005 = vmatpush.msra.mxu0 0.0
        %3006 = vmatpush.msra.mxu0 0.0
        %3007 = vmatpush.msra.mxu0 0.0
        %3008 = vmatpush.msra.mxu0 0.0
        %3009 = vmatpush.msra.mxu0 %v2899
        %3010 = vmatmul.f32.gmra.mxu0 %v2990
        %v3011 = vpop.f32.mrf.mxu0
        %v3012 = vadd.f32 %v2939, %v3011
        %3013 = vmatmul.f32.gmra.mxu0 %v2992
        %v3014 = vpop.f32.mrf.mxu0
        %v3015 = vadd.f32 %v2942, %v3014
        %3016 = vdwg.mxu0
        %3017 = vmatpush.msra.mxu0 0.0
        %3018 = vmatpush.msra.mxu0 0.0
        %3019 = vmatpush.msra.mxu0 0.0
        %3020 = vmatpush.msra.mxu0 0.0
        %3021 = vmatpush.msra.mxu0 0.0
        %3022 = vmatpush.msra.mxu0 0.0
        %3023 = vmatpush.msra.mxu0 0.0
        %3024 = vmatpush.msra.mxu0 0.0
        %3025 = vmatpush.msra.mxu0 0.0
        %3026 = vmatpush.msra.mxu0 0.0
        %3027 = vmatpush.msra.mxu0 0.0
        %3028 = vmatpush.msra.mxu0 0.0
        %3029 = vmatpush.msra.mxu0 0.0
        %3030 = vmatpush.msra.mxu0 0.0
        %3031 = vmatpush.msra.mxu0 0.0
        %3032 = vmatpush.msra.mxu0 %v2898
        %3033 = vmatmul.f32.gmra.mxu0 %v2990
        %v3034 = vpop.f32.mrf.mxu0
        %v3035 = vadd.f32 %v2962, %v3034
        %3036 = vmatmul.f32.gmra.mxu0 %v2992
        %v3037 = vpop.f32.mrf.mxu0
        %v3038 = vadd.f32 %v2965, %v3037
        %3039 = vdwg.mxu0
        %3040 = vmatpush.msra.mxu0 0.0
        %3041 = vmatpush.msra.mxu0 0.0
        %3042 = vmatpush.msra.mxu0 0.0
        %3043 = vmatpush.msra.mxu0 0.0
        %3044 = vmatpush.msra.mxu0 0.0
        %3045 = vmatpush.msra.mxu0 0.0
        %3046 = vmatpush.msra.mxu0 0.0
        %3047 = vmatpush.msra.mxu0 0.0
        %3048 = vmatpush.msra.mxu0 0.0
        %3049 = vmatpush.msra.mxu0 0.0
        %3050 = vmatpush.msra.mxu0 0.0
        %3051 = vmatpush.msra.mxu0 0.0
        %3052 = vmatpush.msra.mxu0 0.0
        %3053 = vmatpush.msra.mxu0 0.0
        %3054 = vmatpush.msra.mxu0 0.0
        %3055 = vmatpush.msra.mxu0 %v2897
        %3056 = vmatmul.f32.gmra.mxu0 %v2990
        %v3057 = vpop.f32.mrf.mxu0
        %v3058 = vadd.f32 %v2985, %v3057
        %3059 = vmatmul.f32.gmra.mxu0 %v2992
        %v3060 = vpop.f32.mrf.mxu0
        %v3061 = vadd.f32 %v2988, %v3060
        %3062 = vdwg.mxu0
        %3063 = vrot.lane.b32.xlu0 %v2909, 112
        %v3064 = vpop.permute.xlu0 %3063
        %3065 = vrot.lane.b32.xlu0 %v2910, 112
        %v3066 = vpop.permute.xlu0 %3065
        %v3067 = vsel %vm486, %v3064, 0
        %v3069 = vsel %vm486, %v3066, 0
        %3071 = vmatpush.msra.mxu0 0.0
        %3072 = vmatpush.msra.mxu0 0.0
        %3073 = vmatpush.msra.mxu0 0.0
        %3074 = vmatpush.msra.mxu0 0.0
        %3075 = vmatpush.msra.mxu0 0.0
        %3076 = vmatpush.msra.mxu0 0.0
        %3077 = vmatpush.msra.mxu0 0.0
        %3078 = vmatpush.msra.mxu0 0.0
        %3079 = vmatpush.msra.mxu0 0.0
        %3080 = vmatpush.msra.mxu0 0.0
        %3081 = vmatpush.msra.mxu0 0.0
        %3082 = vmatpush.msra.mxu0 0.0
        %3083 = vmatpush.msra.mxu0 0.0
        %3084 = vmatpush.msra.mxu0 0.0
        %3085 = vmatpush.msra.mxu0 0.0
        %3086 = vmatpush.msra.mxu0 %v2907
        %3087 = vmatmul.f32.gmra.mxu0 %v3067
        %v3088 = vpop.f32.mrf.mxu0
        %v3089 = vadd.f32 0.0, %v3088
        %3090 = vmatmul.f32.gmra.mxu0 %v3069
        %v3091 = vpop.f32.mrf.mxu0
        %v3092 = vadd.f32 0.0, %v3091
        %3093 = vdwg.mxu0
        %3094 = vmatpush.msra.mxu0 0.0
        %3095 = vmatpush.msra.mxu0 0.0
        %3096 = vmatpush.msra.mxu0 0.0
        %3097 = vmatpush.msra.mxu0 0.0
        %3098 = vmatpush.msra.mxu0 0.0
        %3099 = vmatpush.msra.mxu0 0.0
        %3100 = vmatpush.msra.mxu0 0.0
        %3101 = vmatpush.msra.mxu0 0.0
        %3102 = vmatpush.msra.mxu0 0.0
        %3103 = vmatpush.msra.mxu0 0.0
        %3104 = vmatpush.msra.mxu0 0.0
        %3105 = vmatpush.msra.mxu0 0.0
        %3106 = vmatpush.msra.mxu0 0.0
        %3107 = vmatpush.msra.mxu0 0.0
        %3108 = vmatpush.msra.mxu0 0.0
        %3109 = vmatpush.msra.mxu0 %v2906
        %3110 = vmatmul.f32.gmra.mxu0 %v3067
        %v3111 = vpop.f32.mrf.mxu0
        %v3112 = vadd.f32 0.0, %v3111
        %3113 = vmatmul.f32.gmra.mxu0 %v3069
        %v3114 = vpop.f32.mrf.mxu0
        %v3115 = vadd.f32 0.0, %v3114
        %3116 = vdwg.mxu0
        %3117 = vmatpush.msra.mxu0 0.0
        %3118 = vmatpush.msra.mxu0 0.0
        %3119 = vmatpush.msra.mxu0 0.0
        %3120 = vmatpush.msra.mxu0 0.0
        %3121 = vmatpush.msra.mxu0 0.0
        %3122 = vmatpush.msra.mxu0 0.0
        %3123 = vmatpush.msra.mxu0 0.0
        %3124 = vmatpush.msra.mxu0 0.0
        %3125 = vmatpush.msra.mxu0 0.0
        %3126 = vmatpush.msra.mxu0 0.0
        %3127 = vmatpush.msra.mxu0 0.0
        %3128 = vmatpush.msra.mxu0 0.0
        %3129 = vmatpush.msra.mxu0 0.0
        %3130 = vmatpush.msra.mxu0 0.0
        %3131 = vmatpush.msra.mxu0 0.0
        %3132 = vmatpush.msra.mxu0 %v2908
        %3133 = vmatmul.f32.gmra.mxu0 %v3067
        %v3134 = vpop.f32.mrf.mxu0
        %v3135 = vadd.f32 0.0, %v3134
        %3136 = vmatmul.f32.gmra.mxu0 %v3069
        %v3137 = vpop.f32.mrf.mxu0
        %v3138 = vadd.f32 0.0, %v3137
        %3139 = vdwg.mxu0
        %v3140 = vadd.f32 %v3012, %v3089
        %v3141 = vadd.f32 %v3035, %v3112
        %v3142 = vadd.f32 %v3058, %v3135
        %v3143 = vadd.f32 %v3015, %v3092
        %v3144 = vadd.f32 %v3038, %v3115
        %v3145 = vadd.f32 %v3061, %v3138
        %v3146 = vadd.f32 %v3140, %v2841
        %v3147 = vadd.f32 %v3141, %v2860
        %v3148 = vadd.f32 %v3142, %v2879
        %v3149 = vadd.f32 %v3143, %v2843
        %v3150 = vadd.f32 %v3144, %v2862
        %v3151 = vadd.f32 %v3145, %v2881
        %v3152 = vtanh.pop %v3146
        %v3153 = vtanh.pop %v3147
        %v3154 = vtanh.pop %v3148
        %v3155 = vxor.u32 %v3149, 2147483648
        %v3156 = vxor.u32 %v3150, 2147483648
        %v3157 = vxor.u32 %v3151, 2147483648
        %v3158 = vmul.f32 %v3155, 1.442695
        %v3159 = vpow.pop %v3158
        %v3160 = vmul.f32 %v3156, 1.442695
        %v3161 = vpow.pop %v3160
        %v3162 = vmul.f32 %v3157, 1.442695
        %v3163 = vpow.pop %v3162
        %v3164 = vadd.f32 %v3159, 1.0
        %v3165 = vadd.f32 %v3161, 1.0
        %v3166 = vadd.f32 %v3163, 1.0
        %v3167 = vrcp.pop %v3164
        %v3168 = vmul.f32 %v3164, %v3167
        %v3169 = vsub.f32 1.0, %v3168
        %v3170 = vmul.f32 %v3167, %v3169
        %v3171 = vadd.f32 %v3167, %v3170
        %vm3172 = vweird.f32 %v3164
        %vm3173 = vweird.f32 %v3167
        %vm3174 = vmor %vm3172, %vm3173
        %v3175 = vsel %vm3174, %v3167, %v3171
        %v3176 = vand.u32 2147483647, %v3164
        %vm3177 = vcmp.eq.f32.partialorder %v3176, 8.507059e+37
        %v3178 = vand.u32 %v3164, 2147483648
        %v3179 = vor.u32 1.1754944e-38, %v3178
        %v3180 = vsel %vm3177, %v3179, %v3175
        %v3181 = vmul.f32 1.0, %v3180
        %v3182 = vrcp.pop %v3165
        %v3183 = vmul.f32 %v3165, %v3182
        %v3184 = vsub.f32 1.0, %v3183
        %v3185 = vmul.f32 %v3182, %v3184
        %v3186 = vadd.f32 %v3182, %v3185
        %vm3187 = vweird.f32 %v3165
        %vm3188 = vweird.f32 %v3182
        %vm3189 = vmor %vm3187, %vm3188
        %v3190 = vsel %vm3189, %v3182, %v3186
        %v3191 = vand.u32 2147483647, %v3165
        %vm3192 = vcmp.eq.f32.partialorder %v3191, 8.507059e+37
        %v3193 = vand.u32 %v3165, 2147483648
        %v3194 = vor.u32 1.1754944e-38, %v3193
        %v3195 = vsel %vm3192, %v3194, %v3190
        %v3196 = vmul.f32 1.0, %v3195
        %v3197 = vrcp.pop %v3166
        %v3198 = vmul.f32 %v3166, %v3197
        %v3199 = vsub.f32 1.0, %v3198
        %v3200 = vmul.f32 %v3197, %v3199
        %v3201 = vadd.f32 %v3197, %v3200
        %vm3202 = vweird.f32 %v3166
        %vm3203 = vweird.f32 %v3197
        %vm3204 = vmor %vm3202, %vm3203
        %v3205 = vsel %vm3204, %v3197, %v3201
        %v3206 = vand.u32 2147483647, %v3166
        %vm3207 = vcmp.eq.f32.partialorder %v3206, 8.507059e+37
        %v3208 = vand.u32 %v3166, 2147483648
        %v3209 = vor.u32 1.1754944e-38, %v3208
        %v3210 = vsel %vm3207, %v3209, %v3205
        %v3211 = vmul.f32 1.0, %v3210
        %v3212 = vmul.f32 %v3152, %v3181
        %v3213 = vmul.f32 %v3153, %v3196
        %v3214 = vmul.f32 %v3154, %v3211
        %v3215 = vld [vmem:[%s2 + $0x1c8] sm:$0x3f]
        %v3216 = vld [vmem:[%s2 + $0x1b8] sm:$0xff]
        %v3218 = vsel %vm486, %v3216, 0
        %3220 = vmatpush.msra.mxu0 0.0
        %3221 = vmatpush.msra.mxu0 0.0
        %3222 = vmatpush.msra.mxu0 0.0
        %3223 = vmatpush.msra.mxu0 0.0
        %3224 = vmatpush.msra.mxu0 0.0
        %3225 = vmatpush.msra.mxu0 0.0
        %3226 = vmatpush.msra.mxu0 0.0
        %3227 = vmatpush.msra.mxu0 0.0
        %3228 = vmatpush.msra.mxu0 0.0
        %3229 = vmatpush.msra.mxu0 0.0
        %3230 = vmatpush.msra.mxu0 0.0
        %3231 = vmatpush.msra.mxu0 0.0
        %3232 = vmatpush.msra.mxu0 0.0
        %3233 = vmatpush.msra.mxu0 0.0
        %3234 = vmatpush.msra.mxu0 0.0
        %3235 = vmatpush.msra.mxu0 %v3212
        %3236 = vmatmul.f32.gmra.mxu0 %v3218
        %v3237 = vpop.f32.mrf.mxu0
        %v3238 = vadd.f32 0.0, %v3237
        %3239 = vdwg.mxu0
        %3240 = vmatpush.msra.mxu0 0.0
        %3241 = vmatpush.msra.mxu0 0.0
        %3242 = vmatpush.msra.mxu0 0.0
        %3243 = vmatpush.msra.mxu0 0.0
        %3244 = vmatpush.msra.mxu0 0.0
        %3245 = vmatpush.msra.mxu0 0.0
        %3246 = vmatpush.msra.mxu0 0.0
        %3247 = vmatpush.msra.mxu0 0.0
        %3248 = vmatpush.msra.mxu0 0.0
        %3249 = vmatpush.msra.mxu0 0.0
        %3250 = vmatpush.msra.mxu0 0.0
        %3251 = vmatpush.msra.mxu0 0.0
        %3252 = vmatpush.msra.mxu0 0.0
        %3253 = vmatpush.msra.mxu0 0.0
        %3254 = vmatpush.msra.mxu0 0.0
        %3255 = vmatpush.msra.mxu0 %v3213
        %3256 = vmatmul.f32.gmra.mxu0 %v3218
        %v3257 = vpop.f32.mrf.mxu0
        %v3258 = vadd.f32 0.0, %v3257
        %3259 = vdwg.mxu0
        %3260 = vmatpush.msra.mxu0 0.0
        %3261 = vmatpush.msra.mxu0 0.0
        %3262 = vmatpush.msra.mxu0 0.0
        %3263 = vmatpush.msra.mxu0 0.0
        %3264 = vmatpush.msra.mxu0 0.0
        %3265 = vmatpush.msra.mxu0 0.0
        %3266 = vmatpush.msra.mxu0 0.0
        %3267 = vmatpush.msra.mxu0 0.0
        %3268 = vmatpush.msra.mxu0 0.0
        %3269 = vmatpush.msra.mxu0 0.0
        %3270 = vmatpush.msra.mxu0 0.0
        %3271 = vmatpush.msra.mxu0 0.0
        %3272 = vmatpush.msra.mxu0 0.0
        %3273 = vmatpush.msra.mxu0 0.0
        %3274 = vmatpush.msra.mxu0 0.0
        %3275 = vmatpush.msra.mxu0 %v3214
        %3276 = vmatmul.f32.gmra.mxu0 %v3218
        %v3277 = vpop.f32.mrf.mxu0
        %v3278 = vadd.f32 0.0, %v3277
        %3279 = vdwg.mxu0
        %v3280 = vadd.f32 %v2792, %v3238
        %v3281 = vadd.f32 %v2793, %v3258
        %v3282 = vadd.f32 %v2794, %v3278
        %v3283 = vld [vmem:[%s2 + $0x1c0] sm:$0xff]
        %3285 = vset.pattern.permute.xlu0 0
        %3286 = vperm.xlu0 %3285, %v3283
        %v3287 = vpop.permute.xlu0 %3286
        %v3289 = vadd.f32 %v3280, %v3287
        %v3290 = vadd.f32 %v3281, %v3287
        %v3291 = vadd.f32 %v3282, %v3287
        %v3292 = vsel %vm718, %v3289, 0.0
        %v3293 = vsel %vm719, %v3290, 0.0
        %v3294 = vsel %vm720, %v3291, 0.0
        %3295 = vrot.lane.b32.xlu0 %v3292, 2
        %v3296 = vpop.permute.xlu0 %3295
        %3297 = vrot.lane.b32.xlu0 %v3293, 2
        %v3298 = vpop.permute.xlu0 %3297
        %3299 = vrot.lane.b32.xlu0 %v3294, 2
        %v3300 = vpop.permute.xlu0 %3299
        %v3301 = vsel %vm1136, %v3298, %v3300
        %v3302 = vsel %vm1136, %v3296, %v3298
        %v3303 = vsel %vm1136, %v3300, %v3296
        %3304 = vrot.lane.b32.xlu0 %v3292, 126
        %v3305 = vpop.permute.xlu0 %3304
        %3306 = vrot.lane.b32.xlu0 %v3293, 126
        %v3307 = vpop.permute.xlu0 %3306
        %3308 = vrot.lane.b32.xlu0 %v3294, 126
        %v3309 = vpop.permute.xlu0 %3308
        %v3310 = vsel %vm1146, %v3307, %v3309
        %v3311 = vsel %vm1146, %v3305, %v3307
        %v3312 = vsel %vm1146, %v3309, %v3305
        %v3313 = vld [vmem:[%s2 + $0x1a8] sm:$0xff]
        %v3314 = vld [vmem:[%s2 + $0x1b0] sm:$0xff]
        %3317 = vrot.lane.b32.xlu0 %v3313, 120
        %v3318 = vpop.permute.xlu0 %3317
        %3319 = vrot.lane.b32.xlu0 %v3314, 120
        %v3320 = vpop.permute.xlu0 %3319
        %v3321 = vsel %vm486, %v3318, 0
        %v3323 = vsel %vm486, %v3320, 0
        %3325 = vmatpush.msra.mxu0 0.0
        %3326 = vmatpush.msra.mxu0 0.0
        %3327 = vmatpush.msra.mxu0 0.0
        %3328 = vmatpush.msra.mxu0 0.0
        %3329 = vmatpush.msra.mxu0 0.0
        %3330 = vmatpush.msra.mxu0 0.0
        %3331 = vmatpush.msra.mxu0 0.0
        %3332 = vmatpush.msra.mxu0 0.0
        %3333 = vmatpush.msra.mxu0 0.0
        %3334 = vmatpush.msra.mxu0 0.0
        %3335 = vmatpush.msra.mxu0 0.0
        %3336 = vmatpush.msra.mxu0 0.0
        %3337 = vmatpush.msra.mxu0 0.0
        %3338 = vmatpush.msra.mxu0 0.0
        %3339 = vmatpush.msra.mxu0 0.0
        %3340 = vmatpush.msra.mxu0 %v3292
        %3341 = vmatmul.f32.gmra.mxu0 %v3321
        %v3342 = vpop.f32.mrf.mxu0
        %v3343 = vadd.f32 0.0, %v3342
        %3344 = vmatmul.f32.gmra.mxu0 %v3323
        %v3345 = vpop.f32.mrf.mxu0
        %v3346 = vadd.f32 0.0, %v3345
        %3347 = vdwg.mxu0
        %3348 = vmatpush.msra.mxu0 0.0
        %3349 = vmatpush.msra.mxu0 0.0
        %3350 = vmatpush.msra.mxu0 0.0
        %3351 = vmatpush.msra.mxu0 0.0
        %3352 = vmatpush.msra.mxu0 0.0
        %3353 = vmatpush.msra.mxu0 0.0
        %3354 = vmatpush.msra.mxu0 0.0
        %3355 = vmatpush.msra.mxu0 0.0
        %3356 = vmatpush.msra.mxu0 0.0
        %3357 = vmatpush.msra.mxu0 0.0
        %3358 = vmatpush.msra.mxu0 0.0
        %3359 = vmatpush.msra.mxu0 0.0
        %3360 = vmatpush.msra.mxu0 0.0
        %3361 = vmatpush.msra.mxu0 0.0
        %3362 = vmatpush.msra.mxu0 0.0
        %3363 = vmatpush.msra.mxu0 %v3293
        %3364 = vmatmul.f32.gmra.mxu0 %v3321
        %v3365 = vpop.f32.mrf.mxu0
        %v3366 = vadd.f32 0.0, %v3365
        %3367 = vmatmul.f32.gmra.mxu0 %v3323
        %v3368 = vpop.f32.mrf.mxu0
        %v3369 = vadd.f32 0.0, %v3368
        %3370 = vdwg.mxu0
        %3371 = vmatpush.msra.mxu0 0.0
        %3372 = vmatpush.msra.mxu0 0.0
        %3373 = vmatpush.msra.mxu0 0.0
        %3374 = vmatpush.msra.mxu0 0.0
        %3375 = vmatpush.msra.mxu0 0.0
        %3376 = vmatpush.msra.mxu0 0.0
        %3377 = vmatpush.msra.mxu0 0.0
        %3378 = vmatpush.msra.mxu0 0.0
        %3379 = vmatpush.msra.mxu0 0.0
        %3380 = vmatpush.msra.mxu0 0.0
        %3381 = vmatpush.msra.mxu0 0.0
        %3382 = vmatpush.msra.mxu0 0.0
        %3383 = vmatpush.msra.mxu0 0.0
        %3384 = vmatpush.msra.mxu0 0.0
        %3385 = vmatpush.msra.mxu0 0.0
        %3386 = vmatpush.msra.mxu0 %v3294
        %3387 = vmatmul.f32.gmra.mxu0 %v3321
        %v3388 = vpop.f32.mrf.mxu0
        %v3389 = vadd.f32 0.0, %v3388
        %3390 = vmatmul.f32.gmra.mxu0 %v3323
        %v3391 = vpop.f32.mrf.mxu0
        %v3392 = vadd.f32 0.0, %v3391
        %3393 = vdwg.mxu0
        %v3394 = vsel %vm486, %v3313, 0
        %v3396 = vsel %vm486, %v3314, 0
        %3398 = vmatpush.msra.mxu0 0.0
        %3399 = vmatpush.msra.mxu0 0.0
        %3400 = vmatpush.msra.mxu0 0.0
        %3401 = vmatpush.msra.mxu0 0.0
        %3402 = vmatpush.msra.mxu0 0.0
        %3403 = vmatpush.msra.mxu0 0.0
        %3404 = vmatpush.msra.mxu0 0.0
        %3405 = vmatpush.msra.mxu0 0.0
        %3406 = vmatpush.msra.mxu0 0.0
        %3407 = vmatpush.msra.mxu0 0.0
        %3408 = vmatpush.msra.mxu0 0.0
        %3409 = vmatpush.msra.mxu0 0.0
        %3410 = vmatpush.msra.mxu0 0.0
        %3411 = vmatpush.msra.mxu0 0.0
        %3412 = vmatpush.msra.mxu0 0.0
        %3413 = vmatpush.msra.mxu0 %v3303
        %3414 = vmatmul.f32.gmra.mxu0 %v3394
        %v3415 = vpop.f32.mrf.mxu0
        %v3416 = vadd.f32 %v3343, %v3415
        %3417 = vmatmul.f32.gmra.mxu0 %v3396
        %v3418 = vpop.f32.mrf.mxu0
        %v3419 = vadd.f32 %v3346, %v3418
        %3420 = vdwg.mxu0
        %3421 = vmatpush.msra.mxu0 0.0
        %3422 = vmatpush.msra.mxu0 0.0
        %3423 = vmatpush.msra.mxu0 0.0
        %3424 = vmatpush.msra.mxu0 0.0
        %3425 = vmatpush.msra.mxu0 0.0
        %3426 = vmatpush.msra.mxu0 0.0
        %3427 = vmatpush.msra.mxu0 0.0
        %3428 = vmatpush.msra.mxu0 0.0
        %3429 = vmatpush.msra.mxu0 0.0
        %3430 = vmatpush.msra.mxu0 0.0
        %3431 = vmatpush.msra.mxu0 0.0
        %3432 = vmatpush.msra.mxu0 0.0
        %3433 = vmatpush.msra.mxu0 0.0
        %3434 = vmatpush.msra.mxu0 0.0
        %3435 = vmatpush.msra.mxu0 0.0
        %3436 = vmatpush.msra.mxu0 %v3302
        %3437 = vmatmul.f32.gmra.mxu0 %v3394
        %v3438 = vpop.f32.mrf.mxu0
        %v3439 = vadd.f32 %v3366, %v3438
        %3440 = vmatmul.f32.gmra.mxu0 %v3396
        %v3441 = vpop.f32.mrf.mxu0
        %v3442 = vadd.f32 %v3369, %v3441
        %3443 = vdwg.mxu0
        %3444 = vmatpush.msra.mxu0 0.0
        %3445 = vmatpush.msra.mxu0 0.0
        %3446 = vmatpush.msra.mxu0 0.0
        %3447 = vmatpush.msra.mxu0 0.0
        %3448 = vmatpush.msra.mxu0 0.0
        %3449 = vmatpush.msra.mxu0 0.0
        %3450 = vmatpush.msra.mxu0 0.0
        %3451 = vmatpush.msra.mxu0 0.0
        %3452 = vmatpush.msra.mxu0 0.0
        %3453 = vmatpush.msra.mxu0 0.0
        %3454 = vmatpush.msra.mxu0 0.0
        %3455 = vmatpush.msra.mxu0 0.0
        %3456 = vmatpush.msra.mxu0 0.0
        %3457 = vmatpush.msra.mxu0 0.0
        %3458 = vmatpush.msra.mxu0 0.0
        %3459 = vmatpush.msra.mxu0 %v3301
        %3460 = vmatmul.f32.gmra.mxu0 %v3394
        %v3461 = vpop.f32.mrf.mxu0
        %v3462 = vadd.f32 %v3389, %v3461
        %3463 = vmatmul.f32.gmra.mxu0 %v3396
        %v3464 = vpop.f32.mrf.mxu0
        %v3465 = vadd.f32 %v3392, %v3464
        %3466 = vdwg.mxu0
        %3467 = vrot.lane.b32.xlu0 %v3313, 112
        %v3468 = vpop.permute.xlu0 %3467
        %3469 = vrot.lane.b32.xlu0 %v3314, 112
        %v3470 = vpop.permute.xlu0 %3469
        %v3471 = vsel %vm486, %v3468, 0
        %v3473 = vsel %vm486, %v3470, 0
        %3475 = vmatpush.msra.mxu0 0.0
        %3476 = vmatpush.msra.mxu0 0.0
        %3477 = vmatpush.msra.mxu0 0.0
        %3478 = vmatpush.msra.mxu0 0.0
        %3479 = vmatpush.msra.mxu0 0.0
        %3480 = vmatpush.msra.mxu0 0.0
        %3481 = vmatpush.msra.mxu0 0.0
        %3482 = vmatpush.msra.mxu0 0.0
        %3483 = vmatpush.msra.mxu0 0.0
        %3484 = vmatpush.msra.mxu0 0.0
        %3485 = vmatpush.msra.mxu0 0.0
        %3486 = vmatpush.msra.mxu0 0.0
        %3487 = vmatpush.msra.mxu0 0.0
        %3488 = vmatpush.msra.mxu0 0.0
        %3489 = vmatpush.msra.mxu0 0.0
        %3490 = vmatpush.msra.mxu0 %v3311
        %3491 = vmatmul.f32.gmra.mxu0 %v3471
        %v3492 = vpop.f32.mrf.mxu0
        %v3493 = vadd.f32 0.0, %v3492
        %3494 = vmatmul.f32.gmra.mxu0 %v3473
        %v3495 = vpop.f32.mrf.mxu0
        %v3496 = vadd.f32 0.0, %v3495
        %3497 = vdwg.mxu0
        %3498 = vmatpush.msra.mxu0 0.0
        %3499 = vmatpush.msra.mxu0 0.0
        %3500 = vmatpush.msra.mxu0 0.0
        %3501 = vmatpush.msra.mxu0 0.0
        %3502 = vmatpush.msra.mxu0 0.0
        %3503 = vmatpush.msra.mxu0 0.0
        %3504 = vmatpush.msra.mxu0 0.0
        %3505 = vmatpush.msra.mxu0 0.0
        %3506 = vmatpush.msra.mxu0 0.0
        %3507 = vmatpush.msra.mxu0 0.0
        %3508 = vmatpush.msra.mxu0 0.0
        %3509 = vmatpush.msra.mxu0 0.0
        %3510 = vmatpush.msra.mxu0 0.0
        %3511 = vmatpush.msra.mxu0 0.0
        %3512 = vmatpush.msra.mxu0 0.0
        %3513 = vmatpush.msra.mxu0 %v3310
        %3514 = vmatmul.f32.gmra.mxu0 %v3471
        %v3515 = vpop.f32.mrf.mxu0
        %v3516 = vadd.f32 0.0, %v3515
        %3517 = vmatmul.f32.gmra.mxu0 %v3473
        %v3518 = vpop.f32.mrf.mxu0
        %v3519 = vadd.f32 0.0, %v3518
        %3520 = vdwg.mxu0
        %3521 = vmatpush.msra.mxu0 0.0
        %3522 = vmatpush.msra.mxu0 0.0
        %3523 = vmatpush.msra.mxu0 0.0
        %3524 = vmatpush.msra.mxu0 0.0
        %3525 = vmatpush.msra.mxu0 0.0
        %3526 = vmatpush.msra.mxu0 0.0
        %3527 = vmatpush.msra.mxu0 0.0
        %3528 = vmatpush.msra.mxu0 0.0
        %3529 = vmatpush.msra.mxu0 0.0
        %3530 = vmatpush.msra.mxu0 0.0
        %3531 = vmatpush.msra.mxu0 0.0
        %3532 = vmatpush.msra.mxu0 0.0
        %3533 = vmatpush.msra.mxu0 0.0
        %3534 = vmatpush.msra.mxu0 0.0
        %3535 = vmatpush.msra.mxu0 0.0
        %3536 = vmatpush.msra.mxu0 %v3312
        %3537 = vmatmul.f32.gmra.mxu0 %v3471
        %v3538 = vpop.f32.mrf.mxu0
        %v3539 = vadd.f32 0.0, %v3538
        %3540 = vmatmul.f32.gmra.mxu0 %v3473
        %v3541 = vpop.f32.mrf.mxu0
        %v3542 = vadd.f32 0.0, %v3541
        %3543 = vdwg.mxu0
        %v3544 = vadd.f32 %v3416, %v3493
        %v3545 = vadd.f32 %v3439, %v3516
        %v3546 = vadd.f32 %v3462, %v3539
        %v3547 = vadd.f32 %v3419, %v3496
        %v3548 = vadd.f32 %v3442, %v3519
        %v3549 = vadd.f32 %v3465, %v3542
        %v3550 = vadd.f32 %v3544, %v2846
        %v3551 = vadd.f32 %v3545, %v2865
        %v3552 = vadd.f32 %v3546, %v2884
        %v3553 = vadd.f32 %v3547, %v2848
        %v3554 = vadd.f32 %v3548, %v2867
        %v3555 = vadd.f32 %v3549, %v2886
        %v3556 = vtanh.pop %v3550
        %v3557 = vtanh.pop %v3551
        %v3558 = vtanh.pop %v3552
        %v3559 = vxor.u32 %v3553, 2147483648
        %v3560 = vxor.u32 %v3554, 2147483648
        %v3561 = vxor.u32 %v3555, 2147483648
        %v3562 = vmul.f32 %v3559, 1.442695
        %v3563 = vpow.pop %v3562
        %v3564 = vmul.f32 %v3560, 1.442695
        %v3565 = vpow.pop %v3564
        %v3566 = vmul.f32 %v3561, 1.442695
        %v3567 = vpow.pop %v3566
        %v3568 = vadd.f32 %v3563, 1.0
        %v3569 = vadd.f32 %v3565, 1.0
        %v3570 = vadd.f32 %v3567, 1.0
        %v3571 = vrcp.pop %v3568
        %v3572 = vmul.f32 %v3568, %v3571
        %v3573 = vsub.f32 1.0, %v3572
        %v3574 = vmul.f32 %v3571, %v3573
        %v3575 = vadd.f32 %v3571, %v3574
        %vm3576 = vweird.f32 %v3568
        %vm3577 = vweird.f32 %v3571
        %vm3578 = vmor %vm3576, %vm3577
        %v3579 = vsel %vm3578, %v3571, %v3575
        %v3580 = vand.u32 2147483647, %v3568
        %vm3581 = vcmp.eq.f32.partialorder %v3580, 8.507059e+37
        %v3582 = vand.u32 %v3568, 2147483648
        %v3583 = vor.u32 1.1754944e-38, %v3582
        %v3584 = vsel %vm3581, %v3583, %v3579
        %v3585 = vmul.f32 1.0, %v3584
        %v3586 = vrcp.pop %v3569
        %v3587 = vmul.f32 %v3569, %v3586
        %v3588 = vsub.f32 1.0, %v3587
        %v3589 = vmul.f32 %v3586, %v3588
        %v3590 = vadd.f32 %v3586, %v3589
        %vm3591 = vweird.f32 %v3569
        %vm3592 = vweird.f32 %v3586
        %vm3593 = vmor %vm3591, %vm3592
        %v3594 = vsel %vm3593, %v3586, %v3590
        %v3595 = vand.u32 2147483647, %v3569
        %vm3596 = vcmp.eq.f32.partialorder %v3595, 8.507059e+37
        %v3597 = vand.u32 %v3569, 2147483648
        %v3598 = vor.u32 1.1754944e-38, %v3597
        %v3599 = vsel %vm3596, %v3598, %v3594
        %v3600 = vmul.f32 1.0, %v3599
        %v3601 = vrcp.pop %v3570
        %v3602 = vmul.f32 %v3570, %v3601
        %v3603 = vsub.f32 1.0, %v3602
        %v3604 = vmul.f32 %v3601, %v3603
        %v3605 = vadd.f32 %v3601, %v3604
        %vm3606 = vweird.f32 %v3570
        %vm3607 = vweird.f32 %v3601
        %vm3608 = vmor %vm3606, %vm3607
        %v3609 = vsel %vm3608, %v3601, %v3605
        %v3610 = vand.u32 2147483647, %v3570
        %vm3611 = vcmp.eq.f32.partialorder %v3610, 8.507059e+37
        %v3612 = vand.u32 %v3570, 2147483648
        %v3613 = vor.u32 1.1754944e-38, %v3612
        %v3614 = vsel %vm3611, %v3613, %v3609
        %v3615 = vmul.f32 1.0, %v3614
        %v3616 = vmul.f32 %v3556, %v3585
        %v3617 = vmul.f32 %v3557, %v3600
        %v3618 = vmul.f32 %v3558, %v3615
        %v3619 = vld [vmem:[%s2 + $0x1ce] sm:$0x3f]
        %v3621 = vsel %vm486, %v3619, 0
        %3623 = vmatpush.msra.mxu0 0.0
        %3624 = vmatpush.msra.mxu0 0.0
        %3625 = vmatpush.msra.mxu0 0.0
        %3626 = vmatpush.msra.mxu0 0.0
        %3627 = vmatpush.msra.mxu0 0.0
        %3628 = vmatpush.msra.mxu0 0.0
        %3629 = vmatpush.msra.mxu0 0.0
        %3630 = vmatpush.msra.mxu0 0.0
        %3631 = vmatpush.msra.mxu0 0.0
        %3632 = vmatpush.msra.mxu0 0.0
        %3633 = vmatpush.msra.mxu0 0.0
        %3634 = vmatpush.msra.mxu0 0.0
        %3635 = vmatpush.msra.mxu0 0.0
        %3636 = vmatpush.msra.mxu0 0.0
        %3637 = vmatpush.msra.mxu0 0.0
        %3638 = vmatpush.msra.mxu0 %v3616
        %3639 = vmatmul.f32.gmra.mxu0 %v3621
        %v3640 = vpop.f32.mrf.mxu0
        %v3641 = vadd.f32 0.0, %v3640
        %3642 = vdwg.mxu0
        %3643 = vmatpush.msra.mxu0 0.0
        %3644 = vmatpush.msra.mxu0 0.0
        %3645 = vmatpush.msra.mxu0 0.0
        %3646 = vmatpush.msra.mxu0 0.0
        %3647 = vmatpush.msra.mxu0 0.0
        %3648 = vmatpush.msra.mxu0 0.0
        %3649 = vmatpush.msra.mxu0 0.0
        %3650 = vmatpush.msra.mxu0 0.0
        %3651 = vmatpush.msra.mxu0 0.0
        %3652 = vmatpush.msra.mxu0 0.0
        %3653 = vmatpush.msra.mxu0 0.0
        %3654 = vmatpush.msra.mxu0 0.0
        %3655 = vmatpush.msra.mxu0 0.0
        %3656 = vmatpush.msra.mxu0 0.0
        %3657 = vmatpush.msra.mxu0 0.0
        %3658 = vmatpush.msra.mxu0 %v3617
        %3659 = vmatmul.f32.gmra.mxu0 %v3621
        %v3660 = vpop.f32.mrf.mxu0
        %v3661 = vadd.f32 0.0, %v3660
        %3662 = vdwg.mxu0
        %3663 = vmatpush.msra.mxu0 0.0
        %3664 = vmatpush.msra.mxu0 0.0
        %3665 = vmatpush.msra.mxu0 0.0
        %3666 = vmatpush.msra.mxu0 0.0
        %3667 = vmatpush.msra.mxu0 0.0
        %3668 = vmatpush.msra.mxu0 0.0
        %3669 = vmatpush.msra.mxu0 0.0
        %3670 = vmatpush.msra.mxu0 0.0
        %3671 = vmatpush.msra.mxu0 0.0
        %3672 = vmatpush.msra.mxu0 0.0
        %3673 = vmatpush.msra.mxu0 0.0
        %3674 = vmatpush.msra.mxu0 0.0
        %3675 = vmatpush.msra.mxu0 0.0
        %3676 = vmatpush.msra.mxu0 0.0
        %3677 = vmatpush.msra.mxu0 0.0
        %3678 = vmatpush.msra.mxu0 %v3618
        %3679 = vmatmul.f32.gmra.mxu0 %v3621
        %v3680 = vpop.f32.mrf.mxu0
        %v3681 = vadd.f32 0.0, %v3680
        %3682 = vdwg.mxu0
        %v3684 = vsel %vm486, %v3215, 0
        %3686 = vmatpush.msra.mxu0 0.0
        %3687 = vmatpush.msra.mxu0 0.0
        %3688 = vmatpush.msra.mxu0 0.0
        %3689 = vmatpush.msra.mxu0 0.0
        %3690 = vmatpush.msra.mxu0 0.0
        %3691 = vmatpush.msra.mxu0 0.0
        %3692 = vmatpush.msra.mxu0 0.0
        %3693 = vmatpush.msra.mxu0 0.0
        %3694 = vmatpush.msra.mxu0 0.0
        %3695 = vmatpush.msra.mxu0 0.0
        %3696 = vmatpush.msra.mxu0 0.0
        %3697 = vmatpush.msra.mxu0 0.0
        %3698 = vmatpush.msra.mxu0 0.0
        %3699 = vmatpush.msra.mxu0 0.0
        %3700 = vmatpush.msra.mxu0 0.0
        %3701 = vmatpush.msra.mxu0 %v3212
        %3702 = vmatmul.f32.gmra.mxu0 %v3684
        %v3703 = vpop.f32.mrf.mxu0
        %v3704 = vadd.f32 %v3641, %v3703
        %3705 = vdwg.mxu0
        %3706 = vmatpush.msra.mxu0 0.0
        %3707 = vmatpush.msra.mxu0 0.0
        %3708 = vmatpush.msra.mxu0 0.0
        %3709 = vmatpush.msra.mxu0 0.0
        %3710 = vmatpush.msra.mxu0 0.0
        %3711 = vmatpush.msra.mxu0 0.0
        %3712 = vmatpush.msra.mxu0 0.0
        %3713 = vmatpush.msra.mxu0 0.0
        %3714 = vmatpush.msra.mxu0 0.0
        %3715 = vmatpush.msra.mxu0 0.0
        %3716 = vmatpush.msra.mxu0 0.0
        %3717 = vmatpush.msra.mxu0 0.0
        %3718 = vmatpush.msra.mxu0 0.0
        %3719 = vmatpush.msra.mxu0 0.0
        %3720 = vmatpush.msra.mxu0 0.0
        %3721 = vmatpush.msra.mxu0 %v3213
        %3722 = vmatmul.f32.gmra.mxu0 %v3684
        %v3723 = vpop.f32.mrf.mxu0
        %v3724 = vadd.f32 %v3661, %v3723
        %3725 = vdwg.mxu0
        %3726 = vmatpush.msra.mxu0 0.0
        %3727 = vmatpush.msra.mxu0 0.0
        %3728 = vmatpush.msra.mxu0 0.0
        %3729 = vmatpush.msra.mxu0 0.0
        %3730 = vmatpush.msra.mxu0 0.0
        %3731 = vmatpush.msra.mxu0 0.0
        %3732 = vmatpush.msra.mxu0 0.0
        %3733 = vmatpush.msra.mxu0 0.0
        %3734 = vmatpush.msra.mxu0 0.0
        %3735 = vmatpush.msra.mxu0 0.0
        %3736 = vmatpush.msra.mxu0 0.0
        %3737 = vmatpush.msra.mxu0 0.0
        %3738 = vmatpush.msra.mxu0 0.0
        %3739 = vmatpush.msra.mxu0 0.0
        %3740 = vmatpush.msra.mxu0 0.0
        %3741 = vmatpush.msra.mxu0 %v3214
        %3742 = vmatmul.f32.gmra.mxu0 %v3684
        %v3743 = vpop.f32.mrf.mxu0
        %v3744 = vadd.f32 %v3681, %v3743
        %3745 = vdwg.mxu0
        %v3746 = vld [vmem:[%s2 + $0x1d4] sm:$0x3f]
        %3748 = vset.pattern.permute.xlu0 0
        %3749 = vperm.xlu0 %3748, %v3746
        %v3750 = vpop.permute.xlu0 %3749
        %v3752 = vadd.f32 %v3704, %v3750
        %v3753 = vadd.f32 %v3724, %v3750
        %v3754 = vadd.f32 %v3744, %v3750
        %3755 = vst [vmem:[%s443 - $0x3] sm:$0x38] %v3753
        %v3756 = vmul.f32 %v3752, 1.442695
        %v3757 = vpow.pop %v3756
        %v3758 = vmul.f32 %v3753, 1.442695
        %v3759 = vpow.pop %v3758
        %v3760 = vmul.f32 %v3754, 1.442695
        %v3761 = vpow.pop %v3760
        %v3762 = vmul.f32 %v3757, %v2735
        %v3763 = vmul.f32 %v3759, %v2758
        %v3764 = vmul.f32 %v3761, %v2781
        %v3768 = vrot.slane %v3752, 5
        %v3769 = vrot.slane %v3753, 5
        %v3770 = vrot.slane %v3754, 5
        %v3774 = vadd.f32 %v3762, %v3768
        %v3775 = vadd.f32 %v3763, %v3769
        %v3776 = vadd.f32 %v3764, %v3770
        %vm3777 = vcmask 1042432
        %v3778 = vsel %vm3777, %v2735, %v3774
        %v3779 = vsel %vm3777, %v2758, %v3775
        %v3780 = vsel %vm3777, %v2781, %v3776
        %v3781 = vsel %vm718, %v3778, 0.0
        %v3782 = vsel %vm719, %v3779, 0.0
        %v3783 = vsel %vm720, %v3780, 0.0
        %v3784 = vld [vmem:[%s2 + $0x1da] sm:$0xff]
        %v3785 = vld [vmem:[%s2 + $0x1e2] sm:$0xff]
        %v3787 = vsel %vm2703, %v3784, 0
        %v3790 = vsel %vm2703, %v3785, 0
        %v3793 = vsel %vm2710, %v3781, 0
        %v3796 = vsel %vm2710, %v3782, 0
        %v3799 = vsel %vm2710, %v3783, 0
        %3801 = vmatpush.msra.mxu0 0.0
        %3802 = vmatpush.msra.mxu0 0.0
        %3803 = vmatpush.msra.mxu0 0.0
        %3804 = vmatpush.msra.mxu0 0.0
        %3805 = vmatpush.msra.mxu0 0.0
        %3806 = vmatpush.msra.mxu0 0.0
        %3807 = vmatpush.msra.mxu0 0.0
        %3808 = vmatpush.msra.mxu0 0.0
        %3809 = vmatpush.msra.mxu0 0.0
        %3810 = vmatpush.msra.mxu0 0.0
        %3811 = vmatpush.msra.mxu0 0.0
        %3812 = vmatpush.msra.mxu0 0.0
        %3813 = vmatpush.msra.mxu0 0.0
        %3814 = vmatpush.msra.mxu0 0.0
        %3815 = vmatpush.msra.mxu0 0.0
        %3816 = vmatpush.msra.mxu0 %v3793
        %3817 = vmatmul.f32.gmra.mxu0 %v3787
        %v3818 = vpop.f32.mrf.mxu0
        %3819 = vmatmul.f32.gmra.mxu0 %v3790
        %v3820 = vpop.f32.mrf.mxu0
        %v3821 = vadd.f32 0.0, %v3820
        %3822 = vdwg.mxu0
        %3823 = vmatpush.msra.mxu0 0.0
        %3824 = vmatpush.msra.mxu0 0.0
        %3825 = vmatpush.msra.mxu0 0.0
        %3826 = vmatpush.msra.mxu0 0.0
        %3827 = vmatpush.msra.mxu0 0.0
        %3828 = vmatpush.msra.mxu0 0.0
        %3829 = vmatpush.msra.mxu0 0.0
        %3830 = vmatpush.msra.mxu0 0.0
        %3831 = vmatpush.msra.mxu0 0.0
        %3832 = vmatpush.msra.mxu0 0.0
        %3833 = vmatpush.msra.mxu0 0.0
        %3834 = vmatpush.msra.mxu0 0.0
        %3835 = vmatpush.msra.mxu0 0.0
        %3836 = vmatpush.msra.mxu0 0.0
        %3837 = vmatpush.msra.mxu0 0.0
        %3838 = vmatpush.msra.mxu0 %v3796
        %3839 = vmatmul.f32.gmra.mxu0 %v3787
        %v3840 = vpop.f32.mrf.mxu0
        %v3841 = vadd.f32 0.0, %v3840
        %3842 = vmatmul.f32.gmra.mxu0 %v3790
        %v3843 = vpop.f32.mrf.mxu0
        %v3844 = vadd.f32 0.0, %v3843
        %3845 = vdwg.mxu0
        %3846 = vmatpush.msra.mxu0 0.0
        %3847 = vmatpush.msra.mxu0 0.0
        %3848 = vmatpush.msra.mxu0 0.0
        %3849 = vmatpush.msra.mxu0 0.0
        %3850 = vmatpush.msra.mxu0 0.0
        %3851 = vmatpush.msra.mxu0 0.0
        %3852 = vmatpush.msra.mxu0 0.0
        %3853 = vmatpush.msra.mxu0 0.0
        %3854 = vmatpush.msra.mxu0 0.0
        %3855 = vmatpush.msra.mxu0 0.0
        %3856 = vmatpush.msra.mxu0 0.0
        %3857 = vmatpush.msra.mxu0 0.0
        %3858 = vmatpush.msra.mxu0 0.0
        %3859 = vmatpush.msra.mxu0 0.0
        %3860 = vmatpush.msra.mxu0 0.0
        %3861 = vmatpush.msra.mxu0 %v3799
        %3862 = vmatmul.f32.gmra.mxu0 %v3787
        %v3863 = vpop.f32.mrf.mxu0
        %3864 = vmatmul.f32.gmra.mxu0 %v3790
        %v3865 = vpop.f32.mrf.mxu0
        %v3866 = vadd.f32 0.0, %v3865
        %3867 = vdwg.mxu0
        %v3868 = vld [vmem:[%s2 + $0x1ea] sm:$0xff]
        %3870 = vset.pattern.permute.xlu0 0
        %3871 = vperm.xlu0 %3870, %v3868
        %v3872 = vpop.permute.xlu0 %3871
        %v3874 = vadd.f32 %v3821, %v3872
        %v3875 = vadd.f32 %v3844, %v3872
        %v3876 = vadd.f32 %v3866, %v3872
        %v3877 = vld [vmem:[%s2 + $0x1f2] sm:$0xff]
        %v3878 = vld [vmem:[%s2 + $0x1fa] sm:$0xff]
        %v3879 = vld [vmem:[%s2 + $0x202] sm:$0xff]
        %v3880 = vld [vmem:[%s2 + $0x20a] sm:$0xff]
        %v3881 = vpack.c.bf16 %v3878, %v3877
        %v3882 = vpack.c.bf16 %v3880, %v3879
        %v3883 = vld [vmem:[%s2 + $0x212] sm:$0xff]
        %v3884 = vld [vmem:[%s2 + $0x21a] sm:$0xff]
        %v3885 = vld [vmem:[%s2 + $0x222] sm:$0xff]
        %v3886 = vld [vmem:[%s2 + $0x22a] sm:$0xff]
        %3888 = vset.pattern.permute.xlu0 0
        %3889 = vperm.xlu0 %3888, %v3883
        %v3890 = vpop.permute.xlu0 %3889
        %3893 = vset.pattern.permute.xlu0 0
        %3894 = vperm.xlu0 %3893, %v3884
        %v3895 = vpop.permute.xlu0 %3894
        %3898 = vset.pattern.permute.xlu0 0
        %3899 = vperm.xlu0 %3898, %v3885
        %v3900 = vpop.permute.xlu0 %3899
        %3903 = vset.pattern.permute.xlu0 0
        %3904 = vperm.xlu0 %3903, %v3886
        %v3905 = vpop.permute.xlu0 %3904
        %v3908 = vsel %vm641, %v3881, 0
        %v3911 = vsel %vm641, %v3882, 0
        %3913 = vmatpush.bf16.msra.mxu0 0
        %3914 = vmatpush.bf16.msra.mxu0 0
        %3915 = vmatpush.bf16.msra.mxu0 0
        %3916 = vmatpush.bf16.msra.mxu0 0
        %3917 = vmatpush.bf16.msra.mxu0 0
        %3918 = vmatpush.bf16.msra.mxu0 %v650
        %3919 = vmatpush.bf16.msra.mxu0 %v629
        %3920 = vmatpush.bf16.msra.mxu0 %v626
        %3921 = vmatmul.bf16.gmra.mxu0 %v3908
        %v3922 = vpop.f32.mrf.mxu0
        %v3923 = vadd.f32 %v3890, %v3922
        %v3924 = vpop.f32.mrf.mxu0
        %v3925 = vadd.f32 %v3895, %v3924
        %3926 = vmatmul.bf16.gmra.mxu0 %v3911
        %v3927 = vpop.f32.mrf.mxu0
        %v3928 = vpop.f32.mrf.mxu0
        %3929 = vdwg.mxu0
        %3930 = vmatpush.bf16.msra.mxu0 0
        %3931 = vmatpush.bf16.msra.mxu0 0
        %3932 = vmatpush.bf16.msra.mxu0 0
        %3933 = vmatpush.bf16.msra.mxu0 0
        %3934 = vmatpush.bf16.msra.mxu0 0
        %3935 = vmatpush.bf16.msra.mxu0 %v653
        %3936 = vmatpush.bf16.msra.mxu0 %v630
        %3937 = vmatpush.bf16.msra.mxu0 %v627
        %3938 = vmatmul.bf16.gmra.mxu0 %v3908
        %v3939 = vpop.f32.mrf.mxu0
        %v3940 = vadd.f32 %v3890, %v3939
        %v3941 = vpop.f32.mrf.mxu0
        %v3942 = vadd.f32 %v3895, %v3941
        %3943 = vmatmul.bf16.gmra.mxu0 %v3911
        %v3944 = vpop.f32.mrf.mxu0
        %v3945 = vadd.f32 %v3900, %v3944
        %v3946 = vpop.f32.mrf.mxu0
        %v3947 = vadd.f32 %v3905, %v3946
        %3948 = vdwg.mxu0
        %3949 = vmatpush.bf16.msra.mxu0 0
        %3950 = vmatpush.bf16.msra.mxu0 0
        %3951 = vmatpush.bf16.msra.mxu0 0
        %3952 = vmatpush.bf16.msra.mxu0 0
        %3953 = vmatpush.bf16.msra.mxu0 0
        %3954 = vmatpush.bf16.msra.mxu0 %v656
        %3955 = vmatpush.bf16.msra.mxu0 %v631
        %3956 = vmatpush.bf16.msra.mxu0 %v628
        %3957 = vmatmul.bf16.gmra.mxu0 %v3908
        %v3958 = vpop.f32.mrf.mxu0
        %v3959 = vadd.f32 %v3890, %v3958
        %v3960 = vpop.f32.mrf.mxu0
        %v3961 = vadd.f32 %v3895, %v3960
        %3962 = vmatmul.bf16.gmra.mxu0 %v3911
        %v3963 = vpop.f32.mrf.mxu0
        %v3964 = vpop.f32.mrf.mxu0
        %3965 = vdwg.mxu0
        %v3966 = vsel %vm718, %v3874, 0.0
        %v3967 = vsel %vm719, %v3875, 0.0
        %v3968 = vsel %vm720, %v3876, 0.0
        %3969 = vrot.lane.b32.xlu0 %v3966, 1
        %v3970 = vpop.permute.xlu0 %3969
        %3971 = vrot.lane.b32.xlu0 %v3967, 1
        %v3972 = vpop.permute.xlu0 %3971
        %3973 = vrot.lane.b32.xlu0 %v3968, 1
        %v3974 = vpop.permute.xlu0 %3973
        %v3975 = vsel %vm730, %v3972, %v3974
        %v3976 = vsel %vm730, %v3970, %v3972
        %v3977 = vsel %vm730, %v3974, %v3970
        %3978 = vrot.lane.b32.xlu0 %v3966, 127
        %v3979 = vpop.permute.xlu0 %3978
        %3980 = vrot.lane.b32.xlu0 %v3967, 127
        %v3981 = vpop.permute.xlu0 %3980
        %3982 = vrot.lane.b32.xlu0 %v3968, 127
        %v3983 = vpop.permute.xlu0 %3982
        %v3984 = vsel %vm740, %v3981, %v3983
        %v3985 = vsel %vm740, %v3979, %v3981
        %v3986 = vsel %vm740, %v3983, %v3979
        %v3987 = vld [vmem:[%s2 + $0x232] sm:$0xff]
        %v3988 = vld [vmem:[%s2 + $0x23a] sm:$0xff]
        %3991 = vrot.lane.b32.xlu0 %v3987, 120
        %v3992 = vpop.permute.xlu0 %3991
        %3993 = vrot.lane.b32.xlu0 %v3988, 120
        %v3994 = vpop.permute.xlu0 %3993
        %v3995 = vsel %vm486, %v3992, 0
        %v3997 = vsel %vm486, %v3994, 0
        %3999 = vmatpush.msra.mxu0 0.0
        %4000 = vmatpush.msra.mxu0 0.0
        %4001 = vmatpush.msra.mxu0 0.0
        %4002 = vmatpush.msra.mxu0 0.0
        %4003 = vmatpush.msra.mxu0 0.0
        %4004 = vmatpush.msra.mxu0 0.0
        %4005 = vmatpush.msra.mxu0 0.0
        %4006 = vmatpush.msra.mxu0 0.0
        %4007 = vmatpush.msra.mxu0 0.0
        %4008 = vmatpush.msra.mxu0 0.0
        %4009 = vmatpush.msra.mxu0 0.0
        %4010 = vmatpush.msra.mxu0 0.0
        %4011 = vmatpush.msra.mxu0 0.0
        %4012 = vmatpush.msra.mxu0 0.0
        %4013 = vmatpush.msra.mxu0 0.0
        %4014 = vmatpush.msra.mxu0 %v3966
        %4015 = vmatmul.f32.gmra.mxu0 %v3995
        %v4016 = vpop.f32.mrf.mxu0
        %v4017 = vadd.f32 0.0, %v4016
        %4018 = vmatmul.f32.gmra.mxu0 %v3997
        %v4019 = vpop.f32.mrf.mxu0
        %v4020 = vadd.f32 0.0, %v4019
        %4021 = vdwg.mxu0
        %4022 = vmatpush.msra.mxu0 0.0
        %4023 = vmatpush.msra.mxu0 0.0
        %4024 = vmatpush.msra.mxu0 0.0
        %4025 = vmatpush.msra.mxu0 0.0
        %4026 = vmatpush.msra.mxu0 0.0
        %4027 = vmatpush.msra.mxu0 0.0
        %4028 = vmatpush.msra.mxu0 0.0
        %4029 = vmatpush.msra.mxu0 0.0
        %4030 = vmatpush.msra.mxu0 0.0
        %4031 = vmatpush.msra.mxu0 0.0
        %4032 = vmatpush.msra.mxu0 0.0
        %4033 = vmatpush.msra.mxu0 0.0
        %4034 = vmatpush.msra.mxu0 0.0
        %4035 = vmatpush.msra.mxu0 0.0
        %4036 = vmatpush.msra.mxu0 0.0
        %4037 = vmatpush.msra.mxu0 %v3967
        %4038 = vmatmul.f32.gmra.mxu0 %v3995
        %v4039 = vpop.f32.mrf.mxu0
        %v4040 = vadd.f32 0.0, %v4039
        %4041 = vmatmul.f32.gmra.mxu0 %v3997
        %v4042 = vpop.f32.mrf.mxu0
        %v4043 = vadd.f32 0.0, %v4042
        %4044 = vdwg.mxu0
        %4045 = vmatpush.msra.mxu0 0.0
        %4046 = vmatpush.msra.mxu0 0.0
        %4047 = vmatpush.msra.mxu0 0.0
        %4048 = vmatpush.msra.mxu0 0.0
        %4049 = vmatpush.msra.mxu0 0.0
        %4050 = vmatpush.msra.mxu0 0.0
        %4051 = vmatpush.msra.mxu0 0.0
        %4052 = vmatpush.msra.mxu0 0.0
        %4053 = vmatpush.msra.mxu0 0.0
        %4054 = vmatpush.msra.mxu0 0.0
        %4055 = vmatpush.msra.mxu0 0.0
        %4056 = vmatpush.msra.mxu0 0.0
        %4057 = vmatpush.msra.mxu0 0.0
        %4058 = vmatpush.msra.mxu0 0.0
        %4059 = vmatpush.msra.mxu0 0.0
        %4060 = vmatpush.msra.mxu0 %v3968
        %4061 = vmatmul.f32.gmra.mxu0 %v3995
        %v4062 = vpop.f32.mrf.mxu0
        %v4063 = vadd.f32 0.0, %v4062
        %4064 = vmatmul.f32.gmra.mxu0 %v3997
        %v4065 = vpop.f32.mrf.mxu0
        %v4066 = vadd.f32 0.0, %v4065
        %4067 = vdwg.mxu0
        %v4068 = vsel %vm486, %v3987, 0
        %v4070 = vsel %vm486, %v3988, 0
        %4072 = vmatpush.msra.mxu0 0.0
        %4073 = vmatpush.msra.mxu0 0.0
        %4074 = vmatpush.msra.mxu0 0.0
        %4075 = vmatpush.msra.mxu0 0.0
        %4076 = vmatpush.msra.mxu0 0.0
        %4077 = vmatpush.msra.mxu0 0.0
        %4078 = vmatpush.msra.mxu0 0.0
        %4079 = vmatpush.msra.mxu0 0.0
        %4080 = vmatpush.msra.mxu0 0.0
        %4081 = vmatpush.msra.mxu0 0.0
        %4082 = vmatpush.msra.mxu0 0.0
        %4083 = vmatpush.msra.mxu0 0.0
        %4084 = vmatpush.msra.mxu0 0.0
        %4085 = vmatpush.msra.mxu0 0.0
        %4086 = vmatpush.msra.mxu0 0.0
        %4087 = vmatpush.msra.mxu0 %v3977
        %4088 = vmatmul.f32.gmra.mxu0 %v4068
        %v4089 = vpop.f32.mrf.mxu0
        %v4090 = vadd.f32 %v4017, %v4089
        %4091 = vmatmul.f32.gmra.mxu0 %v4070
        %v4092 = vpop.f32.mrf.mxu0
        %v4093 = vadd.f32 %v4020, %v4092
        %4094 = vdwg.mxu0
        %4095 = vmatpush.msra.mxu0 0.0
        %4096 = vmatpush.msra.mxu0 0.0
        %4097 = vmatpush.msra.mxu0 0.0
        %4098 = vmatpush.msra.mxu0 0.0
        %4099 = vmatpush.msra.mxu0 0.0
        %4100 = vmatpush.msra.mxu0 0.0
        %4101 = vmatpush.msra.mxu0 0.0
        %4102 = vmatpush.msra.mxu0 0.0
        %4103 = vmatpush.msra.mxu0 0.0
        %4104 = vmatpush.msra.mxu0 0.0
        %4105 = vmatpush.msra.mxu0 0.0
        %4106 = vmatpush.msra.mxu0 0.0
        %4107 = vmatpush.msra.mxu0 0.0
        %4108 = vmatpush.msra.mxu0 0.0
        %4109 = vmatpush.msra.mxu0 0.0
        %4110 = vmatpush.msra.mxu0 %v3976
        %4111 = vmatmul.f32.gmra.mxu0 %v4068
        %v4112 = vpop.f32.mrf.mxu0
        %v4113 = vadd.f32 %v4040, %v4112
        %4114 = vmatmul.f32.gmra.mxu0 %v4070
        %v4115 = vpop.f32.mrf.mxu0
        %v4116 = vadd.f32 %v4043, %v4115
        %4117 = vdwg.mxu0
        %4118 = vmatpush.msra.mxu0 0.0
        %4119 = vmatpush.msra.mxu0 0.0
        %4120 = vmatpush.msra.mxu0 0.0
        %4121 = vmatpush.msra.mxu0 0.0
        %4122 = vmatpush.msra.mxu0 0.0
        %4123 = vmatpush.msra.mxu0 0.0
        %4124 = vmatpush.msra.mxu0 0.0
        %4125 = vmatpush.msra.mxu0 0.0
        %4126 = vmatpush.msra.mxu0 0.0
        %4127 = vmatpush.msra.mxu0 0.0
        %4128 = vmatpush.msra.mxu0 0.0
        %4129 = vmatpush.msra.mxu0 0.0
        %4130 = vmatpush.msra.mxu0 0.0
        %4131 = vmatpush.msra.mxu0 0.0
        %4132 = vmatpush.msra.mxu0 0.0
        %4133 = vmatpush.msra.mxu0 %v3975
        %4134 = vmatmul.f32.gmra.mxu0 %v4068
        %v4135 = vpop.f32.mrf.mxu0
        %v4136 = vadd.f32 %v4063, %v4135
        %4137 = vmatmul.f32.gmra.mxu0 %v4070
        %v4138 = vpop.f32.mrf.mxu0
        %v4139 = vadd.f32 %v4066, %v4138
        %4140 = vdwg.mxu0
        %4141 = vrot.lane.b32.xlu0 %v3987, 112
        %v4142 = vpop.permute.xlu0 %4141
        %4143 = vrot.lane.b32.xlu0 %v3988, 112
        %v4144 = vpop.permute.xlu0 %4143
        %v4145 = vsel %vm486, %v4142, 0
        %v4147 = vsel %vm486, %v4144, 0
        %4149 = vmatpush.msra.mxu0 0.0
        %4150 = vmatpush.msra.mxu0 0.0
        %4151 = vmatpush.msra.mxu0 0.0
        %4152 = vmatpush.msra.mxu0 0.0
        %4153 = vmatpush.msra.mxu0 0.0
        %4154 = vmatpush.msra.mxu0 0.0
        %4155 = vmatpush.msra.mxu0 0.0
        %4156 = vmatpush.msra.mxu0 0.0
        %4157 = vmatpush.msra.mxu0 0.0
        %4158 = vmatpush.msra.mxu0 0.0
        %4159 = vmatpush.msra.mxu0 0.0
        %4160 = vmatpush.msra.mxu0 0.0
        %4161 = vmatpush.msra.mxu0 0.0
        %4162 = vmatpush.msra.mxu0 0.0
        %4163 = vmatpush.msra.mxu0 0.0
        %4164 = vmatpush.msra.mxu0 %v3985
        %4165 = vmatmul.f32.gmra.mxu0 %v4145
        %v4166 = vpop.f32.mrf.mxu0
        %v4167 = vadd.f32 0.0, %v4166
        %4168 = vmatmul.f32.gmra.mxu0 %v4147
        %v4169 = vpop.f32.mrf.mxu0
        %v4170 = vadd.f32 0.0, %v4169
        %4171 = vdwg.mxu0
        %4172 = vmatpush.msra.mxu0 0.0
        %4173 = vmatpush.msra.mxu0 0.0
        %4174 = vmatpush.msra.mxu0 0.0
        %4175 = vmatpush.msra.mxu0 0.0
        %4176 = vmatpush.msra.mxu0 0.0
        %4177 = vmatpush.msra.mxu0 0.0
        %4178 = vmatpush.msra.mxu0 0.0
        %4179 = vmatpush.msra.mxu0 0.0
        %4180 = vmatpush.msra.mxu0 0.0
        %4181 = vmatpush.msra.mxu0 0.0
        %4182 = vmatpush.msra.mxu0 0.0
        %4183 = vmatpush.msra.mxu0 0.0
        %4184 = vmatpush.msra.mxu0 0.0
        %4185 = vmatpush.msra.mxu0 0.0
        %4186 = vmatpush.msra.mxu0 0.0
        %4187 = vmatpush.msra.mxu0 %v3984
        %4188 = vmatmul.f32.gmra.mxu0 %v4145
        %v4189 = vpop.f32.mrf.mxu0
        %v4190 = vadd.f32 0.0, %v4189
        %4191 = vmatmul.f32.gmra.mxu0 %v4147
        %v4192 = vpop.f32.mrf.mxu0
        %v4193 = vadd.f32 0.0, %v4192
        %4194 = vdwg.mxu0
        %4195 = vmatpush.msra.mxu0 0.0
        %4196 = vmatpush.msra.mxu0 0.0
        %4197 = vmatpush.msra.mxu0 0.0
        %4198 = vmatpush.msra.mxu0 0.0
        %4199 = vmatpush.msra.mxu0 0.0
        %4200 = vmatpush.msra.mxu0 0.0
        %4201 = vmatpush.msra.mxu0 0.0
        %4202 = vmatpush.msra.mxu0 0.0
        %4203 = vmatpush.msra.mxu0 0.0
        %4204 = vmatpush.msra.mxu0 0.0
        %4205 = vmatpush.msra.mxu0 0.0
        %4206 = vmatpush.msra.mxu0 0.0
        %4207 = vmatpush.msra.mxu0 0.0
        %4208 = vmatpush.msra.mxu0 0.0
        %4209 = vmatpush.msra.mxu0 0.0
        %4210 = vmatpush.msra.mxu0 %v3986
        %4211 = vmatmul.f32.gmra.mxu0 %v4145
        %v4212 = vpop.f32.mrf.mxu0
        %v4213 = vadd.f32 0.0, %v4212
        %4214 = vmatmul.f32.gmra.mxu0 %v4147
        %v4215 = vpop.f32.mrf.mxu0
        %v4216 = vadd.f32 0.0, %v4215
        %4217 = vdwg.mxu0
        %v4218 = vadd.f32 %v4090, %v4167
        %v4219 = vadd.f32 %v4113, %v4190
        %v4220 = vadd.f32 %v4136, %v4213
        %v4221 = vadd.f32 %v4093, %v4170
        %v4222 = vadd.f32 %v4116, %v4193
        %v4223 = vadd.f32 %v4139, %v4216
        %v4224 = vadd.f32 %v4218, %v3923
        %v4225 = vadd.f32 %v4219, %v3940
        %v4226 = vadd.f32 %v4220, %v3959
        %v4227 = vadd.f32 %v4221, %v3925
        %v4228 = vadd.f32 %v4222, %v3942
        %v4229 = vadd.f32 %v4223, %v3961
        %v4230 = vtanh.pop %v4224
        %v4231 = vtanh.pop %v4225
        %v4232 = vtanh.pop %v4226
        %v4233 = vxor.u32 %v4227, 2147483648
        %v4234 = vxor.u32 %v4228, 2147483648
        %v4235 = vxor.u32 %v4229, 2147483648
        %v4236 = vmul.f32 %v4233, 1.442695
        %v4237 = vpow.pop %v4236
        %v4238 = vmul.f32 %v4234, 1.442695
        %v4239 = vpow.pop %v4238
        %v4240 = vmul.f32 %v4235, 1.442695
        %v4241 = vpow.pop %v4240
        %v4242 = vadd.f32 %v4237, 1.0
        %v4243 = vadd.f32 %v4239, 1.0
        %v4244 = vadd.f32 %v4241, 1.0
        %v4245 = vrcp.pop %v4242
        %v4246 = vmul.f32 %v4242, %v4245
        %v4247 = vsub.f32 1.0, %v4246
        %v4248 = vmul.f32 %v4245, %v4247
        %v4249 = vadd.f32 %v4245, %v4248
        %vm4250 = vweird.f32 %v4242
        %vm4251 = vweird.f32 %v4245
        %vm4252 = vmor %vm4250, %vm4251
        %v4253 = vsel %vm4252, %v4245, %v4249
        %v4254 = vand.u32 2147483647, %v4242
        %vm4255 = vcmp.eq.f32.partialorder %v4254, 8.507059e+37
        %v4256 = vand.u32 %v4242, 2147483648
        %v4257 = vor.u32 1.1754944e-38, %v4256
        %v4258 = vsel %vm4255, %v4257, %v4253
        %v4259 = vmul.f32 1.0, %v4258
        %v4260 = vrcp.pop %v4243
        %v4261 = vmul.f32 %v4243, %v4260
        %v4262 = vsub.f32 1.0, %v4261
        %v4263 = vmul.f32 %v4260, %v4262
        %v4264 = vadd.f32 %v4260, %v4263
        %vm4265 = vweird.f32 %v4243
        %vm4266 = vweird.f32 %v4260
        %vm4267 = vmor %vm4265, %vm4266
        %v4268 = vsel %vm4267, %v4260, %v4264
        %v4269 = vand.u32 2147483647, %v4243
        %vm4270 = vcmp.eq.f32.partialorder %v4269, 8.507059e+37
        %v4271 = vand.u32 %v4243, 2147483648
        %v4272 = vor.u32 1.1754944e-38, %v4271
        %v4273 = vsel %vm4270, %v4272, %v4268
        %v4274 = vmul.f32 1.0, %v4273
        %v4275 = vrcp.pop %v4244
        %v4276 = vmul.f32 %v4244, %v4275
        %v4277 = vsub.f32 1.0, %v4276
        %v4278 = vmul.f32 %v4275, %v4277
        %v4279 = vadd.f32 %v4275, %v4278
        %vm4280 = vweird.f32 %v4244
        %vm4281 = vweird.f32 %v4275
        %vm4282 = vmor %vm4280, %vm4281
        %v4283 = vsel %vm4282, %v4275, %v4279
        %v4284 = vand.u32 2147483647, %v4244
        %vm4285 = vcmp.eq.f32.partialorder %v4284, 8.507059e+37
        %v4286 = vand.u32 %v4244, 2147483648
        %v4287 = vor.u32 1.1754944e-38, %v4286
        %v4288 = vsel %vm4285, %v4287, %v4283
        %v4289 = vmul.f32 1.0, %v4288
        %v4290 = vmul.f32 %v4230, %v4259
        %v4291 = vmul.f32 %v4231, %v4274
        %v4292 = vmul.f32 %v4232, %v4289
        %v4293 = vld [vmem:[%s2 + $0x262] sm:$0x3f]
        %v4294 = vld [vmem:[%s2 + $0x252] sm:$0xff]
        %v4296 = vsel %vm486, %v4294, 0
        %4298 = vmatpush.msra.mxu0 0.0
        %4299 = vmatpush.msra.mxu0 0.0
        %4300 = vmatpush.msra.mxu0 0.0
        %4301 = vmatpush.msra.mxu0 0.0
        %4302 = vmatpush.msra.mxu0 0.0
        %4303 = vmatpush.msra.mxu0 0.0
        %4304 = vmatpush.msra.mxu0 0.0
        %4305 = vmatpush.msra.mxu0 0.0
        %4306 = vmatpush.msra.mxu0 0.0
        %4307 = vmatpush.msra.mxu0 0.0
        %4308 = vmatpush.msra.mxu0 0.0
        %4309 = vmatpush.msra.mxu0 0.0
        %4310 = vmatpush.msra.mxu0 0.0
        %4311 = vmatpush.msra.mxu0 0.0
        %4312 = vmatpush.msra.mxu0 0.0
        %4313 = vmatpush.msra.mxu0 %v4290
        %4314 = vmatmul.f32.gmra.mxu0 %v4296
        %v4315 = vpop.f32.mrf.mxu0
        %v4316 = vadd.f32 0.0, %v4315
        %4317 = vdwg.mxu0
        %4318 = vmatpush.msra.mxu0 0.0
        %4319 = vmatpush.msra.mxu0 0.0
        %4320 = vmatpush.msra.mxu0 0.0
        %4321 = vmatpush.msra.mxu0 0.0
        %4322 = vmatpush.msra.mxu0 0.0
        %4323 = vmatpush.msra.mxu0 0.0
        %4324 = vmatpush.msra.mxu0 0.0
        %4325 = vmatpush.msra.mxu0 0.0
        %4326 = vmatpush.msra.mxu0 0.0
        %4327 = vmatpush.msra.mxu0 0.0
        %4328 = vmatpush.msra.mxu0 0.0
        %4329 = vmatpush.msra.mxu0 0.0
        %4330 = vmatpush.msra.mxu0 0.0
        %4331 = vmatpush.msra.mxu0 0.0
        %4332 = vmatpush.msra.mxu0 0.0
        %4333 = vmatpush.msra.mxu0 %v4291
        %4334 = vmatmul.f32.gmra.mxu0 %v4296
        %v4335 = vpop.f32.mrf.mxu0
        %v4336 = vadd.f32 0.0, %v4335
        %4337 = vdwg.mxu0
        %4338 = vmatpush.msra.mxu0 0.0
        %4339 = vmatpush.msra.mxu0 0.0
        %4340 = vmatpush.msra.mxu0 0.0
        %4341 = vmatpush.msra.mxu0 0.0
        %4342 = vmatpush.msra.mxu0 0.0
        %4343 = vmatpush.msra.mxu0 0.0
        %4344 = vmatpush.msra.mxu0 0.0
        %4345 = vmatpush.msra.mxu0 0.0
        %4346 = vmatpush.msra.mxu0 0.0
        %4347 = vmatpush.msra.mxu0 0.0
        %4348 = vmatpush.msra.mxu0 0.0
        %4349 = vmatpush.msra.mxu0 0.0
        %4350 = vmatpush.msra.mxu0 0.0
        %4351 = vmatpush.msra.mxu0 0.0
        %4352 = vmatpush.msra.mxu0 0.0
        %4353 = vmatpush.msra.mxu0 %v4292
        %4354 = vmatmul.f32.gmra.mxu0 %v4296
        %v4355 = vpop.f32.mrf.mxu0
        %v4356 = vadd.f32 0.0, %v4355
        %4357 = vdwg.mxu0
        %v4358 = vadd.f32 %v3874, %v4316
        %v4359 = vadd.f32 %v3875, %v4336
        %v4360 = vadd.f32 %v3876, %v4356
        %v4361 = vld [vmem:[%s2 + $0x25a] sm:$0xff]
        %4363 = vset.pattern.permute.xlu0 0
        %4364 = vperm.xlu0 %4363, %v4361
        %v4365 = vpop.permute.xlu0 %4364
        %v4367 = vadd.f32 %v4358, %v4365
        %v4368 = vadd.f32 %v4359, %v4365
        %v4369 = vadd.f32 %v4360, %v4365
        %v4370 = vsel %vm718, %v4367, 0.0
        %v4371 = vsel %vm719, %v4368, 0.0
        %v4372 = vsel %vm720, %v4369, 0.0
        %4373 = vrot.lane.b32.xlu0 %v4370, 2
        %v4374 = vpop.permute.xlu0 %4373
        %4375 = vrot.lane.b32.xlu0 %v4371, 2
        %v4376 = vpop.permute.xlu0 %4375
        %v4377 = vsel %vm1136, %v4374, %v4376
        %4378 = vrot.lane.b32.xlu0 %v4371, 126
        %v4379 = vpop.permute.xlu0 %4378
        %4380 = vrot.lane.b32.xlu0 %v4372, 126
        %v4381 = vpop.permute.xlu0 %4380
        %v4382 = vsel %vm1146, %v4379, %v4381
        %v4383 = vld [vmem:[%s2 + $0x242] sm:$0xff]
        %v4384 = vld [vmem:[%s2 + $0x24a] sm:$0xff]
        %4387 = vrot.lane.b32.xlu0 %v4383, 120
        %v4388 = vpop.permute.xlu0 %4387
        %4389 = vrot.lane.b32.xlu0 %v4384, 120
        %v4390 = vpop.permute.xlu0 %4389
        %v4391 = vsel %vm486, %v4388, 0
        %v4393 = vsel %vm486, %v4390, 0
        %4395 = vmatpush.msra.mxu0 0.0
        %4396 = vmatpush.msra.mxu0 0.0
        %4397 = vmatpush.msra.mxu0 0.0
        %4398 = vmatpush.msra.mxu0 0.0
        %4399 = vmatpush.msra.mxu0 0.0
        %4400 = vmatpush.msra.mxu0 0.0
        %4401 = vmatpush.msra.mxu0 0.0
        %4402 = vmatpush.msra.mxu0 0.0
        %4403 = vmatpush.msra.mxu0 0.0
        %4404 = vmatpush.msra.mxu0 0.0
        %4405 = vmatpush.msra.mxu0 0.0
        %4406 = vmatpush.msra.mxu0 0.0
        %4407 = vmatpush.msra.mxu0 0.0
        %4408 = vmatpush.msra.mxu0 0.0
        %4409 = vmatpush.msra.mxu0 0.0
        %4410 = vmatpush.msra.mxu0 %v4371
        %4411 = vmatmul.f32.gmra.mxu0 %v4391
        %v4412 = vpop.f32.mrf.mxu0
        %v4413 = vadd.f32 0.0, %v4412
        %4414 = vmatmul.f32.gmra.mxu0 %v4393
        %v4415 = vpop.f32.mrf.mxu0
        %v4416 = vadd.f32 0.0, %v4415
        %4417 = vdwg.mxu0
        %v4418 = vsel %vm486, %v4383, 0
        %v4420 = vsel %vm486, %v4384, 0
        %4422 = vmatpush.msra.mxu0 0.0
        %4423 = vmatpush.msra.mxu0 0.0
        %4424 = vmatpush.msra.mxu0 0.0
        %4425 = vmatpush.msra.mxu0 0.0
        %4426 = vmatpush.msra.mxu0 0.0
        %4427 = vmatpush.msra.mxu0 0.0
        %4428 = vmatpush.msra.mxu0 0.0
        %4429 = vmatpush.msra.mxu0 0.0
        %4430 = vmatpush.msra.mxu0 0.0
        %4431 = vmatpush.msra.mxu0 0.0
        %4432 = vmatpush.msra.mxu0 0.0
        %4433 = vmatpush.msra.mxu0 0.0
        %4434 = vmatpush.msra.mxu0 0.0
        %4435 = vmatpush.msra.mxu0 0.0
        %4436 = vmatpush.msra.mxu0 0.0
        %4437 = vmatpush.msra.mxu0 %v4377
        %4438 = vmatmul.f32.gmra.mxu0 %v4418
        %v4439 = vpop.f32.mrf.mxu0
        %v4440 = vadd.f32 %v4413, %v4439
        %4441 = vmatmul.f32.gmra.mxu0 %v4420
        %v4442 = vpop.f32.mrf.mxu0
        %v4443 = vadd.f32 %v4416, %v4442
        %4444 = vdwg.mxu0
        %4445 = vrot.lane.b32.xlu0 %v4383, 112
        %v4446 = vpop.permute.xlu0 %4445
        %4447 = vrot.lane.b32.xlu0 %v4384, 112
        %v4448 = vpop.permute.xlu0 %4447
        %v4449 = vsel %vm486, %v4446, 0
        %v4451 = vsel %vm486, %v4448, 0
        %4453 = vmatpush.msra.mxu0 0.0
        %4454 = vmatpush.msra.mxu0 0.0
        %4455 = vmatpush.msra.mxu0 0.0
        %4456 = vmatpush.msra.mxu0 0.0
        %4457 = vmatpush.msra.mxu0 0.0
        %4458 = vmatpush.msra.mxu0 0.0
        %4459 = vmatpush.msra.mxu0 0.0
        %4460 = vmatpush.msra.mxu0 0.0
        %4461 = vmatpush.msra.mxu0 0.0
        %4462 = vmatpush.msra.mxu0 0.0
        %4463 = vmatpush.msra.mxu0 0.0
        %4464 = vmatpush.msra.mxu0 0.0
        %4465 = vmatpush.msra.mxu0 0.0
        %4466 = vmatpush.msra.mxu0 0.0
        %4467 = vmatpush.msra.mxu0 0.0
        %4468 = vmatpush.msra.mxu0 %v4382
        %4469 = vmatmul.f32.gmra.mxu0 %v4449
        %v4470 = vpop.f32.mrf.mxu0
        %v4471 = vadd.f32 0.0, %v4470
        %4472 = vmatmul.f32.gmra.mxu0 %v4451
        %v4473 = vpop.f32.mrf.mxu0
        %v4474 = vadd.f32 0.0, %v4473
        %4475 = vdwg.mxu0
        %v4476 = vadd.f32 %v4440, %v4471
        %v4477 = vadd.f32 %v4443, %v4474
        %v4478 = vadd.f32 %v4476, %v3945
        %v4479 = vadd.f32 %v4477, %v3947
        %v4480 = vtanh.pop %v4478
        %v4481 = vxor.u32 %v4479, 2147483648
        %v4482 = vmul.f32 %v4481, 1.442695
        %v4483 = vpow.pop %v4482
        %v4484 = vadd.f32 %v4483, 1.0
        %v4485 = vrcp.pop %v4484
        %v4486 = vmul.f32 %v4484, %v4485
        %v4487 = vsub.f32 1.0, %v4486
        %v4488 = vmul.f32 %v4485, %v4487
        %v4489 = vadd.f32 %v4485, %v4488
        %vm4490 = vweird.f32 %v4484
        %vm4491 = vweird.f32 %v4485
        %vm4492 = vmor %vm4490, %vm4491
        %v4493 = vsel %vm4492, %v4485, %v4489
        %v4494 = vand.u32 2147483647, %v4484
        %vm4495 = vcmp.eq.f32.partialorder %v4494, 8.507059e+37
        %v4496 = vand.u32 %v4484, 2147483648
        %v4497 = vor.u32 1.1754944e-38, %v4496
        %v4498 = vsel %vm4495, %v4497, %v4493
        %v4499 = vmul.f32 1.0, %v4498
        %v4500 = vmul.f32 %v4480, %v4499
        %v4501 = vld [vmem:[%s2 + $0x268] sm:$0x3f]
        %v4503 = vsel %vm486, %v4501, 0
        %4505 = vmatpush.msra.mxu0 0.0
        %4506 = vmatpush.msra.mxu0 0.0
        %4507 = vmatpush.msra.mxu0 0.0
        %4508 = vmatpush.msra.mxu0 0.0
        %4509 = vmatpush.msra.mxu0 0.0
        %4510 = vmatpush.msra.mxu0 0.0
        %4511 = vmatpush.msra.mxu0 0.0
        %4512 = vmatpush.msra.mxu0 0.0
        %4513 = vmatpush.msra.mxu0 0.0
        %4514 = vmatpush.msra.mxu0 0.0
        %4515 = vmatpush.msra.mxu0 0.0
        %4516 = vmatpush.msra.mxu0 0.0
        %4517 = vmatpush.msra.mxu0 0.0
        %4518 = vmatpush.msra.mxu0 0.0
        %4519 = vmatpush.msra.mxu0 0.0
        %4520 = vmatpush.msra.mxu0 %v4500
        %4521 = vmatmul.f32.gmra.mxu0 %v4503
        %v4522 = vpop.f32.mrf.mxu0
        %v4523 = vadd.f32 0.0, %v4522
        %4524 = vdwg.mxu0
        %v4526 = vsel %vm486, %v4293, 0
        %4528 = vmatpush.msra.mxu0 0.0
        %4529 = vmatpush.msra.mxu0 0.0
        %4530 = vmatpush.msra.mxu0 0.0
        %4531 = vmatpush.msra.mxu0 0.0
        %4532 = vmatpush.msra.mxu0 0.0
        %4533 = vmatpush.msra.mxu0 0.0
        %4534 = vmatpush.msra.mxu0 0.0
        %4535 = vmatpush.msra.mxu0 0.0
        %4536 = vmatpush.msra.mxu0 0.0
        %4537 = vmatpush.msra.mxu0 0.0
        %4538 = vmatpush.msra.mxu0 0.0
        %4539 = vmatpush.msra.mxu0 0.0
        %4540 = vmatpush.msra.mxu0 0.0
        %4541 = vmatpush.msra.mxu0 0.0
        %4542 = vmatpush.msra.mxu0 0.0
        %4543 = vmatpush.msra.mxu0 %v4291
        %4544 = vmatmul.f32.gmra.mxu0 %v4526
        %v4545 = vpop.f32.mrf.mxu0
        %v4546 = vadd.f32 %v4523, %v4545
        %4547 = vdwg.mxu0
        %v4548 = vld [vmem:[%s2 + $0x26e] sm:$0x3f]
        %4550 = vset.pattern.permute.xlu0 0
        %4551 = vperm.xlu0 %4550, %v4548
        %v4552 = vpop.permute.xlu0 %4551
        %v4554 = vadd.f32 %v4546, %v4552
        %4555 = vst [vmem:[%s450 - $0x3] sm:$0x38] %v4554
        %v4556 = vmul.f32 %v4554, 1.442695
        %v4557 = vpow.pop %v4556
        %v4558 = vmul.f32 %v4557, %v3841
        %v4560 = vrot.slane %v4554, 5
        %v4562 = vadd.f32 %v4558, %v4560
        %4563 = vst [vmem:[%s436] sm:$0x7] %v3841
        %4564 = vst [vmem:[%s436] sm:$0x38] %v4562
        %p4565 = scmp.lt.s32.totalorder %s30, 1
        %s4566 = scalar_select %p4565, %s30, 1
        %p4567 = scmp.lt.s32.totalorder %s31, 0
        %s4568 = scalar_select %p4567, %s31, 0
        %s4569 = sadd.s32 %s4568, %s4566
        %s4570 = smul.addr %s4569, 2
        %s4571 = scalar_lea.vmem %s3, %s4570
        %p4572 = scmp.lt.s32.totalorder %s30, 1
        %s4573 = scalar_select %p4572, %s30, 1
        %p4574 = scmp.lt.s32.totalorder %s31, 0
        %s4575 = scalar_select %p4574, %s31, 0
        %s4576 = sadd.s32 %s4575, %s4573
        %s4577 = smul.addr %s4576, 8
        %s4578 = scalar_lea.vmem %s4, %s4577
        %s4579 = sand.u32 %s181, 1
        %s4580 = scalar_lea.sflag [#allocation3], %s4579
        %s4581 = sand.u32 %s181, 1
        %s4582 = smul.addr %s4581, 4
        %s4583 = scalar_lea.vmem [#allocation2], %s4582
        %s4584 = sand.u32 %s209, 1
        %s4585 = scalar_lea.sflag [#allocation5], %s4584
        %s4586 = sand.u32 %s209, 1
        %s4587 = smul.addr %s4586, 4
        %s4588 = scalar_lea.vmem [#allocation4], %s4587
        %p4589 = scmp.lt.s32.totalorder %s30, 1
        %s4590 = scalar_select %p4589, %s30, 1
        %p4591 = scmp.lt.s32.totalorder %s31, 0
        %s4592 = scalar_select %p4591, %s31, 0
        %s4593 = sadd.s32 %s4592, %s4590
        %s4594 = smul.addr %s4593, 4
        %s4595 = scalar_lea.vmem %s7, %s4594
        %p4596 = scmp.lt.s32.totalorder %s30, 1
        %s4597 = scalar_select %p4596, %s30, 1
        %p4598 = scmp.lt.s32.totalorder %s31, 0
        %s4599 = scalar_select %p4598, %s31, 0
        %s4600 = sadd.s32 %s4599, %s4597
        %s4601 = smul.addr %s4600, 4
        %s4602 = scalar_lea.vmem %s8, %s4601
        // Predicated region
        $region33: #{waveglow_forward.1} parent=31 // pred_check
          %p4603 = pneg %p135
        $region34: #{waveglow_forward.1} parent=31 // pred_check_branch
          %4605 = sbr.rel (%p4603) target = $region36
        $region35: #{waveglow_forward.1} parent=31 // pred_region
          _
        $region36: #{waveglow_forward.1} parent=31 // pred_fallthru
          _
        // Predicated region
        $region37: #{waveglow_forward.1} parent=31 // pred_check
          %p4606 = pneg %p163
        $region38: #{waveglow_forward.1} parent=31 // pred_check_branch
          %4608 = sbr.rel (%p4606) target = $region40
        $region39: #{waveglow_forward.1} parent=31 // pred_region
          _
        $region40: #{waveglow_forward.1} parent=31 // pred_fallthru
          _
        // Predicated region
        $region41: #{waveglow_forward.1} parent=31 // pred_check
          %p4609 = pneg %p191
        $region42: #{waveglow_forward.1} parent=31 // pred_check_branch
          %4611 = sbr.rel (%p4609) target = $region44
        $region43: #{waveglow_forward.1} parent=31 // pred_region
          %4613 = vsyncadd %s4580, 0
          %s4614 = sadd.s32 %s31, %s30
          %s4615 = smul.addr %s4614, 4
          %s4616 = scalar_lea.hbm %s5, %s4615
          %s4618 = sshll.u32 %s4583, 4
          %s4619 = int_to_ptr.vmem [resolvable:$true] %s4618
          %s4620 = sshll.u32 %s4616, 4
          %s4621 = int_to_ptr.hbm [resolvable:$true] %s4620
          %4623 = dma.vmem_to_hbm [thread:$0]  %s4619, 64, %s4621, %s4580
        $region44: #{waveglow_forward.1} parent=31 // pred_fallthru
          _
        // Predicated region
        $region45: #{waveglow_forward.1} parent=31 // pred_check
          %p4624 = pneg %p219
        $region46: #{waveglow_forward.1} parent=31 // pred_check_branch
          %4626 = sbr.rel (%p4624) target = $region48
        $region47: #{waveglow_forward.1} parent=31 // pred_region
          %4628 = vsyncadd %s4585, 0
          %s4629 = sadd.s32 %s31, %s30
          %s4630 = smul.addr %s4629, 4
          %s4631 = scalar_lea.hbm %s6, %s4630
          %s4633 = sshll.u32 %s4588, 4
          %s4634 = int_to_ptr.vmem [resolvable:$true] %s4633
          %s4635 = sshll.u32 %s4631, 4
          %s4636 = int_to_ptr.hbm [resolvable:$true] %s4635
          %4638 = dma.vmem_to_hbm [thread:$0]  %s4634, 64, %s4636, %s4585
        $region48: #{waveglow_forward.1} parent=31 // pred_fallthru
          _
        // Predicated region
        $region49: #{waveglow_forward.1} parent=31 // pred_check
          %p4639 = pneg %p247
        $region50: #{waveglow_forward.1} parent=31 // pred_check_branch
          %4641 = sbr.rel (%p4639) target = $region52
        $region51: #{waveglow_forward.1} parent=31 // pred_region
          _
        $region52: #{waveglow_forward.1} parent=31 // pred_fallthru
          _
        // Predicated region
        $region53: #{waveglow_forward.1} parent=31 // pred_check
          %p4642 = pneg %p275
        $region54: #{waveglow_forward.1} parent=31 // pred_check_branch
          %4644 = sbr.rel (%p4642) target = $region56
        $region55: #{waveglow_forward.1} parent=31 // pred_region
          _
        $region56: #{waveglow_forward.1} parent=31 // pred_fallthru
          _
      $region32: #{waveglow_forward.1} parent=5 // pred_fallthru
        _
      %p4645 = scmp.le.s32.totalorder 2, %s21
      // Predicated region
      $region57: #{waveglow_forward.1} parent=5 // pred_check
        %p4646 = pneg %p4645
      $region58: #{waveglow_forward.1} parent=5 // pred_check_branch
        %4648 = sbr.rel (%p4646) target = $region60
      $region59: #{waveglow_forward.1} parent=5 // pred_region
        %s4649 = ssub.s32 %s21, 2
        // Predicated region
        $region61: #{waveglow_forward.1} parent=59 // pred_check
          %p4650 = pneg %p141
        $region62: #{waveglow_forward.1} parent=59 // pred_check_branch
          %4652 = sbr.rel (%p4650) target = $region64
        $region63: #{waveglow_forward.1} parent=59 // pred_region
          %p4653 = scmp.lt.s32.totalorder %s32, 1
          %s4654 = scalar_select %p4653, %s32, 1
          %p4655 = scmp.lt.s32.totalorder %s33, 0
          %s4656 = scalar_select %p4655, %s33, 0
          %s4657 = sadd.s32 %s4656, %s4654
          %s4658 = smul.addr %s4657, 2
          %s4659 = scalar_lea.vmem %s3, %s4658
        $region64: #{waveglow_forward.1} parent=59 // pred_fallthru
          _
        // Predicated region
        $region65: #{waveglow_forward.1} parent=59 // pred_check
          %p4660 = pneg %p169
        $region66: #{waveglow_forward.1} parent=59 // pred_check_branch
          %4662 = sbr.rel (%p4660) target = $region68
        $region67: #{waveglow_forward.1} parent=59 // pred_region
          %p4663 = scmp.lt.s32.totalorder %s32, 1
          %s4664 = scalar_select %p4663, %s32, 1
          %p4665 = scmp.lt.s32.totalorder %s33, 0
          %s4666 = scalar_select %p4665, %s33, 0
          %s4667 = sadd.s32 %s4666, %s4664
          %s4668 = smul.addr %s4667, 8
          %s4669 = scalar_lea.vmem %s4, %s4668
        $region68: #{waveglow_forward.1} parent=59 // pred_fallthru
          _
        // Predicated region
        $region69: #{waveglow_forward.1} parent=59 // pred_check
          %p4670 = pneg %p197
        $region70: #{waveglow_forward.1} parent=59 // pred_check_branch
          %4672 = sbr.rel (%p4670) target = $region72
        $region71: #{waveglow_forward.1} parent=59 // pred_region
          %s4673 = sand.u32 %s182, 1
          %s4674 = scalar_lea.sflag [#allocation3], %s4673
          %s4675 = sand.u32 %s182, 1
          %s4676 = smul.addr %s4675, 4
          %s4677 = scalar_lea.vmem [#allocation2], %s4676
          %4679 = dma.done %s4674, 64
        $region72: #{waveglow_forward.1} parent=59 // pred_fallthru
          _
        // Predicated region
        $region73: #{waveglow_forward.1} parent=59 // pred_check
          %p4680 = pneg %p225
        $region74: #{waveglow_forward.1} parent=59 // pred_check_branch
          %4682 = sbr.rel (%p4680) target = $region76
        $region75: #{waveglow_forward.1} parent=59 // pred_region
          %s4683 = sand.u32 %s210, 1
          %s4684 = scalar_lea.sflag [#allocation5], %s4683
          %s4685 = sand.u32 %s210, 1
          %s4686 = smul.addr %s4685, 4
          %s4687 = scalar_lea.vmem [#allocation4], %s4686
          %4689 = dma.done %s4684, 64
        $region76: #{waveglow_forward.1} parent=59 // pred_fallthru
          _
        // Predicated region
        $region77: #{waveglow_forward.1} parent=59 // pred_check
          %p4690 = pneg %p253
        $region78: #{waveglow_forward.1} parent=59 // pred_check_branch
          %4692 = sbr.rel (%p4690) target = $region80
        $region79: #{waveglow_forward.1} parent=59 // pred_region
          %p4693 = scmp.lt.s32.totalorder %s32, 1
          %s4694 = scalar_select %p4693, %s32, 1
          %p4695 = scmp.lt.s32.totalorder %s33, 0
          %s4696 = scalar_select %p4695, %s33, 0
          %s4697 = sadd.s32 %s4696, %s4694
          %s4698 = smul.addr %s4697, 4
          %s4699 = scalar_lea.vmem %s7, %s4698
        $region80: #{waveglow_forward.1} parent=59 // pred_fallthru
          _
        // Predicated region
        $region81: #{waveglow_forward.1} parent=59 // pred_check
          %p4700 = pneg %p281
        $region82: #{waveglow_forward.1} parent=59 // pred_check_branch
          %4702 = sbr.rel (%p4700) target = $region84
        $region83: #{waveglow_forward.1} parent=59 // pred_region
          %p4703 = scmp.lt.s32.totalorder %s32, 1
          %s4704 = scalar_select %p4703, %s32, 1
          %p4705 = scmp.lt.s32.totalorder %s33, 0
          %s4706 = scalar_select %p4705, %s33, 0
          %s4707 = sadd.s32 %s4706, %s4704
          %s4708 = smul.addr %s4707, 4
          %s4709 = scalar_lea.vmem %s8, %s4708
        $region84: #{waveglow_forward.1} parent=59 // pred_fallthru
          _
      $region60: #{waveglow_forward.1} parent=5 // pred_fallthru
        _
    $region6: #{waveglow_forward.1} parent=1 // loop_footer
      %s25 = sadd.s32 1, %s21
    $region7: #{waveglow_forward.1} parent=1 // loop_footer_branch
      %20 = sbr.rel target = $region3
    $region8: #{waveglow_forward.1} parent=1 // loop_exit
      _
    %4710 = vsyncpa [#allocation3], 1
    %s4711 = scalar_lea.sflag [#allocation3], 1
    %4712 = vsyncpa %s4711, 1
    %4713 = vsyncpa [#allocation5], 1
    %s4714 = scalar_lea.sflag [#allocation5], 1
    %4715 = vsyncpa %s4714, 1

</llo_original>
